<compile_context>
chip_gen: v7x
topology: tpu7x:2x2x1
jax: 0.10.0
libtpu: 0.0.40
codegen_flags: <defaults>
</compile_context>

<pallas_src>
import functools

import jax
import jax.numpy as jnp
import numpy as np
from jax import lax
from jax.experimental import pallas as pl
from jax.experimental.pallas import tpu as pltpu


def _pair(v):
    if isinstance(v, (tuple, list)):
        assert len(v) == 2
        return int(v[0]), int(v[1])
    return int(v), int(v)


def _round_up(x, m):
    return (x + m - 1) // m * m


def _pick_cout_tile(cout, cap, align):
    """Largest divisor of cout <= cap that is a multiple of `align` (then 8);
    falls back to the full cout (a full-extent block is always legal)."""
    if cout <= cap:
        return cout
    for a in (align, 8):
        for t in range(min(cap, cout), a - 1, -1):
            if cout % t == 0 and t % a == 0:
                return t
    return cout


def _pick_tile_oh(oh, ow, fits, max_lanes=4096):
    """Largest OH tile that fits the VMEM budget, preferring lane-aligned
    (tile_oh*ow % 128 == 0) and sublane-aligned (tile_oh % 8 == 0) tiles."""
    best, best_key = None, None
    for toh in range(1, oh + 1):
        tm = toh * ow
        if toh > 1 and tm > max_lanes:
            break
        if not fits(toh):
            break
        key = ((tm % 128) == 0, (toh % 8) == 0, toh)
        if best_key is None or key > best_key:
            best, best_key = toh, key
    return best if best is not None else 1


def _load_tap_window(x_ref, row0, i, j, *, sh, sw, dh, dw, tile_oh, ow):
    """Load the (Cin_eff, tile_oh, OW) input window aligned with tap (i, j)."""
    hwin = (tile_oh - 1) * sh + 1
    wwin = (ow - 1) * sw + 1
    win = x_ref[0, :, pl.ds(row0 + i * dh, hwin), pl.ds(j * dw, wwin)]
    if sh != 1 or sw != 1:
        # TODO(synk): strided lane slices go through the XLU; for stride>1 hot
        # paths fold the stride into the wrapper layout instead.
        win = lax.slice(win, (0, 0, 0), win.shape, (1, sh, sw))
    return win


def _linear_kernel(x_ref, w_ref, o_ref, patch_ref, *,
                   kh, kw, sh, sw, dh, dw, tile_oh, ow, cin_p, tile_m):
    """Linear (+, *) semifield: im2col into VMEM scratch + one MXU dot.

    x_ref:     (1, Cin_p, Hp2, Wp)              padded image (native dtype)
    w_ref:     (Cout_tile, Kh*Kw*Cin_p)         weight slab (native dtype)
    o_ref:     (1, Cout_tile, tile_m_pad)       lane-dense output slab
    patch_ref: (Kh*Kw*Cin_p, tile_m_pad)        VMEM im2col scratch
    """
    t = pl.program_id(2)
    row0 = t * (tile_oh * sh)
    if (tile_oh * sh) % 8 == 0:
        row0 = pl.multiple_of(row0, 8)
    for i in range(kh):
        for j in range(kw):
            tap = i * kw + j
            win = _load_tap_window(x_ref, row0, i, j, sh=sh, sw=sw, dh=dh,
                                   dw=dw, tile_oh=tile_oh, ow=ow)
            # Cin_p rows are sublane-aligned (channels zero-padded in wrapper).
            patch_ref[pl.ds(tap * cin_p, cin_p), pl.ds(0, tile_m)] = (
                win.reshape(cin_p, tile_m))
    # Single big-K matmul; native-dtype inputs, f32 accumulation.  Columns
    # beyond tile_m are garbage but map only to discarded output columns.
    acc = jnp.dot(w_ref[...], patch_ref[...],
                  preferred_element_type=jnp.float32)
    o_ref[0] = acc.astype(o_ref.dtype)


def _maxplus_kernel(x_ref, w_ref, o_ref, *,
                    kh, kw, sh, sw, dh, dw, tile_oh, ow, cin, tile_m):
    """Tropical (max, +) semifield: running max carried in vregs across all
    taps/channels; single store per tile (no per-tap accumulator round trip).

    NOTE: outputs are -inf where a window covers only padding (semifield
    additive identity) -- intentionally differs from zero-padded frameworks.
    """
    t = pl.program_id(2)
    row0 = t * (tile_oh * sh)
    if (tile_oh * sh) % 8 == 0:
        row0 = pl.multiple_of(row0, 8)
    cout_t = o_ref.shape[1]
    acc = jnp.full((cout_t, tile_m), -jnp.inf, dtype=jnp.float32)
    for i in range(kh):
        for j in range(kw):
            tap = i * kw + j
            win = _load_tap_window(x_ref, row0, i, j, sh=sh, sw=sw, dh=dh,
                                   dw=dw, tile_oh=tile_oh, ow=ow)
            patch = win.reshape(cin, tile_m).astype(jnp.float32)
            wk = w_ref[:, pl.ds(tap * cin, cin)].astype(jnp.float32)
            for c in range(cin):
                # TODO(synk): hoist the per-(tap, c) lane-broadcast of wk[:, c]
                # (pre-expanded weight layout) if the XLU becomes binding.
                acc = jnp.maximum(acc, wk[:, c:c + 1] + patch[c:c + 1, :])
    o_ref[0, :, pl.ds(0, tile_m)] = acc.astype(o_ref.dtype)


def compiled_conv(img, kernel, stride=1, padding=0, dilation=1, groups=1,
                  group_broadcasting=False, kind="conv", semifield="linear"):
    """JAX/Pallas equivalent of CompiledConv.forward (linear / max-plus)."""
    # TODO(synk): groups > 1 / group_broadcasting and the NHWC (Cin-on-lanes)
    # fast path for channel-heavy layers are not implemented.
    assert groups == 1 and not group_broadcasting, "only groups=1 supported"
    assert kind in ("conv", "corr")
    assert semifield in ("linear", "maxplus")

    n, cin, h, w = map(int, img.shape)
    cout, cin_k, kh, kw = map(int, kernel.shape)
    assert cin_k == cin

    sh, sw = _pair(stride)
    dh, dw = _pair(dilation)
    eff_kh = (kh - 1) * dh + 1
    eff_kw = (kw - 1) * dw + 1

    # Normalize padding spec.
    if padding == "valid":
        pads = ((0, 0), (0, 0))
    elif padding == "same":
        assert sh == 1 and sw == 1, "'same' padding requires stride 1"
        ph, pw = eff_kh - 1, eff_kw - 1
        pads = ((ph // 2, ph - ph // 2), (pw // 2, pw - pw // 2))
    elif isinstance(padding, int):
        pads = ((padding, padding), (padding, padding))
    else:
        p = tuple(padding)
        if isinstance(p[0], int):
            pads = ((p[0], p[0]), (p[1], p[1]))
        else:
            pads = (tuple(p[0]), tuple(p[1]))

    # Semifield additive identity as pad value.
    pad_value = 0.0 if semifield == "linear" else -jnp.inf

    hp = h + pads[0][0] + pads[0][1]
    wp = w + pads[1][0] + pads[1][1]
    oh = (hp - eff_kh) // sh + 1
    ow = (wp - eff_kw) // sw + 1
    assert oh > 0 and ow > 0

    # kind='conv' flips the kernel spatially; 'corr' uses it as-is.
    if kind == "conv":
        kernel = kernel[:, :, ::-1, ::-1]

    itemsize = jnp.dtype(img.dtype).itemsize
    out_itemsize = itemsize
    align = {4: 8, 2: 16, 1: 32}.get(itemsize, 8)

    # Linear path: pad channels to a sublane multiple so every im2col row
    # block is aligned (weights get matching zero columns).
    cin_eff = _round_up(cin, align) if semifield == "linear" else cin
    k_cols = kh * kw * cin_eff

    # ---- per-chip VMEM budget & chip-dependent Cout-tile cap --------------
    vmem_cap = 64 << 20          # safe fallback for every current TPU gen
    cap = 128                    # safe / optimal on v5e
    try:
        info = pltpu.get_tpu_info()
        vmem_cap = int(info.vmem_capacity_bytes)
        name = (str(getattr(info, "chip_version", "")) +
                str(getattr(info, "device_kind", ""))).lower()
        if "v6" in name or "v7" in name:
            cap = 256            # 256-wide MXU on v6e / v7x
    except Exception:
        pass
    budget = int(vmem_cap * 0.85)

    if semifield == "linear":
        cout_tile = _pick_cout_tile(cout, cap, align)
    else:
        cout_tile = _pick_cout_tile(cout, 8, 8)   # provisional; refined below

    def need_bytes(ct, toh):
        tile_m_pad_ = _round_up(toh * ow, 128)
        oh_pad_ = _round_up(oh, toh)
        hp2_ = max(hp, (oh_pad_ - 1) * sh + eff_kh)
        xb = cin_eff * hp2_ * wp * itemsize
        wb = ct * k_cols * itemsize
        ob = ct * tile_m_pad_ * out_itemsize
        if semifield == "linear":
            sb = k_cols * tile_m_pad_ * itemsize       # im2col scratch
        else:
            sb = ct * tile_m_pad_ * 4                  # acc may spill to VMEM
        # double-buffered pipeline blocks + scratch + slack.
        # TODO(synk): single-buffer the image spec (pipeline_mode=pl.Buffered(1))
        # once exercised; its block index is constant over the inner axes.
        return 2 * (xb + wb + ob) + sb + (4 << 20)

    tile_oh = _pick_tile_oh(oh, ow, lambda t: need_bytes(cout_tile, t) <= budget)
    if (semifield == "linear" and need_bytes(cout_tile, tile_oh) > budget
            and cout_tile > align):
        cout_tile = _pick_cout_tile(cout, max(align, cout_tile // 2), align)
        tile_oh = _pick_tile_oh(oh, ow,
                                lambda t: need_bytes(cout_tile, t) <= budget)
    # TODO(synk): also tile OW / Cin for shapes where even tile_oh == 1 does
    # not fit the per-chip budget.

    tile_m = tile_oh * ow
    tile_m_pad = _round_up(tile_m, 128)     # lane-dense output / MXU N dim

    if semifield == "maxplus":
        # Keep the running max resident in vregs (~<=128 KiB).
        reg_cap = max(8, (128 << 10) // (tile_m_pad * 4))
        cout_tile = _pick_cout_tile(cout, min(128, reg_cap), 8)

    n_co = cout // cout_tile
    n_oh = -(-oh // tile_oh)
    oh_pad = n_oh * tile_oh
    hp2 = max(hp, (oh_pad - 1) * sh + eff_kh)

    # ---- operand preparation (wrapper-side layout work) -------------------
    # One pad: channels (linear only), user spatial padding, and extra rows so
    # the last OH tile never reads out of bounds.
    img_p = jnp.pad(img, ((0, 0), (0, cin_eff - cin),
                          (pads[0][0], pads[0][1] + (hp2 - hp)),
                          pads[1]),
                    constant_values=pad_value)

    if semifield == "linear":
        ker_p = jnp.pad(kernel, ((0, 0), (0, cin_eff - cin), (0, 0), (0, 0)))
    else:
        ker_p = kernel
    # Weight slab (Cout, Kh*Kw*Cin_eff): contraction index = tap*Cin_eff + c.
    w2 = jnp.transpose(ker_p, (0, 2, 3, 1)).reshape(cout, k_cols)
    # TODO(synk): optional bf16 fast path (cast img_p / w2 to bf16 here); kept
    # in the input dtype to preserve reference numerics.
    w2 = w2.astype(img.dtype)

    # ---- grid order: batch-outer vs cout-outer (weight-reuse heuristic) ---
    x_blk_bytes = cin_eff * hp2 * wp * itemsize
    w_tot_bytes = cout * k_cols * itemsize
    co_outer = (n > 1 and n_co > 1 and
                n * (n_co - 1) * x_blk_bytes < (n - 1) * w_tot_bytes)
    if co_outer:
        grid = (n_co, n, n_oh)
        img_map = lambda co, b, t: (b, 0, 0, 0)
        w_map = lambda co, b, t: (co, 0)
        out_map = lambda co, b, t: (b, co, t)
    else:
        grid = (n, n_co, n_oh)
        img_map = lambda b, co, t: (b, 0, 0, 0)
        w_map = lambda b, co, t: (co, 0)
        out_map = lambda b, co, t: (b, co, t)

    common = dict(kh=kh, kw=kw, sh=sh, sw=sw, dh=dh, dw=dw,
                  tile_oh=tile_oh, ow=ow, tile_m=tile_m)
    if semifield == "linear":
        body = functools.partial(_linear_kernel, cin_p=cin_eff, **common)
        scratch = [pltpu.VMEM((k_cols, tile_m_pad), img.dtype)]
    else:
        body = functools.partial(_maxplus_kernel, cin=cin_eff, **common)
        scratch = []

    need = need_bytes(cout_tile, tile_oh)
    vmem_limit = int(min(max(need, 32 << 20), int(vmem_cap * 0.95)))

    flops = 2 * n * cout * cin * kh * kw * oh * ow
    out_bytes = n * cout * n_oh * tile_m_pad * out_itemsize
    if co_outer:
        bytes_accessed = w_tot_bytes + n_co * n * x_blk_bytes + out_bytes
    else:
        bytes_accessed = n * w_tot_bytes + n * x_blk_bytes + out_bytes
    cost = pl.CostEstimate(flops=int(flops), transcendentals=0,
                           bytes_accessed=int(bytes_accessed))

    out = pl.pallas_call(
        body,
        out_shape=jax.ShapeDtypeStruct((n, cout, n_oh * tile_m_pad), img.dtype),
        grid_spec=pltpu.PrefetchScalarGridSpec(
            num_scalar_prefetch=0,
            grid=grid,
            in_specs=[
                pl.BlockSpec((1, cin_eff, hp2, wp), img_map),
                pl.BlockSpec((cout_tile, k_cols), w_map),
            ],
            out_specs=pl.BlockSpec((1, cout_tile, tile_m_pad), out_map),
            scratch_shapes=scratch,
        ),
        compiler_params=pltpu.CompilerParams(
            dimension_semantics=("parallel", "parallel", "parallel"),
            vmem_limit_bytes=vmem_limit),
        cost_estimate=cost,
    )(img_p, w2)

    # Un-pad in the wrapper (lane padding, then OH padding) -> NCHW.
    out = out.reshape(n, cout, n_oh, tile_m_pad)[:, :, :, :tile_m]
    out = out.reshape(n, cout, oh_pad, ow)[:, :, :oh, :]
    return out


if __name__ == "__main__":
    key = jax.random.PRNGKey(0)
    k_img, k_ker = jax.random.split(key)

    # Small shapes consistent with CompiledConv.forward(img, kernel, ...)
    N, Cin, H, W = 2, 4, 16, 16
    Cout, Kh, Kw = 4, 3, 3
    img = jax.random.normal(k_img, (N, Cin, H, W), dtype=jnp.float32)
    ker = jax.random.normal(k_ker, (Cout, Cin, Kh, Kw), dtype=jnp.float32)

    # --- linear (+,*) semifield, kind='conv', padding=1, stride=1 ---
    out_lin = compiled_conv(img, ker, stride=1, padding=1, dilation=1,
                            kind="conv", semifield="linear")
    out_lin = jax.block_until_ready(out_lin)

    # Reference: flipped-kernel correlation == 'conv'
    ref = lax.conv_general_dilated(
        img, ker[:, :, ::-1, ::-1],
        window_strides=(1, 1), padding=((1, 1), (1, 1)),
        dimension_numbers=("NCHW", "OIHW", "NCHW"))
    np.testing.assert_allclose(np.asarray(out_lin), np.asarray(ref),
                               rtol=1e-4, atol=1e-4)

    # --- tropical (max,+) semifield, kind='corr', valid padding ---
    out_mp = compiled_conv(img, ker, stride=1, padding="valid", dilation=1,
                           kind="corr", semifield="maxplus")
    out_mp = jax.block_until_ready(out_mp)
    OH, OW = H - Kh + 1, W - Kw + 1
    assert out_mp.shape == (N, Cout, OH, OW)

    # NumPy reference for max-plus correlation with 'valid' padding.
    img_n = np.asarray(img)
    ker_n = np.asarray(ker)
    ref_mp = np.full((N, Cout, OH, OW), -np.inf, np.float32)
    for i in range(Kh):
        for j in range(Kw):
            patch = img_n[:, None, :, i:i + OH, j:j + OW]            # (N,1,Cin,OH,OW)
            wtap = ker_n[None, :, :, i, j][:, :, :, None, None]      # (1,Cout,Cin,1,1)
            ref_mp = np.maximum(ref_mp, (patch + wtap).max(axis=2))
    np.testing.assert_allclose(np.asarray(out_mp), ref_mp, rtol=1e-5, atol=1e-5)

    print("KERNEL_OK")
</pallas_src>

<mosaic_0001>
module attributes {stable_mosaic.version = 11 : i64} {
  func.func @_linear_kernel(%arg0: i32, %arg1: i32, %arg2: i32, %arg3: memref<1x8x18x18xf32, #tpu.memory_space<vmem>>, %arg4: memref<4x72xf32, #tpu.memory_space<vmem>>, %arg5: memref<1x4x256xf32, #tpu.memory_space<vmem>>, %arg6: memref<72x256xf32, #tpu.memory_space<vmem>>) attributes {dimension_semantics = [#tpu.dimension_semantics<parallel>, #tpu.dimension_semantics<parallel>, #tpu.dimension_semantics<parallel>], iteration_bounds = array<i64: 2, 1, 1>, scalar_prefetch = 0 : i64, scratch_operands = 1 : i64, tpu.core_type = #tpu.core_type<tc>, window_params = [{transform_indices = @transform_0, window_bounds = array<i64: 1, 8, 18, 18>}, {transform_indices = @transform_1, window_bounds = array<i64: 4, 72>}, {transform_indices = @transform_2, window_bounds = array<i64: 1, 4, 256>}]} {
    %c16_i32 = arith.constant 16 : i32
    %0 = arith.muli %arg2, %c16_i32 : i32
    %1 = tpu.assume_multiple %0, 8 : i32
    %c0_i32 = arith.constant 0 : i32
    %2 = arith.addi %1, %c0_i32 : i32
    %c0 = arith.constant 0 : index
    %c0_0 = arith.constant 0 : index
    %3 = arith.index_cast %2 : i32 to index
    %c0_1 = arith.constant 0 : index
    %4 = vector.load %arg3[%c0, %c0_0, %3, %c0_1] : memref<1x8x18x18xf32, #tpu.memory_space<vmem>>, vector<1x8x16x16xf32>
    %5 = vector.shape_cast %4 : vector<1x8x16x16xf32> to vector<8x16x16xf32>
    %6 = vector.shape_cast %5 : vector<8x16x16xf32> to vector<8x256xf32>
    %c0_2 = arith.constant 0 : index
    %c0_3 = arith.constant 0 : index
    %7 = vector.load %arg6[%c0_2, %c0_3] : memref<72x256xf32, #tpu.memory_space<vmem>>, vector<8x256xf32>
    tpu.vector_store %arg6[%c0_2, %c0_3], %6 {strides = array<i32>} : memref<72x256xf32, #tpu.memory_space<vmem>>, vector<8x256xf32>,
    %c0_i32_4 = arith.constant 0 : i32
    %8 = arith.addi %1, %c0_i32_4 : i32
    %c0_5 = arith.constant 0 : index
    %c0_6 = arith.constant 0 : index
    %9 = arith.index_cast %8 : i32 to index
    %c1 = arith.constant 1 : index
    %10 = vector.load %arg3[%c0_5, %c0_6, %9, %c1] : memref<1x8x18x18xf32, #tpu.memory_space<vmem>>, vector<1x8x16x16xf32>
    %11 = vector.shape_cast %10 : vector<1x8x16x16xf32> to vector<8x16x16xf32>
    %12 = vector.shape_cast %11 : vector<8x16x16xf32> to vector<8x256xf32>
    %c8 = arith.constant 8 : index
    %c0_7 = arith.constant 0 : index
    %13 = vector.load %arg6[%c8, %c0_7] : memref<72x256xf32, #tpu.memory_space<vmem>>, vector<8x256xf32>
    tpu.vector_store %arg6[%c8, %c0_7], %12 {strides = array<i32>} : memref<72x256xf32, #tpu.memory_space<vmem>>, vector<8x256xf32>,
    %c0_i32_8 = arith.constant 0 : i32
    %14 = arith.addi %1, %c0_i32_8 : i32
    %c0_9 = arith.constant 0 : index
    %c0_10 = arith.constant 0 : index
    %15 = arith.index_cast %14 : i32 to index
    %c2 = arith.constant 2 : index
    %16 = vector.load %arg3[%c0_9, %c0_10, %15, %c2] : memref<1x8x18x18xf32, #tpu.memory_space<vmem>>, vector<1x8x16x16xf32>
    %17 = vector.shape_cast %16 : vector<1x8x16x16xf32> to vector<8x16x16xf32>
    %18 = vector.shape_cast %17 : vector<8x16x16xf32> to vector<8x256xf32>
    %c16 = arith.constant 16 : index
    %c0_11 = arith.constant 0 : index
    %19 = vector.load %arg6[%c16, %c0_11] : memref<72x256xf32, #tpu.memory_space<vmem>>, vector<8x256xf32>
    tpu.vector_store %arg6[%c16, %c0_11], %18 {strides = array<i32>} : memref<72x256xf32, #tpu.memory_space<vmem>>, vector<8x256xf32>,
    %c1_i32 = arith.constant 1 : i32
    %20 = arith.addi %1, %c1_i32 : i32
    %c0_12 = arith.constant 0 : index
    %c0_13 = arith.constant 0 : index
    %21 = arith.index_cast %20 : i32 to index
    %c0_14 = arith.constant 0 : index
    %22 = vector.load %arg3[%c0_12, %c0_13, %21, %c0_14] : memref<1x8x18x18xf32, #tpu.memory_space<vmem>>, vector<1x8x16x16xf32>
    %23 = vector.shape_cast %22 : vector<1x8x16x16xf32> to vector<8x16x16xf32>
    %24 = vector.shape_cast %23 : vector<8x16x16xf32> to vector<8x256xf32>
    %c24 = arith.constant 24 : index
    %c0_15 = arith.constant 0 : index
    %25 = vector.load %arg6[%c24, %c0_15] : memref<72x256xf32, #tpu.memory_space<vmem>>, vector<8x256xf32>
    tpu.vector_store %arg6[%c24, %c0_15], %24 {strides = array<i32>} : memref<72x256xf32, #tpu.memory_space<vmem>>, vector<8x256xf32>,
    %c1_i32_16 = arith.constant 1 : i32
    %26 = arith.addi %1, %c1_i32_16 : i32
    %c0_17 = arith.constant 0 : index
    %c0_18 = arith.constant 0 : index
    %27 = arith.index_cast %26 : i32 to index
    %c1_19 = arith.constant 1 : index
    %28 = vector.load %arg3[%c0_17, %c0_18, %27, %c1_19] : memref<1x8x18x18xf32, #tpu.memory_space<vmem>>, vector<1x8x16x16xf32>
    %29 = vector.shape_cast %28 : vector<1x8x16x16xf32> to vector<8x16x16xf32>
    %30 = vector.shape_cast %29 : vector<8x16x16xf32> to vector<8x256xf32>
    %c32 = arith.constant 32 : index
    %c0_20 = arith.constant 0 : index
    %31 = vector.load %arg6[%c32, %c0_20] : memref<72x256xf32, #tpu.memory_space<vmem>>, vector<8x256xf32>
    tpu.vector_store %arg6[%c32, %c0_20], %30 {strides = array<i32>} : memref<72x256xf32, #tpu.memory_space<vmem>>, vector<8x256xf32>,
    %c1_i32_21 = arith.constant 1 : i32
    %32 = arith.addi %1, %c1_i32_21 : i32
    %c0_22 = arith.constant 0 : index
    %c0_23 = arith.constant 0 : index
    %33 = arith.index_cast %32 : i32 to index
    %c2_24 = arith.constant 2 : index
    %34 = vector.load %arg3[%c0_22, %c0_23, %33, %c2_24] : memref<1x8x18x18xf32, #tpu.memory_space<vmem>>, vector<1x8x16x16xf32>
    %35 = vector.shape_cast %34 : vector<1x8x16x16xf32> to vector<8x16x16xf32>
    %36 = vector.shape_cast %35 : vector<8x16x16xf32> to vector<8x256xf32>
    %c40 = arith.constant 40 : index
    %c0_25 = arith.constant 0 : index
    %37 = vector.load %arg6[%c40, %c0_25] : memref<72x256xf32, #tpu.memory_space<vmem>>, vector<8x256xf32>
    tpu.vector_store %arg6[%c40, %c0_25], %36 {strides = array<i32>} : memref<72x256xf32, #tpu.memory_space<vmem>>, vector<8x256xf32>,
    %c2_i32 = arith.constant 2 : i32
    %38 = arith.addi %1, %c2_i32 : i32
    %c0_26 = arith.constant 0 : index
    %c0_27 = arith.constant 0 : index
    %39 = arith.index_cast %38 : i32 to index
    %c0_28 = arith.constant 0 : index
    %40 = vector.load %arg3[%c0_26, %c0_27, %39, %c0_28] : memref<1x8x18x18xf32, #tpu.memory_space<vmem>>, vector<1x8x16x16xf32>
    %41 = vector.shape_cast %40 : vector<1x8x16x16xf32> to vector<8x16x16xf32>
    %42 = vector.shape_cast %41 : vector<8x16x16xf32> to vector<8x256xf32>
    %c48 = arith.constant 48 : index
    %c0_29 = arith.constant 0 : index
    %43 = vector.load %arg6[%c48, %c0_29] : memref<72x256xf32, #tpu.memory_space<vmem>>, vector<8x256xf32>
    tpu.vector_store %arg6[%c48, %c0_29], %42 {strides = array<i32>} : memref<72x256xf32, #tpu.memory_space<vmem>>, vector<8x256xf32>,
    %c2_i32_30 = arith.constant 2 : i32
    %44 = arith.addi %1, %c2_i32_30 : i32
    %c0_31 = arith.constant 0 : index
    %c0_32 = arith.constant 0 : index
    %45 = arith.index_cast %44 : i32 to index
    %c1_33 = arith.constant 1 : index
    %46 = vector.load %arg3[%c0_31, %c0_32, %45, %c1_33] : memref<1x8x18x18xf32, #tpu.memory_space<vmem>>, vector<1x8x16x16xf32>
    %47 = vector.shape_cast %46 : vector<1x8x16x16xf32> to vector<8x16x16xf32>
    %48 = vector.shape_cast %47 : vector<8x16x16xf32> to vector<8x256xf32>
    %c56 = arith.constant 56 : index
    %c0_34 = arith.constant 0 : index
    %49 = vector.load %arg6[%c56, %c0_34] : memref<72x256xf32, #tpu.memory_space<vmem>>, vector<8x256xf32>
    tpu.vector_store %arg6[%c56, %c0_34], %48 {strides = array<i32>} : memref<72x256xf32, #tpu.memory_space<vmem>>, vector<8x256xf32>,
    %c2_i32_35 = arith.constant 2 : i32
    %50 = arith.addi %1, %c2_i32_35 : i32
    %c0_36 = arith.constant 0 : index
    %c0_37 = arith.constant 0 : index
    %51 = arith.index_cast %50 : i32 to index
    %c2_38 = arith.constant 2 : index
    %52 = vector.load %arg3[%c0_36, %c0_37, %51, %c2_38] : memref<1x8x18x18xf32, #tpu.memory_space<vmem>>, vector<1x8x16x16xf32>
    %53 = vector.shape_cast %52 : vector<1x8x16x16xf32> to vector<8x16x16xf32>
    %54 = vector.shape_cast %53 : vector<8x16x16xf32> to vector<8x256xf32>
    %c64 = arith.constant 64 : index
    %c0_39 = arith.constant 0 : index
    %55 = vector.load %arg6[%c64, %c0_39] : memref<72x256xf32, #tpu.memory_space<vmem>>, vector<8x256xf32>
    tpu.vector_store %arg6[%c64, %c0_39], %54 {strides = array<i32>} : memref<72x256xf32, #tpu.memory_space<vmem>>, vector<8x256xf32>,
    %c0_40 = arith.constant 0 : index
    %c0_41 = arith.constant 0 : index
    %56 = vector.load %arg4[%c0_40, %c0_41] : memref<4x72xf32, #tpu.memory_space<vmem>>, vector<4x72xf32>
    %c0_42 = arith.constant 0 : index
    %c0_43 = arith.constant 0 : index
    %57 = vector.load %arg6[%c0_42, %c0_43] : memref<72x256xf32, #tpu.memory_space<vmem>>, vector<72x256xf32>
    %cst = arith.constant dense<0.000000e+00> : vector<4x256xf32>
    %58 = tpu.matmul %56, %57, %cst {dimension_numbers = #tpu.dot_dimension_numbers<[1], [0], [0], [1], [0, 0, 1, 1], [], []>} : vector<4x72xf32>, vector<72x256xf32>, vector<4x256xf32> -> vector<4x256xf32>
    %c0_44 = arith.constant 0 : index
    %c0_45 = arith.constant 0 : index
    %c0_46 = arith.constant 0 : index
    %59 = vector.load %arg5[%c0_44, %c0_45, %c0_46] : memref<1x4x256xf32, #tpu.memory_space<vmem>>, vector<1x4x256xf32>
    %60 = vector.shape_cast %59 : vector<1x4x256xf32> to vector<4x256xf32>
    %61 = vector.shape_cast %58 : vector<4x256xf32> to vector<1x4x256xf32>
    tpu.vector_store %arg5[%c0_44, %c0_45, %c0_46], %61 {strides = array<i32>} : memref<1x4x256xf32, #tpu.memory_space<vmem>>, vector<1x4x256xf32>,
    return
  }
  func.func @transform_0(%arg0: i32, %arg1: i32, %arg2: i32) -> (i32, i32, i32, i32) {
    %c0_i32 = arith.constant 0 : i32
    %c0_i32_0 = arith.constant 0 : i32
    %c0_i32_1 = arith.constant 0 : i32
    %c0_i32_2 = arith.constant 0 : i32
    return %arg0, %c0_i32, %c0_i32_0, %c0_i32_1 : i32, i32, i32, i32
  }
  func.func @transform_1(%arg0: i32, %arg1: i32, %arg2: i32) -> (i32, i32) {
    %c0_i32 = arith.constant 0 : i32
    %c0_i32_0 = arith.constant 0 : i32
    return %arg1, %c0_i32 : i32, i32
  }
  func.func @transform_2(%arg0: i32, %arg1: i32, %arg2: i32) -> (i32, i32, i32) {
    %c0_i32 = arith.constant 0 : i32
    return %arg0, %arg1, %arg2 : i32, i32, i32
  }
}

</mosaic_0001>

<llo_original>
// kernel: tpu_custom_call.1
$region0: #{tpu_custom_call.1}
  #allocation0 [shape = 'u32[]', space=smem, size = 0x4, offset = 0x4, fixed_abs, tag = 'smem constant byte address 0x4 - core index']
  #allocation1 [shape = 'u32[144,128]{1,0:T(1,128)}', space=vmem, size = 0x12000, scoped, tag = 'internal scratch']
  #allocation2 [shape = 'f32[72,256]{1,0:T(8,128)}', space=vmem, size = 0x12000, scoped, tag = 'scratch operand']
  %s0 = inlined_call_operand.vmem [shape: f32[2,8,18,18], index: 0, kind: input, shape index: {}]
  %s1 = inlined_call_operand.vmem [shape: f32[4,72], index: 1, kind: input, shape index: {}]
  %s2 = inlined_call_operand.hbm [shape: f32[2,4,256], index: 2, kind: output, shape index: {}]
  %s3 = sld [smem:[#allocation0]]
  $region41: #{tpu_custom_call.1} parent=0
    _
  %s5 = ssub.s32 1, %s3
  %s6 = scalar_select 0, %s5, %s3
  $region1: #{tpu_custom_call.1} parent=0
    #allocation3 [shape = 'u8[8192]{0}', space=vmem, size = 0x2000, scoped, tag = 'output window, operand 0']
    #allocation4 [shape = 's32[2]{0}', space=sflag, size = 0x8, scoped, tag = 'scoped memory for tpu_custom_call.1']
    %7 = vsyncpa [#allocation4], 0
    %s8 = scalar_lea.sflag [#allocation4], 1
    %9 = vsyncpa %s8, 0
    loop: start=0, step=1, limit=4
    $region2: #{tpu_custom_call.1} parent=1 // loop_pre_header
      _
    $region3: #{tpu_custom_call.1} parent=1 // loop_header
      %s11 = sphi 0, %s15
      %p12 = scmp.ge.s32.totalorder %s11, 4
      %s18 = sphi 0, %s37
      %s19 = sphi 0, %s33
      %s20 = sphi 0, %s29
      %s21 = sphi 0, %s18
      %s22 = sphi 0, %s19
      %s23 = sphi 0, %s20
      %s24 = sphi 0, %s21
      %s25 = sphi 0, %s22
      %s26 = sphi 0, %s23
      %s40 = sphi 0, %s42
      %s43 = sphi 0, %s40
      %s44 = sphi 0, %s43
      %s60 = sphi 0, %s44
      %s66 = sphi 0, %s68
      %s69 = sphi 0, %s66
      %s70 = sphi 0, %s69
      %s86 = sphi 0, %s70
      %s96 = sphi 0, %s98
      %s99 = sphi 0, %s96
      %s100 = sphi 0, %s99
      %s116 = sphi 0, %s100
    $region4: #{tpu_custom_call.1} parent=1 // loop_header_branch
      %14 = sbr.rel (%p12) target = $region8
    $region5: #{tpu_custom_call.1} parent=1 // loop_body
      %s16 = ssub.s32 %s11, 1
      %s17 = ssub.s32 %s11, 2
      %s27 = sadd.s32 1, %s20
      %p28 = scmp.ge.s32.totalorder %s27, 1
      %s29 = scalar_select %p28, 0, %s27
      %s30 = sadd.s32 1, %s19
      %s31 = scalar_select %p28, %s30, %s19
      %p32 = scmp.ge.s32.totalorder %s31, 1
      %s33 = scalar_select %p32, 0, %s31
      %s34 = sadd.s32 1, %s18
      %s35 = scalar_select %p32, %s34, %s18
      %p36 = scmp.ge.s32.totalorder %s35, 2
      %s37 = scalar_select %p36, 0, %s35
      %s38 = ssub.s32 %s18, %s37
      %p39 = scmp.eq.s32.totalorder %s38, 0
      %s41 = sadd.s32 %s40, 1
      %s42 = scalar_select %p39, %s40, %s41
      %p45 = pneg %p39
      %p46 = scmp.eq.s32.totalorder %s11, 1
      %p47 = por %p45, %p46
      %p48 = scmp.ne.s32.totalorder %s40, %s43
      %p49 = scmp.eq.s32.totalorder %s11, 0
      %p50 = por %p48, %p49
      %p51 = scmp.ne.s32.totalorder %s40, %s43
      %p52 = scmp.eq.s32.totalorder %s16, 1
      %p53 = por %p51, %p52
      %p54 = scmp.ne.s32.totalorder %s43, %s44
      %p55 = scmp.eq.s32.totalorder %s16, 0
      %p56 = por %p54, %p55
      %p57 = scmp.ne.s32.totalorder %s43, %s44
      %p58 = scmp.eq.s32.totalorder %s17, 1
      %p59 = por %p57, %p58
      %p61 = scmp.ne.s32.totalorder %s44, %s60
      %p62 = scmp.eq.s32.totalorder %s17, 0
      %p63 = por %p61, %p62
      %s64 = ssub.s32 %s19, %s33
      %p65 = scmp.eq.s32.totalorder %s64, 0
      %s67 = sadd.s32 %s66, 1
      %s68 = scalar_select %p65, %s66, %s67
      %p71 = pneg %p65
      %p72 = scmp.eq.s32.totalorder %s11, 1
      %p73 = por %p71, %p72
      %p74 = scmp.ne.s32.totalorder %s66, %s69
      %p75 = scmp.eq.s32.totalorder %s11, 0
      %p76 = por %p74, %p75
      %p77 = scmp.ne.s32.totalorder %s66, %s69
      %p78 = scmp.eq.s32.totalorder %s16, 1
      %p79 = por %p77, %p78
      %p80 = scmp.ne.s32.totalorder %s69, %s70
      %p81 = scmp.eq.s32.totalorder %s16, 0
      %p82 = por %p80, %p81
      %p83 = scmp.ne.s32.totalorder %s69, %s70
      %p84 = scmp.eq.s32.totalorder %s17, 1
      %p85 = por %p83, %p84
      %p87 = scmp.ne.s32.totalorder %s70, %s86
      %p88 = scmp.eq.s32.totalorder %s17, 0
      %p89 = por %p87, %p88
      %s90 = ssub.s32 %s18, %s37
      %s91 = ssub.s32 %s19, %s33
      %s92 = sor.u32 %s90, %s91
      %s93 = ssub.s32 %s20, %s29
      %s94 = sor.u32 %s92, %s93
      %p95 = scmp.eq.s32.totalorder %s94, 0
      %s97 = sadd.s32 %s96, 1
      %s98 = scalar_select %p95, %s96, %s97
      %p101 = pneg %p95
      %p102 = scmp.eq.s32.totalorder %s11, 1
      %p103 = por %p101, %p102
      %p104 = scmp.ne.s32.totalorder %s96, %s99
      %p105 = scmp.eq.s32.totalorder %s11, 0
      %p106 = por %p104, %p105
      %p107 = scmp.ne.s32.totalorder %s96, %s99
      %p108 = scmp.eq.s32.totalorder %s16, 1
      %p109 = por %p107, %p108
      %p110 = scmp.ne.s32.totalorder %s99, %s100
      %p111 = scmp.eq.s32.totalorder %s16, 0
      %p112 = por %p110, %p111
      %p113 = scmp.ne.s32.totalorder %s99, %s100
      %p114 = scmp.eq.s32.totalorder %s17, 1
      %p115 = por %p113, %p114
      %p117 = scmp.ne.s32.totalorder %s100, %s116
      %p118 = scmp.eq.s32.totalorder %s17, 0
      %p119 = por %p117, %p118
      %p120 = scmp.le.s32.totalorder 1, %s11
      %p121 = scmp.lt.s32.totalorder %s11, 3
      %p122 = pnand %p120, %p121
      %p123 = pneg %p122
      // Predicated region
      $region9: #{tpu_custom_call.1} parent=5 // pred_check
        _
      $region10: #{tpu_custom_call.1} parent=5 // pred_check_branch
        %125 = sbr.rel (%p122) target = $region12
      $region11: #{tpu_custom_call.1} parent=5 // pred_region
        %s126 = ssub.s32 %s11, 1
        // Predicated region
        $region13: #{tpu_custom_call.1} parent=11 // pred_check
          %p127 = pneg %p82
        $region14: #{tpu_custom_call.1} parent=11 // pred_check_branch
          %129 = sbr.rel (%p127) target = $region16
        $region15: #{tpu_custom_call.1} parent=11 // pred_region
          %p130 = scmp.lt.s32.totalorder %s22, 0
          %s131 = scalar_select %p130, %s22, 0
          %s132 = smul.addr %s131, 4
          %s133 = scalar_lea.vmem %s1, %s132
        $region16: #{tpu_custom_call.1} parent=11 // pred_fallthru
          _
      $region12: #{tpu_custom_call.1} parent=5 // pred_fallthru
        _
      %p134 = scmp.lt.s32.totalorder %s11, 2
      // Predicated region
      $region17: #{tpu_custom_call.1} parent=5 // pred_check
        %p135 = pneg %p134
      $region18: #{tpu_custom_call.1} parent=5 // pred_check_branch
        %137 = sbr.rel (%p135) target = $region20
      $region19: #{tpu_custom_call.1} parent=5 // pred_region
        // Predicated region
        $region21: #{tpu_custom_call.1} parent=19 // pred_check
          %p138 = pneg %p50
        $region22: #{tpu_custom_call.1} parent=19 // pred_check_branch
          %140 = sbr.rel (%p138) target = $region24
        $region23: #{tpu_custom_call.1} parent=19 // pred_region
          %p141 = scmp.lt.s32.totalorder %s18, 1
          %s142 = scalar_select %p141, %s18, 1
          %s143 = smul.addr %s142, 24
          %s144 = smul.addr %s143, 8
          %s145 = scalar_lea.vmem %s0, %s144
        $region24: #{tpu_custom_call.1} parent=19 // pred_fallthru
          _
      $region20: #{tpu_custom_call.1} parent=5 // pred_fallthru
        _
      %p146 = scmp.le.s32.totalorder 1, %s11
      %p147 = scmp.lt.s32.totalorder %s11, 3
      %p148 = pnand %p146, %p147
      %p149 = pneg %p148
      // Predicated region
      $region25: #{tpu_custom_call.1} parent=5 // pred_check
        _
      $region26: #{tpu_custom_call.1} parent=5 // pred_check_branch
        %151 = sbr.rel (%p148) target = $region28
      $region27: #{tpu_custom_call.1} parent=5 // pred_region
        %s152 = ssub.s32 %s11, 1
        %p153 = scmp.lt.s32.totalorder %s21, 1
        %s154 = scalar_select %p153, %s21, 1
        %s155 = smul.addr %s154, 24
        %s156 = smul.addr %s155, 8
        %s157 = scalar_lea.vmem %s0, %s156
        %p158 = pneg %p56
        %p159 = pneg %p53
        %p160 = scmp.lt.s32.totalorder %s22, 0
        %s161 = scalar_select %p160, %s22, 0
        %s162 = smul.addr %s161, 4
        %s163 = scalar_lea.vmem %s1, %s162
        %p164 = pneg %p82
        %p165 = pneg %p79
        %p166 = pneg %p112
        %p167 = pneg %p109
        %s168 = sand.u32 %s99, 1
        %s169 = scalar_lea.sflag [#allocation4], %s168
        %s170 = sand.u32 %s99, 1
        %s171 = smul.addr %s170, 8
        %s172 = scalar_lea.vmem [#allocation3], %s171
        %p173 = scmp.lt.s32.totalorder %s21, 1
        %s174 = scalar_select %p173, %s21, 1
        %s175 = smul.addr %s174, 24
        %s176 = smul.addr %s175, 8
        %s177 = scalar_lea.vmem %s0, %s176
        %p178 = scmp.lt.s32.totalorder %s22, 0
        %s179 = scalar_select %p178, %s22, 0
        %s180 = smul.addr %s179, 4
        %s181 = scalar_lea.vmem %s1, %s180
        %s182 = smul.u32 2, %s23
        %s183 = smul.u32 %s23, 16
        %s184 = scalar_lea.vmem %s177, %s183
        %v185 = vld [vmem:[%s184] sm:$0xff]
        %v186 = vld [vmem:[%s184 + $0x8] sm:$0xff]
        %v187 = vld [vmem:[%s184 + $0x18] sm:$0xff]
        %v188 = vld [vmem:[%s184 + $0x20] sm:$0xff]
        %v189 = vld [vmem:[%s184 + $0x30] sm:$0xff]
        %v190 = vld [vmem:[%s184 + $0x38] sm:$0xff]
        %v191 = vld [vmem:[%s184 + $0x48] sm:$0xff]
        %v192 = vld [vmem:[%s184 + $0x50] sm:$0xff]
        %v193 = vld [vmem:[%s184 + $0x60] sm:$0xff]
        %v194 = vld [vmem:[%s184 + $0x68] sm:$0xff]
        %v195 = vld [vmem:[%s184 + $0x78] sm:$0xff]
        %v196 = vld [vmem:[%s184 + $0x80] sm:$0xff]
        %v197 = vld [vmem:[%s184 + $0x90] sm:$0xff]
        %v198 = vld [vmem:[%s184 + $0x98] sm:$0xff]
        %v199 = vld [vmem:[%s184 + $0xa8] sm:$0xff]
        %v200 = vld [vmem:[%s184 + $0xb0] sm:$0xff]
        %v201 = vcombine.low %v185, %v189
        %v202 = vcombine.high %v185, %v189
        %v204 = vunpack.c.l.s4 1983009808
        %v205 = vunpack.c.0.s8 %v204
        %v206 = vlaneseq
        %v207 = vshrl.u32 %v206, 7
        %v208 = vsub.s32 %v205, %v207
        %v209 = vrot.slane %v201, %v208
        %v211 = vunpack.c.l.s4 1983009808
        %v212 = vunpack.c.0.s8 %v211
        %v213 = vlaneseq
        %v214 = vshrl.u32 %v213, 7
        %v215 = vsub.s32 %v212, %v214
        %v216 = vrot.slane %v202, %v215
        %v217 = vcombine.low %v187, %v191
        %v218 = vcombine.high %v187, %v191
        %v220 = vunpack.c.l.s4 1983009808
        %v221 = vunpack.c.0.s8 %v220
        %v222 = vlaneseq
        %v223 = vshrl.u32 %v222, 7
        %v224 = vsub.s32 %v221, %v223
        %v225 = vrot.slane %v217, %v224
        %v227 = vunpack.c.l.s4 1983009808
        %v228 = vunpack.c.0.s8 %v227
        %v229 = vlaneseq
        %v230 = vshrl.u32 %v229, 7
        %v231 = vsub.s32 %v228, %v230
        %v232 = vrot.slane %v218, %v231
        %v233 = vcombine.low %v193, %v197
        %v234 = vcombine.high %v193, %v197
        %v236 = vunpack.c.l.s4 1983009808
        %v237 = vunpack.c.0.s8 %v236
        %v238 = vlaneseq
        %v239 = vshrl.u32 %v238, 7
        %v240 = vsub.s32 %v237, %v239
        %v241 = vrot.slane %v233, %v240
        %v243 = vunpack.c.l.s4 1983009808
        %v244 = vunpack.c.0.s8 %v243
        %v245 = vlaneseq
        %v246 = vshrl.u32 %v245, 7
        %v247 = vsub.s32 %v244, %v246
        %v248 = vrot.slane %v234, %v247
        %v249 = vcombine.low %v195, %v199
        %v250 = vcombine.high %v195, %v199
        %v252 = vunpack.c.l.s4 1983009808
        %v253 = vunpack.c.0.s8 %v252
        %v254 = vlaneseq
        %v255 = vshrl.u32 %v254, 7
        %v256 = vsub.s32 %v253, %v255
        %v257 = vrot.slane %v249, %v256
        %v259 = vunpack.c.l.s4 1983009808
        %v260 = vunpack.c.0.s8 %v259
        %v261 = vlaneseq
        %v262 = vshrl.u32 %v261, 7
        %v263 = vsub.s32 %v260, %v262
        %v264 = vrot.slane %v250, %v263
        %v265 = vcombine.low %v209, %v225
        %v266 = vcombine.high %v209, %v225
        %v268 = vunpack.c.l.s4 1934713408
        %v269 = vunpack.c.0.s8 %v268
        %v270 = vlaneseq
        %v271 = vshrl.u32 %v270, 7
        %v272 = vsub.s32 %v269, %v271
        %v273 = vrot.slane %v265, %v272
        %v275 = vunpack.c.l.s4 1934713408
        %v276 = vunpack.c.0.s8 %v275
        %v277 = vlaneseq
        %v278 = vshrl.u32 %v277, 7
        %v279 = vsub.s32 %v276, %v278
        %v280 = vrot.slane %v266, %v279
        %v281 = vcombine.low %v216, %v232
        %v282 = vcombine.high %v216, %v232
        %v284 = vunpack.c.l.s4 1934713408
        %v285 = vunpack.c.0.s8 %v284
        %v286 = vlaneseq
        %v287 = vshrl.u32 %v286, 7
        %v288 = vsub.s32 %v285, %v287
        %v289 = vrot.slane %v281, %v288
        %v291 = vunpack.c.l.s4 1934713408
        %v292 = vunpack.c.0.s8 %v291
        %v293 = vlaneseq
        %v294 = vshrl.u32 %v293, 7
        %v295 = vsub.s32 %v292, %v294
        %v296 = vrot.slane %v282, %v295
        %v297 = vcombine.low %v241, %v257
        %v298 = vcombine.high %v241, %v257
        %v300 = vunpack.c.l.s4 1934713408
        %v301 = vunpack.c.0.s8 %v300
        %v302 = vlaneseq
        %v303 = vshrl.u32 %v302, 7
        %v304 = vsub.s32 %v301, %v303
        %v305 = vrot.slane %v297, %v304
        %v307 = vunpack.c.l.s4 1934713408
        %v308 = vunpack.c.0.s8 %v307
        %v309 = vlaneseq
        %v310 = vshrl.u32 %v309, 7
        %v311 = vsub.s32 %v308, %v310
        %v312 = vrot.slane %v298, %v311
        %v313 = vcombine.low %v248, %v264
        %v314 = vcombine.high %v248, %v264
        %v316 = vunpack.c.l.s4 1934713408
        %v317 = vunpack.c.0.s8 %v316
        %v318 = vlaneseq
        %v319 = vshrl.u32 %v318, 7
        %v320 = vsub.s32 %v317, %v319
        %v321 = vrot.slane %v313, %v320
        %v323 = vunpack.c.l.s4 1934713408
        %v324 = vunpack.c.0.s8 %v323
        %v325 = vlaneseq
        %v326 = vshrl.u32 %v325, 7
        %v327 = vsub.s32 %v324, %v326
        %v328 = vrot.slane %v314, %v327
        %v329 = vcombine.low %v273, %v305
        %v330 = vcombine.high %v273, %v305
        %v331 = vcombine.low %v280, %v312
        %v332 = vcombine.high %v280, %v312
        %v333 = vcombine.low %v289, %v321
        %v334 = vcombine.high %v289, %v321
        %v335 = vcombine.low %v296, %v328
        %v336 = vcombine.high %v296, %v328
        %v337 = vcombine.low %v186, %v190
        %v338 = vcombine.high %v186, %v190
        %v340 = vunpack.c.l.s4 1983009808
        %v341 = vunpack.c.0.s8 %v340
        %v342 = vlaneseq
        %v343 = vshrl.u32 %v342, 7
        %v344 = vsub.s32 %v341, %v343
        %v345 = vrot.slane %v337, %v344
        %v347 = vunpack.c.l.s4 1983009808
        %v348 = vunpack.c.0.s8 %v347
        %v349 = vlaneseq
        %v350 = vshrl.u32 %v349, 7
        %v351 = vsub.s32 %v348, %v350
        %v352 = vrot.slane %v338, %v351
        %v353 = vcombine.low %v188, %v192
        %v354 = vcombine.high %v188, %v192
        %v356 = vunpack.c.l.s4 1983009808
        %v357 = vunpack.c.0.s8 %v356
        %v358 = vlaneseq
        %v359 = vshrl.u32 %v358, 7
        %v360 = vsub.s32 %v357, %v359
        %v361 = vrot.slane %v353, %v360
        %v363 = vunpack.c.l.s4 1983009808
        %v364 = vunpack.c.0.s8 %v363
        %v365 = vlaneseq
        %v366 = vshrl.u32 %v365, 7
        %v367 = vsub.s32 %v364, %v366
        %v368 = vrot.slane %v354, %v367
        %v369 = vcombine.low %v194, %v198
        %v370 = vcombine.high %v194, %v198
        %v372 = vunpack.c.l.s4 1983009808
        %v373 = vunpack.c.0.s8 %v372
        %v374 = vlaneseq
        %v375 = vshrl.u32 %v374, 7
        %v376 = vsub.s32 %v373, %v375
        %v377 = vrot.slane %v369, %v376
        %v379 = vunpack.c.l.s4 1983009808
        %v380 = vunpack.c.0.s8 %v379
        %v381 = vlaneseq
        %v382 = vshrl.u32 %v381, 7
        %v383 = vsub.s32 %v380, %v382
        %v384 = vrot.slane %v370, %v383
        %v385 = vcombine.low %v196, %v200
        %v386 = vcombine.high %v196, %v200
        %v388 = vunpack.c.l.s4 1983009808
        %v389 = vunpack.c.0.s8 %v388
        %v390 = vlaneseq
        %v391 = vshrl.u32 %v390, 7
        %v392 = vsub.s32 %v389, %v391
        %v393 = vrot.slane %v385, %v392
        %v395 = vunpack.c.l.s4 1983009808
        %v396 = vunpack.c.0.s8 %v395
        %v397 = vlaneseq
        %v398 = vshrl.u32 %v397, 7
        %v399 = vsub.s32 %v396, %v398
        %v400 = vrot.slane %v386, %v399
        %v401 = vcombine.low %v345, %v361
        %v402 = vcombine.high %v345, %v361
        %v404 = vunpack.c.l.s4 1934713408
        %v405 = vunpack.c.0.s8 %v404
        %v406 = vlaneseq
        %v407 = vshrl.u32 %v406, 7
        %v408 = vsub.s32 %v405, %v407
        %v409 = vrot.slane %v401, %v408
        %v411 = vunpack.c.l.s4 1934713408
        %v412 = vunpack.c.0.s8 %v411
        %v413 = vlaneseq
        %v414 = vshrl.u32 %v413, 7
        %v415 = vsub.s32 %v412, %v414
        %v416 = vrot.slane %v402, %v415
        %v417 = vcombine.low %v352, %v368
        %v418 = vcombine.high %v352, %v368
        %v420 = vunpack.c.l.s4 1934713408
        %v421 = vunpack.c.0.s8 %v420
        %v422 = vlaneseq
        %v423 = vshrl.u32 %v422, 7
        %v424 = vsub.s32 %v421, %v423
        %v425 = vrot.slane %v417, %v424
        %v427 = vunpack.c.l.s4 1934713408
        %v428 = vunpack.c.0.s8 %v427
        %v429 = vlaneseq
        %v430 = vshrl.u32 %v429, 7
        %v431 = vsub.s32 %v428, %v430
        %v432 = vrot.slane %v418, %v431
        %v433 = vcombine.low %v377, %v393
        %v434 = vcombine.high %v377, %v393
        %v436 = vunpack.c.l.s4 1934713408
        %v437 = vunpack.c.0.s8 %v436
        %v438 = vlaneseq
        %v439 = vshrl.u32 %v438, 7
        %v440 = vsub.s32 %v437, %v439
        %v441 = vrot.slane %v433, %v440
        %v443 = vunpack.c.l.s4 1934713408
        %v444 = vunpack.c.0.s8 %v443
        %v445 = vlaneseq
        %v446 = vshrl.u32 %v445, 7
        %v447 = vsub.s32 %v444, %v446
        %v448 = vrot.slane %v434, %v447
        %v449 = vcombine.low %v384, %v400
        %v450 = vcombine.high %v384, %v400
        %v452 = vunpack.c.l.s4 1934713408
        %v453 = vunpack.c.0.s8 %v452
        %v454 = vlaneseq
        %v455 = vshrl.u32 %v454, 7
        %v456 = vsub.s32 %v453, %v455
        %v457 = vrot.slane %v449, %v456
        %v459 = vunpack.c.l.s4 1934713408
        %v460 = vunpack.c.0.s8 %v459
        %v461 = vlaneseq
        %v462 = vshrl.u32 %v461, 7
        %v463 = vsub.s32 %v460, %v462
        %v464 = vrot.slane %v450, %v463
        %v465 = vcombine.low %v409, %v441
        %v466 = vcombine.high %v409, %v441
        %v467 = vcombine.low %v416, %v448
        %v468 = vcombine.high %v416, %v448
        %v469 = vcombine.low %v425, %v457
        %v470 = vcombine.high %v425, %v457
        %v471 = vcombine.low %v432, %v464
        %v472 = vcombine.high %v432, %v464
        %474 = vrot.lane.b32.xlu0 %v330, 16
        %v475 = vpop.permute.xlu0 %474
        %478 = vrot.lane.b32.xlu0 %v331, 32
        %v479 = vpop.permute.xlu0 %478
        %482 = vrot.lane.b32.xlu0 %v332, 48
        %v483 = vpop.permute.xlu0 %482
        %486 = vrot.lane.b32.xlu0 %v333, 64
        %v487 = vpop.permute.xlu0 %486
        %490 = vrot.lane.b32.xlu0 %v334, 80
        %v491 = vpop.permute.xlu0 %490
        %494 = vrot.lane.b32.xlu0 %v335, 96
        %v495 = vpop.permute.xlu0 %494
        %498 = vrot.lane.b32.xlu0 %v336, 112
        %v499 = vpop.permute.xlu0 %498
        %502 = vrot.lane.b32.xlu0 %v466, 16
        %v503 = vpop.permute.xlu0 %502
        %506 = vrot.lane.b32.xlu0 %v467, 32
        %v507 = vpop.permute.xlu0 %506
        %510 = vrot.lane.b32.xlu0 %v468, 48
        %v511 = vpop.permute.xlu0 %510
        %514 = vrot.lane.b32.xlu0 %v469, 64
        %v515 = vpop.permute.xlu0 %514
        %518 = vrot.lane.b32.xlu0 %v470, 80
        %v519 = vpop.permute.xlu0 %518
        %522 = vrot.lane.b32.xlu0 %v471, 96
        %v523 = vpop.permute.xlu0 %522
        %526 = vrot.lane.b32.xlu0 %v472, 112
        %v527 = vpop.permute.xlu0 %526
        %vm529 = vcmask 130048
        %v530 = vsel %vm529, %v329, %v475
        %vm531 = vcmask 261120
        %v532 = vsel %vm531, %v530, %v479
        %vm533 = vcmask 392192
        %v534 = vsel %vm533, %v532, %v483
        %vm535 = vcmask 523264
        %v536 = vsel %vm535, %v534, %v487
        %vm537 = vcmask 654336
        %v538 = vsel %vm537, %v536, %v491
        %vm539 = vcmask 785408
        %v540 = vsel %vm539, %v538, %v495
        %vm541 = vcmask 916480
        %v542 = vsel %vm541, %v540, %v499
        %v543 = vsel %vm529, %v465, %v503
        %v544 = vsel %vm531, %v543, %v507
        %v545 = vsel %vm533, %v544, %v511
        %v546 = vsel %vm535, %v545, %v515
        %v547 = vsel %vm537, %v546, %v519
        %v548 = vsel %vm539, %v547, %v523
        %v549 = vsel %vm541, %v548, %v527
        %550 = vst [vmem:[#allocation2] sm:$0xff] %v542
        %551 = vst [vmem:[#allocation2 + $0x8] sm:$0xff] %v549
        %v552 = vld [vmem:[%s184] sm:$0xff]
        %v553 = vld [vmem:[%s184 + $0x8] sm:$0xff]
        %v554 = vld [vmem:[%s184 + $0x18] sm:$0xff]
        %v555 = vld [vmem:[%s184 + $0x20] sm:$0xff]
        %v556 = vld [vmem:[%s184 + $0x30] sm:$0xff]
        %v557 = vld [vmem:[%s184 + $0x38] sm:$0xff]
        %v558 = vld [vmem:[%s184 + $0x48] sm:$0xff]
        %v559 = vld [vmem:[%s184 + $0x50] sm:$0xff]
        %v560 = vld [vmem:[%s184 + $0x60] sm:$0xff]
        %v561 = vld [vmem:[%s184 + $0x68] sm:$0xff]
        %v562 = vld [vmem:[%s184 + $0x78] sm:$0xff]
        %v563 = vld [vmem:[%s184 + $0x80] sm:$0xff]
        %v564 = vld [vmem:[%s184 + $0x90] sm:$0xff]
        %v565 = vld [vmem:[%s184 + $0x98] sm:$0xff]
        %v566 = vld [vmem:[%s184 + $0xa8] sm:$0xff]
        %v567 = vld [vmem:[%s184 + $0xb0] sm:$0xff]
        %584 = vrot.lane.b32.xlu0 %v552, 127
        %v585 = vpop.permute.xlu0 %584
        %586 = vrot.lane.b32.xlu0 %v553, 127
        %v587 = vpop.permute.xlu0 %586
        %588 = vrot.lane.b32.xlu0 %v554, 127
        %v589 = vpop.permute.xlu0 %588
        %590 = vrot.lane.b32.xlu0 %v555, 127
        %v591 = vpop.permute.xlu0 %590
        %592 = vrot.lane.b32.xlu0 %v556, 127
        %v593 = vpop.permute.xlu0 %592
        %594 = vrot.lane.b32.xlu0 %v557, 127
        %v595 = vpop.permute.xlu0 %594
        %596 = vrot.lane.b32.xlu0 %v558, 127
        %v597 = vpop.permute.xlu0 %596
        %598 = vrot.lane.b32.xlu0 %v559, 127
        %v599 = vpop.permute.xlu0 %598
        %600 = vrot.lane.b32.xlu0 %v560, 127
        %v601 = vpop.permute.xlu0 %600
        %602 = vrot.lane.b32.xlu0 %v561, 127
        %v603 = vpop.permute.xlu0 %602
        %604 = vrot.lane.b32.xlu0 %v562, 127
        %v605 = vpop.permute.xlu0 %604
        %606 = vrot.lane.b32.xlu0 %v563, 127
        %v607 = vpop.permute.xlu0 %606
        %608 = vrot.lane.b32.xlu0 %v564, 127
        %v609 = vpop.permute.xlu0 %608
        %610 = vrot.lane.b32.xlu0 %v565, 127
        %v611 = vpop.permute.xlu0 %610
        %612 = vrot.lane.b32.xlu0 %v566, 127
        %v613 = vpop.permute.xlu0 %612
        %614 = vrot.lane.b32.xlu0 %v567, 127
        %v615 = vpop.permute.xlu0 %614
        %v632 = vcombine.low %v585, %v593
        %v633 = vcombine.high %v585, %v593
        %v635 = vunpack.c.l.s4 1983009808
        %v636 = vunpack.c.0.s8 %v635
        %v637 = vlaneseq
        %v638 = vshrl.u32 %v637, 7
        %v639 = vsub.s32 %v636, %v638
        %v640 = vrot.slane %v632, %v639
        %v642 = vunpack.c.l.s4 1983009808
        %v643 = vunpack.c.0.s8 %v642
        %v644 = vlaneseq
        %v645 = vshrl.u32 %v644, 7
        %v646 = vsub.s32 %v643, %v645
        %v647 = vrot.slane %v633, %v646
        %v648 = vcombine.low %v589, %v597
        %v649 = vcombine.high %v589, %v597
        %v651 = vunpack.c.l.s4 1983009808
        %v652 = vunpack.c.0.s8 %v651
        %v653 = vlaneseq
        %v654 = vshrl.u32 %v653, 7
        %v655 = vsub.s32 %v652, %v654
        %v656 = vrot.slane %v648, %v655
        %v658 = vunpack.c.l.s4 1983009808
        %v659 = vunpack.c.0.s8 %v658
        %v660 = vlaneseq
        %v661 = vshrl.u32 %v660, 7
        %v662 = vsub.s32 %v659, %v661
        %v663 = vrot.slane %v649, %v662
        %v664 = vcombine.low %v601, %v609
        %v665 = vcombine.high %v601, %v609
        %v667 = vunpack.c.l.s4 1983009808
        %v668 = vunpack.c.0.s8 %v667
        %v669 = vlaneseq
        %v670 = vshrl.u32 %v669, 7
        %v671 = vsub.s32 %v668, %v670
        %v672 = vrot.slane %v664, %v671
        %v674 = vunpack.c.l.s4 1983009808
        %v675 = vunpack.c.0.s8 %v674
        %v676 = vlaneseq
        %v677 = vshrl.u32 %v676, 7
        %v678 = vsub.s32 %v675, %v677
        %v679 = vrot.slane %v665, %v678
        %v680 = vcombine.low %v605, %v613
        %v681 = vcombine.high %v605, %v613
        %v683 = vunpack.c.l.s4 1983009808
        %v684 = vunpack.c.0.s8 %v683
        %v685 = vlaneseq
        %v686 = vshrl.u32 %v685, 7
        %v687 = vsub.s32 %v684, %v686
        %v688 = vrot.slane %v680, %v687
        %v690 = vunpack.c.l.s4 1983009808
        %v691 = vunpack.c.0.s8 %v690
        %v692 = vlaneseq
        %v693 = vshrl.u32 %v692, 7
        %v694 = vsub.s32 %v691, %v693
        %v695 = vrot.slane %v681, %v694
        %v696 = vcombine.low %v640, %v656
        %v697 = vcombine.high %v640, %v656
        %v699 = vunpack.c.l.s4 1934713408
        %v700 = vunpack.c.0.s8 %v699
        %v701 = vlaneseq
        %v702 = vshrl.u32 %v701, 7
        %v703 = vsub.s32 %v700, %v702
        %v704 = vrot.slane %v696, %v703
        %v706 = vunpack.c.l.s4 1934713408
        %v707 = vunpack.c.0.s8 %v706
        %v708 = vlaneseq
        %v709 = vshrl.u32 %v708, 7
        %v710 = vsub.s32 %v707, %v709
        %v711 = vrot.slane %v697, %v710
        %v712 = vcombine.low %v647, %v663
        %v713 = vcombine.high %v647, %v663
        %v715 = vunpack.c.l.s4 1934713408
        %v716 = vunpack.c.0.s8 %v715
        %v717 = vlaneseq
        %v718 = vshrl.u32 %v717, 7
        %v719 = vsub.s32 %v716, %v718
        %v720 = vrot.slane %v712, %v719
        %v722 = vunpack.c.l.s4 1934713408
        %v723 = vunpack.c.0.s8 %v722
        %v724 = vlaneseq
        %v725 = vshrl.u32 %v724, 7
        %v726 = vsub.s32 %v723, %v725
        %v727 = vrot.slane %v713, %v726
        %v728 = vcombine.low %v672, %v688
        %v729 = vcombine.high %v672, %v688
        %v731 = vunpack.c.l.s4 1934713408
        %v732 = vunpack.c.0.s8 %v731
        %v733 = vlaneseq
        %v734 = vshrl.u32 %v733, 7
        %v735 = vsub.s32 %v732, %v734
        %v736 = vrot.slane %v728, %v735
        %v738 = vunpack.c.l.s4 1934713408
        %v739 = vunpack.c.0.s8 %v738
        %v740 = vlaneseq
        %v741 = vshrl.u32 %v740, 7
        %v742 = vsub.s32 %v739, %v741
        %v743 = vrot.slane %v729, %v742
        %v744 = vcombine.low %v679, %v695
        %v745 = vcombine.high %v679, %v695
        %v747 = vunpack.c.l.s4 1934713408
        %v748 = vunpack.c.0.s8 %v747
        %v749 = vlaneseq
        %v750 = vshrl.u32 %v749, 7
        %v751 = vsub.s32 %v748, %v750
        %v752 = vrot.slane %v744, %v751
        %v754 = vunpack.c.l.s4 1934713408
        %v755 = vunpack.c.0.s8 %v754
        %v756 = vlaneseq
        %v757 = vshrl.u32 %v756, 7
        %v758 = vsub.s32 %v755, %v757
        %v759 = vrot.slane %v745, %v758
        %v760 = vcombine.low %v704, %v736
        %v761 = vcombine.high %v704, %v736
        %v762 = vcombine.low %v711, %v743
        %v763 = vcombine.high %v711, %v743
        %v764 = vcombine.low %v720, %v752
        %v765 = vcombine.high %v720, %v752
        %v766 = vcombine.low %v727, %v759
        %v767 = vcombine.high %v727, %v759
        %v768 = vcombine.low %v587, %v595
        %v769 = vcombine.high %v587, %v595
        %v771 = vunpack.c.l.s4 1983009808
        %v772 = vunpack.c.0.s8 %v771
        %v773 = vlaneseq
        %v774 = vshrl.u32 %v773, 7
        %v775 = vsub.s32 %v772, %v774
        %v776 = vrot.slane %v768, %v775
        %v778 = vunpack.c.l.s4 1983009808
        %v779 = vunpack.c.0.s8 %v778
        %v780 = vlaneseq
        %v781 = vshrl.u32 %v780, 7
        %v782 = vsub.s32 %v779, %v781
        %v783 = vrot.slane %v769, %v782
        %v784 = vcombine.low %v591, %v599
        %v785 = vcombine.high %v591, %v599
        %v787 = vunpack.c.l.s4 1983009808
        %v788 = vunpack.c.0.s8 %v787
        %v789 = vlaneseq
        %v790 = vshrl.u32 %v789, 7
        %v791 = vsub.s32 %v788, %v790
        %v792 = vrot.slane %v784, %v791
        %v794 = vunpack.c.l.s4 1983009808
        %v795 = vunpack.c.0.s8 %v794
        %v796 = vlaneseq
        %v797 = vshrl.u32 %v796, 7
        %v798 = vsub.s32 %v795, %v797
        %v799 = vrot.slane %v785, %v798
        %v800 = vcombine.low %v603, %v611
        %v801 = vcombine.high %v603, %v611
        %v803 = vunpack.c.l.s4 1983009808
        %v804 = vunpack.c.0.s8 %v803
        %v805 = vlaneseq
        %v806 = vshrl.u32 %v805, 7
        %v807 = vsub.s32 %v804, %v806
        %v808 = vrot.slane %v800, %v807
        %v810 = vunpack.c.l.s4 1983009808
        %v811 = vunpack.c.0.s8 %v810
        %v812 = vlaneseq
        %v813 = vshrl.u32 %v812, 7
        %v814 = vsub.s32 %v811, %v813
        %v815 = vrot.slane %v801, %v814
        %v816 = vcombine.low %v607, %v615
        %v817 = vcombine.high %v607, %v615
        %v819 = vunpack.c.l.s4 1983009808
        %v820 = vunpack.c.0.s8 %v819
        %v821 = vlaneseq
        %v822 = vshrl.u32 %v821, 7
        %v823 = vsub.s32 %v820, %v822
        %v824 = vrot.slane %v816, %v823
        %v826 = vunpack.c.l.s4 1983009808
        %v827 = vunpack.c.0.s8 %v826
        %v828 = vlaneseq
        %v829 = vshrl.u32 %v828, 7
        %v830 = vsub.s32 %v827, %v829
        %v831 = vrot.slane %v817, %v830
        %v832 = vcombine.low %v776, %v792
        %v833 = vcombine.high %v776, %v792
        %v835 = vunpack.c.l.s4 1934713408
        %v836 = vunpack.c.0.s8 %v835
        %v837 = vlaneseq
        %v838 = vshrl.u32 %v837, 7
        %v839 = vsub.s32 %v836, %v838
        %v840 = vrot.slane %v832, %v839
        %v842 = vunpack.c.l.s4 1934713408
        %v843 = vunpack.c.0.s8 %v842
        %v844 = vlaneseq
        %v845 = vshrl.u32 %v844, 7
        %v846 = vsub.s32 %v843, %v845
        %v847 = vrot.slane %v833, %v846
        %v848 = vcombine.low %v783, %v799
        %v849 = vcombine.high %v783, %v799
        %v851 = vunpack.c.l.s4 1934713408
        %v852 = vunpack.c.0.s8 %v851
        %v853 = vlaneseq
        %v854 = vshrl.u32 %v853, 7
        %v855 = vsub.s32 %v852, %v854
        %v856 = vrot.slane %v848, %v855
        %v858 = vunpack.c.l.s4 1934713408
        %v859 = vunpack.c.0.s8 %v858
        %v860 = vlaneseq
        %v861 = vshrl.u32 %v860, 7
        %v862 = vsub.s32 %v859, %v861
        %v863 = vrot.slane %v849, %v862
        %v864 = vcombine.low %v808, %v824
        %v865 = vcombine.high %v808, %v824
        %v867 = vunpack.c.l.s4 1934713408
        %v868 = vunpack.c.0.s8 %v867
        %v869 = vlaneseq
        %v870 = vshrl.u32 %v869, 7
        %v871 = vsub.s32 %v868, %v870
        %v872 = vrot.slane %v864, %v871
        %v874 = vunpack.c.l.s4 1934713408
        %v875 = vunpack.c.0.s8 %v874
        %v876 = vlaneseq
        %v877 = vshrl.u32 %v876, 7
        %v878 = vsub.s32 %v875, %v877
        %v879 = vrot.slane %v865, %v878
        %v880 = vcombine.low %v815, %v831
        %v881 = vcombine.high %v815, %v831
        %v883 = vunpack.c.l.s4 1934713408
        %v884 = vunpack.c.0.s8 %v883
        %v885 = vlaneseq
        %v886 = vshrl.u32 %v885, 7
        %v887 = vsub.s32 %v884, %v886
        %v888 = vrot.slane %v880, %v887
        %v890 = vunpack.c.l.s4 1934713408
        %v891 = vunpack.c.0.s8 %v890
        %v892 = vlaneseq
        %v893 = vshrl.u32 %v892, 7
        %v894 = vsub.s32 %v891, %v893
        %v895 = vrot.slane %v881, %v894
        %v896 = vcombine.low %v840, %v872
        %v897 = vcombine.high %v840, %v872
        %v898 = vcombine.low %v847, %v879
        %v899 = vcombine.high %v847, %v879
        %v900 = vcombine.low %v856, %v888
        %v901 = vcombine.high %v856, %v888
        %v902 = vcombine.low %v863, %v895
        %v903 = vcombine.high %v863, %v895
        %905 = vrot.lane.b32.xlu0 %v761, 16
        %v906 = vpop.permute.xlu0 %905
        %909 = vrot.lane.b32.xlu0 %v762, 32
        %v910 = vpop.permute.xlu0 %909
        %913 = vrot.lane.b32.xlu0 %v763, 48
        %v914 = vpop.permute.xlu0 %913
        %917 = vrot.lane.b32.xlu0 %v764, 64
        %v918 = vpop.permute.xlu0 %917
        %921 = vrot.lane.b32.xlu0 %v765, 80
        %v922 = vpop.permute.xlu0 %921
        %925 = vrot.lane.b32.xlu0 %v766, 96
        %v926 = vpop.permute.xlu0 %925
        %929 = vrot.lane.b32.xlu0 %v767, 112
        %v930 = vpop.permute.xlu0 %929
        %933 = vrot.lane.b32.xlu0 %v897, 16
        %v934 = vpop.permute.xlu0 %933
        %937 = vrot.lane.b32.xlu0 %v898, 32
        %v938 = vpop.permute.xlu0 %937
        %941 = vrot.lane.b32.xlu0 %v899, 48
        %v942 = vpop.permute.xlu0 %941
        %945 = vrot.lane.b32.xlu0 %v900, 64
        %v946 = vpop.permute.xlu0 %945
        %949 = vrot.lane.b32.xlu0 %v901, 80
        %v950 = vpop.permute.xlu0 %949
        %953 = vrot.lane.b32.xlu0 %v902, 96
        %v954 = vpop.permute.xlu0 %953
        %957 = vrot.lane.b32.xlu0 %v903, 112
        %v958 = vpop.permute.xlu0 %957
        %v960 = vsel %vm529, %v760, %v906
        %v961 = vsel %vm531, %v960, %v910
        %v962 = vsel %vm533, %v961, %v914
        %v963 = vsel %vm535, %v962, %v918
        %v964 = vsel %vm537, %v963, %v922
        %v965 = vsel %vm539, %v964, %v926
        %v966 = vsel %vm541, %v965, %v930
        %v967 = vsel %vm529, %v896, %v934
        %v968 = vsel %vm531, %v967, %v938
        %v969 = vsel %vm533, %v968, %v942
        %v970 = vsel %vm535, %v969, %v946
        %v971 = vsel %vm537, %v970, %v950
        %v972 = vsel %vm539, %v971, %v954
        %v973 = vsel %vm541, %v972, %v958
        %974 = vst [vmem:[#allocation2 + $0x10] sm:$0xff] %v966
        %975 = vst [vmem:[#allocation2 + $0x18] sm:$0xff] %v973
        %v976 = vld [vmem:[%s184] sm:$0xff]
        %v977 = vld [vmem:[%s184 + $0x8] sm:$0xff]
        %v978 = vld [vmem:[%s184 + $0x18] sm:$0xff]
        %v979 = vld [vmem:[%s184 + $0x20] sm:$0xff]
        %v980 = vld [vmem:[%s184 + $0x30] sm:$0xff]
        %v981 = vld [vmem:[%s184 + $0x38] sm:$0xff]
        %v982 = vld [vmem:[%s184 + $0x48] sm:$0xff]
        %v983 = vld [vmem:[%s184 + $0x50] sm:$0xff]
        %v984 = vld [vmem:[%s184 + $0x60] sm:$0xff]
        %v985 = vld [vmem:[%s184 + $0x68] sm:$0xff]
        %v986 = vld [vmem:[%s184 + $0x78] sm:$0xff]
        %v987 = vld [vmem:[%s184 + $0x80] sm:$0xff]
        %v988 = vld [vmem:[%s184 + $0x90] sm:$0xff]
        %v989 = vld [vmem:[%s184 + $0x98] sm:$0xff]
        %v990 = vld [vmem:[%s184 + $0xa8] sm:$0xff]
        %v991 = vld [vmem:[%s184 + $0xb0] sm:$0xff]
        %1008 = vrot.lane.b32.xlu0 %v976, 126
        %v1009 = vpop.permute.xlu0 %1008
        %1010 = vrot.lane.b32.xlu0 %v977, 126
        %v1011 = vpop.permute.xlu0 %1010
        %1012 = vrot.lane.b32.xlu0 %v978, 126
        %v1013 = vpop.permute.xlu0 %1012
        %1014 = vrot.lane.b32.xlu0 %v979, 126
        %v1015 = vpop.permute.xlu0 %1014
        %1016 = vrot.lane.b32.xlu0 %v980, 126
        %v1017 = vpop.permute.xlu0 %1016
        %1018 = vrot.lane.b32.xlu0 %v981, 126
        %v1019 = vpop.permute.xlu0 %1018
        %1020 = vrot.lane.b32.xlu0 %v982, 126
        %v1021 = vpop.permute.xlu0 %1020
        %1022 = vrot.lane.b32.xlu0 %v983, 126
        %v1023 = vpop.permute.xlu0 %1022
        %1024 = vrot.lane.b32.xlu0 %v984, 126
        %v1025 = vpop.permute.xlu0 %1024
        %1026 = vrot.lane.b32.xlu0 %v985, 126
        %v1027 = vpop.permute.xlu0 %1026
        %1028 = vrot.lane.b32.xlu0 %v986, 126
        %v1029 = vpop.permute.xlu0 %1028
        %1030 = vrot.lane.b32.xlu0 %v987, 126
        %v1031 = vpop.permute.xlu0 %1030
        %1032 = vrot.lane.b32.xlu0 %v988, 126
        %v1033 = vpop.permute.xlu0 %1032
        %1034 = vrot.lane.b32.xlu0 %v989, 126
        %v1035 = vpop.permute.xlu0 %1034
        %1036 = vrot.lane.b32.xlu0 %v990, 126
        %v1037 = vpop.permute.xlu0 %1036
        %1038 = vrot.lane.b32.xlu0 %v991, 126
        %v1039 = vpop.permute.xlu0 %1038
        %v1056 = vcombine.low %v1009, %v1017
        %v1057 = vcombine.high %v1009, %v1017
        %v1059 = vunpack.c.l.s4 1983009808
        %v1060 = vunpack.c.0.s8 %v1059
        %v1061 = vlaneseq
        %v1062 = vshrl.u32 %v1061, 7
        %v1063 = vsub.s32 %v1060, %v1062
        %v1064 = vrot.slane %v1056, %v1063
        %v1066 = vunpack.c.l.s4 1983009808
        %v1067 = vunpack.c.0.s8 %v1066
        %v1068 = vlaneseq
        %v1069 = vshrl.u32 %v1068, 7
        %v1070 = vsub.s32 %v1067, %v1069
        %v1071 = vrot.slane %v1057, %v1070
        %v1072 = vcombine.low %v1013, %v1021
        %v1073 = vcombine.high %v1013, %v1021
        %v1075 = vunpack.c.l.s4 1983009808
        %v1076 = vunpack.c.0.s8 %v1075
        %v1077 = vlaneseq
        %v1078 = vshrl.u32 %v1077, 7
        %v1079 = vsub.s32 %v1076, %v1078
        %v1080 = vrot.slane %v1072, %v1079
        %v1082 = vunpack.c.l.s4 1983009808
        %v1083 = vunpack.c.0.s8 %v1082
        %v1084 = vlaneseq
        %v1085 = vshrl.u32 %v1084, 7
        %v1086 = vsub.s32 %v1083, %v1085
        %v1087 = vrot.slane %v1073, %v1086
        %v1088 = vcombine.low %v1025, %v1033
        %v1089 = vcombine.high %v1025, %v1033
        %v1091 = vunpack.c.l.s4 1983009808
        %v1092 = vunpack.c.0.s8 %v1091
        %v1093 = vlaneseq
        %v1094 = vshrl.u32 %v1093, 7
        %v1095 = vsub.s32 %v1092, %v1094
        %v1096 = vrot.slane %v1088, %v1095
        %v1098 = vunpack.c.l.s4 1983009808
        %v1099 = vunpack.c.0.s8 %v1098
        %v1100 = vlaneseq
        %v1101 = vshrl.u32 %v1100, 7
        %v1102 = vsub.s32 %v1099, %v1101
        %v1103 = vrot.slane %v1089, %v1102
        %v1104 = vcombine.low %v1029, %v1037
        %v1105 = vcombine.high %v1029, %v1037
        %v1107 = vunpack.c.l.s4 1983009808
        %v1108 = vunpack.c.0.s8 %v1107
        %v1109 = vlaneseq
        %v1110 = vshrl.u32 %v1109, 7
        %v1111 = vsub.s32 %v1108, %v1110
        %v1112 = vrot.slane %v1104, %v1111
        %v1114 = vunpack.c.l.s4 1983009808
        %v1115 = vunpack.c.0.s8 %v1114
        %v1116 = vlaneseq
        %v1117 = vshrl.u32 %v1116, 7
        %v1118 = vsub.s32 %v1115, %v1117
        %v1119 = vrot.slane %v1105, %v1118
        %v1120 = vcombine.low %v1064, %v1080
        %v1121 = vcombine.high %v1064, %v1080
        %v1123 = vunpack.c.l.s4 1934713408
        %v1124 = vunpack.c.0.s8 %v1123
        %v1125 = vlaneseq
        %v1126 = vshrl.u32 %v1125, 7
        %v1127 = vsub.s32 %v1124, %v1126
        %v1128 = vrot.slane %v1120, %v1127
        %v1130 = vunpack.c.l.s4 1934713408
        %v1131 = vunpack.c.0.s8 %v1130
        %v1132 = vlaneseq
        %v1133 = vshrl.u32 %v1132, 7
        %v1134 = vsub.s32 %v1131, %v1133
        %v1135 = vrot.slane %v1121, %v1134
        %v1136 = vcombine.low %v1071, %v1087
        %v1137 = vcombine.high %v1071, %v1087
        %v1139 = vunpack.c.l.s4 1934713408
        %v1140 = vunpack.c.0.s8 %v1139
        %v1141 = vlaneseq
        %v1142 = vshrl.u32 %v1141, 7
        %v1143 = vsub.s32 %v1140, %v1142
        %v1144 = vrot.slane %v1136, %v1143
        %v1146 = vunpack.c.l.s4 1934713408
        %v1147 = vunpack.c.0.s8 %v1146
        %v1148 = vlaneseq
        %v1149 = vshrl.u32 %v1148, 7
        %v1150 = vsub.s32 %v1147, %v1149
        %v1151 = vrot.slane %v1137, %v1150
        %v1152 = vcombine.low %v1096, %v1112
        %v1153 = vcombine.high %v1096, %v1112
        %v1155 = vunpack.c.l.s4 1934713408
        %v1156 = vunpack.c.0.s8 %v1155
        %v1157 = vlaneseq
        %v1158 = vshrl.u32 %v1157, 7
        %v1159 = vsub.s32 %v1156, %v1158
        %v1160 = vrot.slane %v1152, %v1159
        %v1162 = vunpack.c.l.s4 1934713408
        %v1163 = vunpack.c.0.s8 %v1162
        %v1164 = vlaneseq
        %v1165 = vshrl.u32 %v1164, 7
        %v1166 = vsub.s32 %v1163, %v1165
        %v1167 = vrot.slane %v1153, %v1166
        %v1168 = vcombine.low %v1103, %v1119
        %v1169 = vcombine.high %v1103, %v1119
        %v1171 = vunpack.c.l.s4 1934713408
        %v1172 = vunpack.c.0.s8 %v1171
        %v1173 = vlaneseq
        %v1174 = vshrl.u32 %v1173, 7
        %v1175 = vsub.s32 %v1172, %v1174
        %v1176 = vrot.slane %v1168, %v1175
        %v1178 = vunpack.c.l.s4 1934713408
        %v1179 = vunpack.c.0.s8 %v1178
        %v1180 = vlaneseq
        %v1181 = vshrl.u32 %v1180, 7
        %v1182 = vsub.s32 %v1179, %v1181
        %v1183 = vrot.slane %v1169, %v1182
        %v1184 = vcombine.low %v1128, %v1160
        %v1185 = vcombine.high %v1128, %v1160
        %v1186 = vcombine.low %v1135, %v1167
        %v1187 = vcombine.high %v1135, %v1167
        %v1188 = vcombine.low %v1144, %v1176
        %v1189 = vcombine.high %v1144, %v1176
        %v1190 = vcombine.low %v1151, %v1183
        %v1191 = vcombine.high %v1151, %v1183
        %v1192 = vcombine.low %v1011, %v1019
        %v1193 = vcombine.high %v1011, %v1019
        %v1195 = vunpack.c.l.s4 1983009808
        %v1196 = vunpack.c.0.s8 %v1195
        %v1197 = vlaneseq
        %v1198 = vshrl.u32 %v1197, 7
        %v1199 = vsub.s32 %v1196, %v1198
        %v1200 = vrot.slane %v1192, %v1199
        %v1202 = vunpack.c.l.s4 1983009808
        %v1203 = vunpack.c.0.s8 %v1202
        %v1204 = vlaneseq
        %v1205 = vshrl.u32 %v1204, 7
        %v1206 = vsub.s32 %v1203, %v1205
        %v1207 = vrot.slane %v1193, %v1206
        %v1208 = vcombine.low %v1015, %v1023
        %v1209 = vcombine.high %v1015, %v1023
        %v1211 = vunpack.c.l.s4 1983009808
        %v1212 = vunpack.c.0.s8 %v1211
        %v1213 = vlaneseq
        %v1214 = vshrl.u32 %v1213, 7
        %v1215 = vsub.s32 %v1212, %v1214
        %v1216 = vrot.slane %v1208, %v1215
        %v1218 = vunpack.c.l.s4 1983009808
        %v1219 = vunpack.c.0.s8 %v1218
        %v1220 = vlaneseq
        %v1221 = vshrl.u32 %v1220, 7
        %v1222 = vsub.s32 %v1219, %v1221
        %v1223 = vrot.slane %v1209, %v1222
        %v1224 = vcombine.low %v1027, %v1035
        %v1225 = vcombine.high %v1027, %v1035
        %v1227 = vunpack.c.l.s4 1983009808
        %v1228 = vunpack.c.0.s8 %v1227
        %v1229 = vlaneseq
        %v1230 = vshrl.u32 %v1229, 7
        %v1231 = vsub.s32 %v1228, %v1230
        %v1232 = vrot.slane %v1224, %v1231
        %v1234 = vunpack.c.l.s4 1983009808
        %v1235 = vunpack.c.0.s8 %v1234
        %v1236 = vlaneseq
        %v1237 = vshrl.u32 %v1236, 7
        %v1238 = vsub.s32 %v1235, %v1237
        %v1239 = vrot.slane %v1225, %v1238
        %v1240 = vcombine.low %v1031, %v1039
        %v1241 = vcombine.high %v1031, %v1039
        %v1243 = vunpack.c.l.s4 1983009808
        %v1244 = vunpack.c.0.s8 %v1243
        %v1245 = vlaneseq
        %v1246 = vshrl.u32 %v1245, 7
        %v1247 = vsub.s32 %v1244, %v1246
        %v1248 = vrot.slane %v1240, %v1247
        %v1250 = vunpack.c.l.s4 1983009808
        %v1251 = vunpack.c.0.s8 %v1250
        %v1252 = vlaneseq
        %v1253 = vshrl.u32 %v1252, 7
        %v1254 = vsub.s32 %v1251, %v1253
        %v1255 = vrot.slane %v1241, %v1254
        %v1256 = vcombine.low %v1200, %v1216
        %v1257 = vcombine.high %v1200, %v1216
        %v1259 = vunpack.c.l.s4 1934713408
        %v1260 = vunpack.c.0.s8 %v1259
        %v1261 = vlaneseq
        %v1262 = vshrl.u32 %v1261, 7
        %v1263 = vsub.s32 %v1260, %v1262
        %v1264 = vrot.slane %v1256, %v1263
        %v1266 = vunpack.c.l.s4 1934713408
        %v1267 = vunpack.c.0.s8 %v1266
        %v1268 = vlaneseq
        %v1269 = vshrl.u32 %v1268, 7
        %v1270 = vsub.s32 %v1267, %v1269
        %v1271 = vrot.slane %v1257, %v1270
        %v1272 = vcombine.low %v1207, %v1223
        %v1273 = vcombine.high %v1207, %v1223
        %v1275 = vunpack.c.l.s4 1934713408
        %v1276 = vunpack.c.0.s8 %v1275
        %v1277 = vlaneseq
        %v1278 = vshrl.u32 %v1277, 7
        %v1279 = vsub.s32 %v1276, %v1278
        %v1280 = vrot.slane %v1272, %v1279
        %v1282 = vunpack.c.l.s4 1934713408
        %v1283 = vunpack.c.0.s8 %v1282
        %v1284 = vlaneseq
        %v1285 = vshrl.u32 %v1284, 7
        %v1286 = vsub.s32 %v1283, %v1285
        %v1287 = vrot.slane %v1273, %v1286
        %v1288 = vcombine.low %v1232, %v1248
        %v1289 = vcombine.high %v1232, %v1248
        %v1291 = vunpack.c.l.s4 1934713408
        %v1292 = vunpack.c.0.s8 %v1291
        %v1293 = vlaneseq
        %v1294 = vshrl.u32 %v1293, 7
        %v1295 = vsub.s32 %v1292, %v1294
        %v1296 = vrot.slane %v1288, %v1295
        %v1298 = vunpack.c.l.s4 1934713408
        %v1299 = vunpack.c.0.s8 %v1298
        %v1300 = vlaneseq
        %v1301 = vshrl.u32 %v1300, 7
        %v1302 = vsub.s32 %v1299, %v1301
        %v1303 = vrot.slane %v1289, %v1302
        %v1304 = vcombine.low %v1239, %v1255
        %v1305 = vcombine.high %v1239, %v1255
        %v1307 = vunpack.c.l.s4 1934713408
        %v1308 = vunpack.c.0.s8 %v1307
        %v1309 = vlaneseq
        %v1310 = vshrl.u32 %v1309, 7
        %v1311 = vsub.s32 %v1308, %v1310
        %v1312 = vrot.slane %v1304, %v1311
        %v1314 = vunpack.c.l.s4 1934713408
        %v1315 = vunpack.c.0.s8 %v1314
        %v1316 = vlaneseq
        %v1317 = vshrl.u32 %v1316, 7
        %v1318 = vsub.s32 %v1315, %v1317
        %v1319 = vrot.slane %v1305, %v1318
        %v1320 = vcombine.low %v1264, %v1296
        %v1321 = vcombine.high %v1264, %v1296
        %v1322 = vcombine.low %v1271, %v1303
        %v1323 = vcombine.high %v1271, %v1303
        %v1324 = vcombine.low %v1280, %v1312
        %v1325 = vcombine.high %v1280, %v1312
        %v1326 = vcombine.low %v1287, %v1319
        %v1327 = vcombine.high %v1287, %v1319
        %1329 = vrot.lane.b32.xlu0 %v1185, 16
        %v1330 = vpop.permute.xlu0 %1329
        %1333 = vrot.lane.b32.xlu0 %v1186, 32
        %v1334 = vpop.permute.xlu0 %1333
        %1337 = vrot.lane.b32.xlu0 %v1187, 48
        %v1338 = vpop.permute.xlu0 %1337
        %1341 = vrot.lane.b32.xlu0 %v1188, 64
        %v1342 = vpop.permute.xlu0 %1341
        %1345 = vrot.lane.b32.xlu0 %v1189, 80
        %v1346 = vpop.permute.xlu0 %1345
        %1349 = vrot.lane.b32.xlu0 %v1190, 96
        %v1350 = vpop.permute.xlu0 %1349
        %1353 = vrot.lane.b32.xlu0 %v1191, 112
        %v1354 = vpop.permute.xlu0 %1353
        %1357 = vrot.lane.b32.xlu0 %v1321, 16
        %v1358 = vpop.permute.xlu0 %1357
        %1361 = vrot.lane.b32.xlu0 %v1322, 32
        %v1362 = vpop.permute.xlu0 %1361
        %1365 = vrot.lane.b32.xlu0 %v1323, 48
        %v1366 = vpop.permute.xlu0 %1365
        %1369 = vrot.lane.b32.xlu0 %v1324, 64
        %v1370 = vpop.permute.xlu0 %1369
        %1373 = vrot.lane.b32.xlu0 %v1325, 80
        %v1374 = vpop.permute.xlu0 %1373
        %1377 = vrot.lane.b32.xlu0 %v1326, 96
        %v1378 = vpop.permute.xlu0 %1377
        %1381 = vrot.lane.b32.xlu0 %v1327, 112
        %v1382 = vpop.permute.xlu0 %1381
        %v1384 = vsel %vm529, %v1184, %v1330
        %v1385 = vsel %vm531, %v1384, %v1334
        %v1386 = vsel %vm533, %v1385, %v1338
        %v1387 = vsel %vm535, %v1386, %v1342
        %v1388 = vsel %vm537, %v1387, %v1346
        %v1389 = vsel %vm539, %v1388, %v1350
        %v1390 = vsel %vm541, %v1389, %v1354
        %v1391 = vsel %vm529, %v1320, %v1358
        %v1392 = vsel %vm531, %v1391, %v1362
        %v1393 = vsel %vm533, %v1392, %v1366
        %v1394 = vsel %vm535, %v1393, %v1370
        %v1395 = vsel %vm537, %v1394, %v1374
        %v1396 = vsel %vm539, %v1395, %v1378
        %v1397 = vsel %vm541, %v1396, %v1382
        %1398 = vst [vmem:[#allocation2 + $0x20] sm:$0xff] %v1390
        %1399 = vst [vmem:[#allocation2 + $0x28] sm:$0xff] %v1397
        %s1400 = sadd.s32 %s183, 1
        %s1401 = scalar_lea.vmem %s177, %s1400
        %v1402 = vld [vmem:[%s1401] sm:$0xff]
        %v1403 = vld [vmem:[%s1401 + $0x8] sm:$0xff]
        %v1404 = vld [vmem:[%s1401 + $0x18] sm:$0xff]
        %v1405 = vld [vmem:[%s1401 + $0x20] sm:$0xff]
        %v1406 = vld [vmem:[%s1401 + $0x30] sm:$0xff]
        %v1407 = vld [vmem:[%s1401 + $0x38] sm:$0xff]
        %v1408 = vld [vmem:[%s1401 + $0x48] sm:$0xff]
        %v1409 = vld [vmem:[%s1401 + $0x50] sm:$0xff]
        %v1410 = vld [vmem:[%s1401 + $0x60] sm:$0xff]
        %v1411 = vld [vmem:[%s1401 + $0x68] sm:$0xff]
        %v1412 = vld [vmem:[%s1401 + $0x78] sm:$0xff]
        %v1413 = vld [vmem:[%s1401 + $0x80] sm:$0xff]
        %v1414 = vld [vmem:[%s1401 + $0x90] sm:$0xff]
        %v1415 = vld [vmem:[%s1401 + $0x98] sm:$0xff]
        %v1416 = vld [vmem:[%s1401 + $0xa8] sm:$0xff]
        %v1417 = vld [vmem:[%s1401 + $0xb0] sm:$0xff]
        %v1418 = vcombine.low %v1402, %v1406
        %v1419 = vcombine.high %v1402, %v1406
        %v1421 = vunpack.c.l.s4 1983009808
        %v1422 = vunpack.c.0.s8 %v1421
        %v1423 = vlaneseq
        %v1424 = vshrl.u32 %v1423, 7
        %v1425 = vsub.s32 %v1422, %v1424
        %v1426 = vrot.slane %v1418, %v1425
        %v1428 = vunpack.c.l.s4 1983009808
        %v1429 = vunpack.c.0.s8 %v1428
        %v1430 = vlaneseq
        %v1431 = vshrl.u32 %v1430, 7
        %v1432 = vsub.s32 %v1429, %v1431
        %v1433 = vrot.slane %v1419, %v1432
        %v1434 = vcombine.low %v1404, %v1408
        %v1435 = vcombine.high %v1404, %v1408
        %v1437 = vunpack.c.l.s4 1983009808
        %v1438 = vunpack.c.0.s8 %v1437
        %v1439 = vlaneseq
        %v1440 = vshrl.u32 %v1439, 7
        %v1441 = vsub.s32 %v1438, %v1440
        %v1442 = vrot.slane %v1434, %v1441
        %v1444 = vunpack.c.l.s4 1983009808
        %v1445 = vunpack.c.0.s8 %v1444
        %v1446 = vlaneseq
        %v1447 = vshrl.u32 %v1446, 7
        %v1448 = vsub.s32 %v1445, %v1447
        %v1449 = vrot.slane %v1435, %v1448
        %v1450 = vcombine.low %v1410, %v1414
        %v1451 = vcombine.high %v1410, %v1414
        %v1453 = vunpack.c.l.s4 1983009808
        %v1454 = vunpack.c.0.s8 %v1453
        %v1455 = vlaneseq
        %v1456 = vshrl.u32 %v1455, 7
        %v1457 = vsub.s32 %v1454, %v1456
        %v1458 = vrot.slane %v1450, %v1457
        %v1460 = vunpack.c.l.s4 1983009808
        %v1461 = vunpack.c.0.s8 %v1460
        %v1462 = vlaneseq
        %v1463 = vshrl.u32 %v1462, 7
        %v1464 = vsub.s32 %v1461, %v1463
        %v1465 = vrot.slane %v1451, %v1464
        %v1466 = vcombine.low %v1412, %v1416
        %v1467 = vcombine.high %v1412, %v1416
        %v1469 = vunpack.c.l.s4 1983009808
        %v1470 = vunpack.c.0.s8 %v1469
        %v1471 = vlaneseq
        %v1472 = vshrl.u32 %v1471, 7
        %v1473 = vsub.s32 %v1470, %v1472
        %v1474 = vrot.slane %v1466, %v1473
        %v1476 = vunpack.c.l.s4 1983009808
        %v1477 = vunpack.c.0.s8 %v1476
        %v1478 = vlaneseq
        %v1479 = vshrl.u32 %v1478, 7
        %v1480 = vsub.s32 %v1477, %v1479
        %v1481 = vrot.slane %v1467, %v1480
        %v1482 = vcombine.low %v1426, %v1442
        %v1483 = vcombine.high %v1426, %v1442
        %v1485 = vunpack.c.l.s4 1934713408
        %v1486 = vunpack.c.0.s8 %v1485
        %v1487 = vlaneseq
        %v1488 = vshrl.u32 %v1487, 7
        %v1489 = vsub.s32 %v1486, %v1488
        %v1490 = vrot.slane %v1482, %v1489
        %v1492 = vunpack.c.l.s4 1934713408
        %v1493 = vunpack.c.0.s8 %v1492
        %v1494 = vlaneseq
        %v1495 = vshrl.u32 %v1494, 7
        %v1496 = vsub.s32 %v1493, %v1495
        %v1497 = vrot.slane %v1483, %v1496
        %v1498 = vcombine.low %v1433, %v1449
        %v1499 = vcombine.high %v1433, %v1449
        %v1501 = vunpack.c.l.s4 1934713408
        %v1502 = vunpack.c.0.s8 %v1501
        %v1503 = vlaneseq
        %v1504 = vshrl.u32 %v1503, 7
        %v1505 = vsub.s32 %v1502, %v1504
        %v1506 = vrot.slane %v1498, %v1505
        %v1508 = vunpack.c.l.s4 1934713408
        %v1509 = vunpack.c.0.s8 %v1508
        %v1510 = vlaneseq
        %v1511 = vshrl.u32 %v1510, 7
        %v1512 = vsub.s32 %v1509, %v1511
        %v1513 = vrot.slane %v1499, %v1512
        %v1514 = vcombine.low %v1458, %v1474
        %v1515 = vcombine.high %v1458, %v1474
        %v1517 = vunpack.c.l.s4 1934713408
        %v1518 = vunpack.c.0.s8 %v1517
        %v1519 = vlaneseq
        %v1520 = vshrl.u32 %v1519, 7
        %v1521 = vsub.s32 %v1518, %v1520
        %v1522 = vrot.slane %v1514, %v1521
        %v1524 = vunpack.c.l.s4 1934713408
        %v1525 = vunpack.c.0.s8 %v1524
        %v1526 = vlaneseq
        %v1527 = vshrl.u32 %v1526, 7
        %v1528 = vsub.s32 %v1525, %v1527
        %v1529 = vrot.slane %v1515, %v1528
        %v1530 = vcombine.low %v1465, %v1481
        %v1531 = vcombine.high %v1465, %v1481
        %v1533 = vunpack.c.l.s4 1934713408
        %v1534 = vunpack.c.0.s8 %v1533
        %v1535 = vlaneseq
        %v1536 = vshrl.u32 %v1535, 7
        %v1537 = vsub.s32 %v1534, %v1536
        %v1538 = vrot.slane %v1530, %v1537
        %v1540 = vunpack.c.l.s4 1934713408
        %v1541 = vunpack.c.0.s8 %v1540
        %v1542 = vlaneseq
        %v1543 = vshrl.u32 %v1542, 7
        %v1544 = vsub.s32 %v1541, %v1543
        %v1545 = vrot.slane %v1531, %v1544
        %v1546 = vcombine.low %v1490, %v1522
        %v1547 = vcombine.high %v1490, %v1522
        %v1548 = vcombine.low %v1497, %v1529
        %v1549 = vcombine.high %v1497, %v1529
        %v1550 = vcombine.low %v1506, %v1538
        %v1551 = vcombine.high %v1506, %v1538
        %v1552 = vcombine.low %v1513, %v1545
        %v1553 = vcombine.high %v1513, %v1545
        %v1554 = vcombine.low %v1403, %v1407
        %v1555 = vcombine.high %v1403, %v1407
        %v1557 = vunpack.c.l.s4 1983009808
        %v1558 = vunpack.c.0.s8 %v1557
        %v1559 = vlaneseq
        %v1560 = vshrl.u32 %v1559, 7
        %v1561 = vsub.s32 %v1558, %v1560
        %v1562 = vrot.slane %v1554, %v1561
        %v1564 = vunpack.c.l.s4 1983009808
        %v1565 = vunpack.c.0.s8 %v1564
        %v1566 = vlaneseq
        %v1567 = vshrl.u32 %v1566, 7
        %v1568 = vsub.s32 %v1565, %v1567
        %v1569 = vrot.slane %v1555, %v1568
        %v1570 = vcombine.low %v1405, %v1409
        %v1571 = vcombine.high %v1405, %v1409
        %v1573 = vunpack.c.l.s4 1983009808
        %v1574 = vunpack.c.0.s8 %v1573
        %v1575 = vlaneseq
        %v1576 = vshrl.u32 %v1575, 7
        %v1577 = vsub.s32 %v1574, %v1576
        %v1578 = vrot.slane %v1570, %v1577
        %v1580 = vunpack.c.l.s4 1983009808
        %v1581 = vunpack.c.0.s8 %v1580
        %v1582 = vlaneseq
        %v1583 = vshrl.u32 %v1582, 7
        %v1584 = vsub.s32 %v1581, %v1583
        %v1585 = vrot.slane %v1571, %v1584
        %v1586 = vcombine.low %v1411, %v1415
        %v1587 = vcombine.high %v1411, %v1415
        %v1589 = vunpack.c.l.s4 1983009808
        %v1590 = vunpack.c.0.s8 %v1589
        %v1591 = vlaneseq
        %v1592 = vshrl.u32 %v1591, 7
        %v1593 = vsub.s32 %v1590, %v1592
        %v1594 = vrot.slane %v1586, %v1593
        %v1596 = vunpack.c.l.s4 1983009808
        %v1597 = vunpack.c.0.s8 %v1596
        %v1598 = vlaneseq
        %v1599 = vshrl.u32 %v1598, 7
        %v1600 = vsub.s32 %v1597, %v1599
        %v1601 = vrot.slane %v1587, %v1600
        %v1602 = vcombine.low %v1413, %v1417
        %v1603 = vcombine.high %v1413, %v1417
        %v1605 = vunpack.c.l.s4 1983009808
        %v1606 = vunpack.c.0.s8 %v1605
        %v1607 = vlaneseq
        %v1608 = vshrl.u32 %v1607, 7
        %v1609 = vsub.s32 %v1606, %v1608
        %v1610 = vrot.slane %v1602, %v1609
        %v1612 = vunpack.c.l.s4 1983009808
        %v1613 = vunpack.c.0.s8 %v1612
        %v1614 = vlaneseq
        %v1615 = vshrl.u32 %v1614, 7
        %v1616 = vsub.s32 %v1613, %v1615
        %v1617 = vrot.slane %v1603, %v1616
        %v1618 = vcombine.low %v1562, %v1578
        %v1619 = vcombine.high %v1562, %v1578
        %v1621 = vunpack.c.l.s4 1934713408
        %v1622 = vunpack.c.0.s8 %v1621
        %v1623 = vlaneseq
        %v1624 = vshrl.u32 %v1623, 7
        %v1625 = vsub.s32 %v1622, %v1624
        %v1626 = vrot.slane %v1618, %v1625
        %v1628 = vunpack.c.l.s4 1934713408
        %v1629 = vunpack.c.0.s8 %v1628
        %v1630 = vlaneseq
        %v1631 = vshrl.u32 %v1630, 7
        %v1632 = vsub.s32 %v1629, %v1631
        %v1633 = vrot.slane %v1619, %v1632
        %v1634 = vcombine.low %v1569, %v1585
        %v1635 = vcombine.high %v1569, %v1585
        %v1637 = vunpack.c.l.s4 1934713408
        %v1638 = vunpack.c.0.s8 %v1637
        %v1639 = vlaneseq
        %v1640 = vshrl.u32 %v1639, 7
        %v1641 = vsub.s32 %v1638, %v1640
        %v1642 = vrot.slane %v1634, %v1641
        %v1644 = vunpack.c.l.s4 1934713408
        %v1645 = vunpack.c.0.s8 %v1644
        %v1646 = vlaneseq
        %v1647 = vshrl.u32 %v1646, 7
        %v1648 = vsub.s32 %v1645, %v1647
        %v1649 = vrot.slane %v1635, %v1648
        %v1650 = vcombine.low %v1594, %v1610
        %v1651 = vcombine.high %v1594, %v1610
        %v1653 = vunpack.c.l.s4 1934713408
        %v1654 = vunpack.c.0.s8 %v1653
        %v1655 = vlaneseq
        %v1656 = vshrl.u32 %v1655, 7
        %v1657 = vsub.s32 %v1654, %v1656
        %v1658 = vrot.slane %v1650, %v1657
        %v1660 = vunpack.c.l.s4 1934713408
        %v1661 = vunpack.c.0.s8 %v1660
        %v1662 = vlaneseq
        %v1663 = vshrl.u32 %v1662, 7
        %v1664 = vsub.s32 %v1661, %v1663
        %v1665 = vrot.slane %v1651, %v1664
        %v1666 = vcombine.low %v1601, %v1617
        %v1667 = vcombine.high %v1601, %v1617
        %v1669 = vunpack.c.l.s4 1934713408
        %v1670 = vunpack.c.0.s8 %v1669
        %v1671 = vlaneseq
        %v1672 = vshrl.u32 %v1671, 7
        %v1673 = vsub.s32 %v1670, %v1672
        %v1674 = vrot.slane %v1666, %v1673
        %v1676 = vunpack.c.l.s4 1934713408
        %v1677 = vunpack.c.0.s8 %v1676
        %v1678 = vlaneseq
        %v1679 = vshrl.u32 %v1678, 7
        %v1680 = vsub.s32 %v1677, %v1679
        %v1681 = vrot.slane %v1667, %v1680
        %v1682 = vcombine.low %v1626, %v1658
        %v1683 = vcombine.high %v1626, %v1658
        %v1684 = vcombine.low %v1633, %v1665
        %v1685 = vcombine.high %v1633, %v1665
        %v1686 = vcombine.low %v1642, %v1674
        %v1687 = vcombine.high %v1642, %v1674
        %v1688 = vcombine.low %v1649, %v1681
        %v1689 = vcombine.high %v1649, %v1681
        %1691 = vrot.lane.b32.xlu0 %v1547, 16
        %v1692 = vpop.permute.xlu0 %1691
        %1695 = vrot.lane.b32.xlu0 %v1548, 32
        %v1696 = vpop.permute.xlu0 %1695
        %1699 = vrot.lane.b32.xlu0 %v1549, 48
        %v1700 = vpop.permute.xlu0 %1699
        %1703 = vrot.lane.b32.xlu0 %v1550, 64
        %v1704 = vpop.permute.xlu0 %1703
        %1707 = vrot.lane.b32.xlu0 %v1551, 80
        %v1708 = vpop.permute.xlu0 %1707
        %1711 = vrot.lane.b32.xlu0 %v1552, 96
        %v1712 = vpop.permute.xlu0 %1711
        %1715 = vrot.lane.b32.xlu0 %v1553, 112
        %v1716 = vpop.permute.xlu0 %1715
        %1719 = vrot.lane.b32.xlu0 %v1683, 16
        %v1720 = vpop.permute.xlu0 %1719
        %1723 = vrot.lane.b32.xlu0 %v1684, 32
        %v1724 = vpop.permute.xlu0 %1723
        %1727 = vrot.lane.b32.xlu0 %v1685, 48
        %v1728 = vpop.permute.xlu0 %1727
        %1731 = vrot.lane.b32.xlu0 %v1686, 64
        %v1732 = vpop.permute.xlu0 %1731
        %1735 = vrot.lane.b32.xlu0 %v1687, 80
        %v1736 = vpop.permute.xlu0 %1735
        %1739 = vrot.lane.b32.xlu0 %v1688, 96
        %v1740 = vpop.permute.xlu0 %1739
        %1743 = vrot.lane.b32.xlu0 %v1689, 112
        %v1744 = vpop.permute.xlu0 %1743
        %v1746 = vsel %vm529, %v1546, %v1692
        %v1747 = vsel %vm531, %v1746, %v1696
        %v1748 = vsel %vm533, %v1747, %v1700
        %v1749 = vsel %vm535, %v1748, %v1704
        %v1750 = vsel %vm537, %v1749, %v1708
        %v1751 = vsel %vm539, %v1750, %v1712
        %v1752 = vsel %vm541, %v1751, %v1716
        %v1753 = vsel %vm529, %v1682, %v1720
        %v1754 = vsel %vm531, %v1753, %v1724
        %v1755 = vsel %vm533, %v1754, %v1728
        %v1756 = vsel %vm535, %v1755, %v1732
        %v1757 = vsel %vm537, %v1756, %v1736
        %v1758 = vsel %vm539, %v1757, %v1740
        %v1759 = vsel %vm541, %v1758, %v1744
        %1760 = vst [vmem:[#allocation2 + $0x30] sm:$0xff] %v1752
        %1761 = vst [vmem:[#allocation2 + $0x38] sm:$0xff] %v1759
        %v1762 = vld [vmem:[%s1401] sm:$0xff]
        %v1763 = vld [vmem:[%s1401 + $0x8] sm:$0xff]
        %v1764 = vld [vmem:[%s1401 + $0x18] sm:$0xff]
        %v1765 = vld [vmem:[%s1401 + $0x20] sm:$0xff]
        %v1766 = vld [vmem:[%s1401 + $0x30] sm:$0xff]
        %v1767 = vld [vmem:[%s1401 + $0x38] sm:$0xff]
        %v1768 = vld [vmem:[%s1401 + $0x48] sm:$0xff]
        %v1769 = vld [vmem:[%s1401 + $0x50] sm:$0xff]
        %v1770 = vld [vmem:[%s1401 + $0x60] sm:$0xff]
        %v1771 = vld [vmem:[%s1401 + $0x68] sm:$0xff]
        %v1772 = vld [vmem:[%s1401 + $0x78] sm:$0xff]
        %v1773 = vld [vmem:[%s1401 + $0x80] sm:$0xff]
        %v1774 = vld [vmem:[%s1401 + $0x90] sm:$0xff]
        %v1775 = vld [vmem:[%s1401 + $0x98] sm:$0xff]
        %v1776 = vld [vmem:[%s1401 + $0xa8] sm:$0xff]
        %v1777 = vld [vmem:[%s1401 + $0xb0] sm:$0xff]
        %1794 = vrot.lane.b32.xlu0 %v1762, 127
        %v1795 = vpop.permute.xlu0 %1794
        %1796 = vrot.lane.b32.xlu0 %v1763, 127
        %v1797 = vpop.permute.xlu0 %1796
        %1798 = vrot.lane.b32.xlu0 %v1764, 127
        %v1799 = vpop.permute.xlu0 %1798
        %1800 = vrot.lane.b32.xlu0 %v1765, 127
        %v1801 = vpop.permute.xlu0 %1800
        %1802 = vrot.lane.b32.xlu0 %v1766, 127
        %v1803 = vpop.permute.xlu0 %1802
        %1804 = vrot.lane.b32.xlu0 %v1767, 127
        %v1805 = vpop.permute.xlu0 %1804
        %1806 = vrot.lane.b32.xlu0 %v1768, 127
        %v1807 = vpop.permute.xlu0 %1806
        %1808 = vrot.lane.b32.xlu0 %v1769, 127
        %v1809 = vpop.permute.xlu0 %1808
        %1810 = vrot.lane.b32.xlu0 %v1770, 127
        %v1811 = vpop.permute.xlu0 %1810
        %1812 = vrot.lane.b32.xlu0 %v1771, 127
        %v1813 = vpop.permute.xlu0 %1812
        %1814 = vrot.lane.b32.xlu0 %v1772, 127
        %v1815 = vpop.permute.xlu0 %1814
        %1816 = vrot.lane.b32.xlu0 %v1773, 127
        %v1817 = vpop.permute.xlu0 %1816
        %1818 = vrot.lane.b32.xlu0 %v1774, 127
        %v1819 = vpop.permute.xlu0 %1818
        %1820 = vrot.lane.b32.xlu0 %v1775, 127
        %v1821 = vpop.permute.xlu0 %1820
        %1822 = vrot.lane.b32.xlu0 %v1776, 127
        %v1823 = vpop.permute.xlu0 %1822
        %1824 = vrot.lane.b32.xlu0 %v1777, 127
        %v1825 = vpop.permute.xlu0 %1824
        %v1842 = vcombine.low %v1795, %v1803
        %v1843 = vcombine.high %v1795, %v1803
        %v1845 = vunpack.c.l.s4 1983009808
        %v1846 = vunpack.c.0.s8 %v1845
        %v1847 = vlaneseq
        %v1848 = vshrl.u32 %v1847, 7
        %v1849 = vsub.s32 %v1846, %v1848
        %v1850 = vrot.slane %v1842, %v1849
        %v1852 = vunpack.c.l.s4 1983009808
        %v1853 = vunpack.c.0.s8 %v1852
        %v1854 = vlaneseq
        %v1855 = vshrl.u32 %v1854, 7
        %v1856 = vsub.s32 %v1853, %v1855
        %v1857 = vrot.slane %v1843, %v1856
        %v1858 = vcombine.low %v1799, %v1807
        %v1859 = vcombine.high %v1799, %v1807
        %v1861 = vunpack.c.l.s4 1983009808
        %v1862 = vunpack.c.0.s8 %v1861
        %v1863 = vlaneseq
        %v1864 = vshrl.u32 %v1863, 7
        %v1865 = vsub.s32 %v1862, %v1864
        %v1866 = vrot.slane %v1858, %v1865
        %v1868 = vunpack.c.l.s4 1983009808
        %v1869 = vunpack.c.0.s8 %v1868
        %v1870 = vlaneseq
        %v1871 = vshrl.u32 %v1870, 7
        %v1872 = vsub.s32 %v1869, %v1871
        %v1873 = vrot.slane %v1859, %v1872
        %v1874 = vcombine.low %v1811, %v1819
        %v1875 = vcombine.high %v1811, %v1819
        %v1877 = vunpack.c.l.s4 1983009808
        %v1878 = vunpack.c.0.s8 %v1877
        %v1879 = vlaneseq
        %v1880 = vshrl.u32 %v1879, 7
        %v1881 = vsub.s32 %v1878, %v1880
        %v1882 = vrot.slane %v1874, %v1881
        %v1884 = vunpack.c.l.s4 1983009808
        %v1885 = vunpack.c.0.s8 %v1884
        %v1886 = vlaneseq
        %v1887 = vshrl.u32 %v1886, 7
        %v1888 = vsub.s32 %v1885, %v1887
        %v1889 = vrot.slane %v1875, %v1888
        %v1890 = vcombine.low %v1815, %v1823
        %v1891 = vcombine.high %v1815, %v1823
        %v1893 = vunpack.c.l.s4 1983009808
        %v1894 = vunpack.c.0.s8 %v1893
        %v1895 = vlaneseq
        %v1896 = vshrl.u32 %v1895, 7
        %v1897 = vsub.s32 %v1894, %v1896
        %v1898 = vrot.slane %v1890, %v1897
        %v1900 = vunpack.c.l.s4 1983009808
        %v1901 = vunpack.c.0.s8 %v1900
        %v1902 = vlaneseq
        %v1903 = vshrl.u32 %v1902, 7
        %v1904 = vsub.s32 %v1901, %v1903
        %v1905 = vrot.slane %v1891, %v1904
        %v1906 = vcombine.low %v1850, %v1866
        %v1907 = vcombine.high %v1850, %v1866
        %v1909 = vunpack.c.l.s4 1934713408
        %v1910 = vunpack.c.0.s8 %v1909
        %v1911 = vlaneseq
        %v1912 = vshrl.u32 %v1911, 7
        %v1913 = vsub.s32 %v1910, %v1912
        %v1914 = vrot.slane %v1906, %v1913
        %v1916 = vunpack.c.l.s4 1934713408
        %v1917 = vunpack.c.0.s8 %v1916
        %v1918 = vlaneseq
        %v1919 = vshrl.u32 %v1918, 7
        %v1920 = vsub.s32 %v1917, %v1919
        %v1921 = vrot.slane %v1907, %v1920
        %v1922 = vcombine.low %v1857, %v1873
        %v1923 = vcombine.high %v1857, %v1873
        %v1925 = vunpack.c.l.s4 1934713408
        %v1926 = vunpack.c.0.s8 %v1925
        %v1927 = vlaneseq
        %v1928 = vshrl.u32 %v1927, 7
        %v1929 = vsub.s32 %v1926, %v1928
        %v1930 = vrot.slane %v1922, %v1929
        %v1932 = vunpack.c.l.s4 1934713408
        %v1933 = vunpack.c.0.s8 %v1932
        %v1934 = vlaneseq
        %v1935 = vshrl.u32 %v1934, 7
        %v1936 = vsub.s32 %v1933, %v1935
        %v1937 = vrot.slane %v1923, %v1936
        %v1938 = vcombine.low %v1882, %v1898
        %v1939 = vcombine.high %v1882, %v1898
        %v1941 = vunpack.c.l.s4 1934713408
        %v1942 = vunpack.c.0.s8 %v1941
        %v1943 = vlaneseq
        %v1944 = vshrl.u32 %v1943, 7
        %v1945 = vsub.s32 %v1942, %v1944
        %v1946 = vrot.slane %v1938, %v1945
        %v1948 = vunpack.c.l.s4 1934713408
        %v1949 = vunpack.c.0.s8 %v1948
        %v1950 = vlaneseq
        %v1951 = vshrl.u32 %v1950, 7
        %v1952 = vsub.s32 %v1949, %v1951
        %v1953 = vrot.slane %v1939, %v1952
        %v1954 = vcombine.low %v1889, %v1905
        %v1955 = vcombine.high %v1889, %v1905
        %v1957 = vunpack.c.l.s4 1934713408
        %v1958 = vunpack.c.0.s8 %v1957
        %v1959 = vlaneseq
        %v1960 = vshrl.u32 %v1959, 7
        %v1961 = vsub.s32 %v1958, %v1960
        %v1962 = vrot.slane %v1954, %v1961
        %v1964 = vunpack.c.l.s4 1934713408
        %v1965 = vunpack.c.0.s8 %v1964
        %v1966 = vlaneseq
        %v1967 = vshrl.u32 %v1966, 7
        %v1968 = vsub.s32 %v1965, %v1967
        %v1969 = vrot.slane %v1955, %v1968
        %v1970 = vcombine.low %v1914, %v1946
        %v1971 = vcombine.high %v1914, %v1946
        %v1972 = vcombine.low %v1921, %v1953
        %v1973 = vcombine.high %v1921, %v1953
        %v1974 = vcombine.low %v1930, %v1962
        %v1975 = vcombine.high %v1930, %v1962
        %v1976 = vcombine.low %v1937, %v1969
        %v1977 = vcombine.high %v1937, %v1969
        %v1978 = vcombine.low %v1797, %v1805
        %v1979 = vcombine.high %v1797, %v1805
        %v1981 = vunpack.c.l.s4 1983009808
        %v1982 = vunpack.c.0.s8 %v1981
        %v1983 = vlaneseq
        %v1984 = vshrl.u32 %v1983, 7
        %v1985 = vsub.s32 %v1982, %v1984
        %v1986 = vrot.slane %v1978, %v1985
        %v1988 = vunpack.c.l.s4 1983009808
        %v1989 = vunpack.c.0.s8 %v1988
        %v1990 = vlaneseq
        %v1991 = vshrl.u32 %v1990, 7
        %v1992 = vsub.s32 %v1989, %v1991
        %v1993 = vrot.slane %v1979, %v1992
        %v1994 = vcombine.low %v1801, %v1809
        %v1995 = vcombine.high %v1801, %v1809
        %v1997 = vunpack.c.l.s4 1983009808
        %v1998 = vunpack.c.0.s8 %v1997
        %v1999 = vlaneseq
        %v2000 = vshrl.u32 %v1999, 7
        %v2001 = vsub.s32 %v1998, %v2000
        %v2002 = vrot.slane %v1994, %v2001
        %v2004 = vunpack.c.l.s4 1983009808
        %v2005 = vunpack.c.0.s8 %v2004
        %v2006 = vlaneseq
        %v2007 = vshrl.u32 %v2006, 7
        %v2008 = vsub.s32 %v2005, %v2007
        %v2009 = vrot.slane %v1995, %v2008
        %v2010 = vcombine.low %v1813, %v1821
        %v2011 = vcombine.high %v1813, %v1821
        %v2013 = vunpack.c.l.s4 1983009808
        %v2014 = vunpack.c.0.s8 %v2013
        %v2015 = vlaneseq
        %v2016 = vshrl.u32 %v2015, 7
        %v2017 = vsub.s32 %v2014, %v2016
        %v2018 = vrot.slane %v2010, %v2017
        %v2020 = vunpack.c.l.s4 1983009808
        %v2021 = vunpack.c.0.s8 %v2020
        %v2022 = vlaneseq
        %v2023 = vshrl.u32 %v2022, 7
        %v2024 = vsub.s32 %v2021, %v2023
        %v2025 = vrot.slane %v2011, %v2024
        %v2026 = vcombine.low %v1817, %v1825
        %v2027 = vcombine.high %v1817, %v1825
        %v2029 = vunpack.c.l.s4 1983009808
        %v2030 = vunpack.c.0.s8 %v2029
        %v2031 = vlaneseq
        %v2032 = vshrl.u32 %v2031, 7
        %v2033 = vsub.s32 %v2030, %v2032
        %v2034 = vrot.slane %v2026, %v2033
        %v2036 = vunpack.c.l.s4 1983009808
        %v2037 = vunpack.c.0.s8 %v2036
        %v2038 = vlaneseq
        %v2039 = vshrl.u32 %v2038, 7
        %v2040 = vsub.s32 %v2037, %v2039
        %v2041 = vrot.slane %v2027, %v2040
        %v2042 = vcombine.low %v1986, %v2002
        %v2043 = vcombine.high %v1986, %v2002
        %v2045 = vunpack.c.l.s4 1934713408
        %v2046 = vunpack.c.0.s8 %v2045
        %v2047 = vlaneseq
        %v2048 = vshrl.u32 %v2047, 7
        %v2049 = vsub.s32 %v2046, %v2048
        %v2050 = vrot.slane %v2042, %v2049
        %v2052 = vunpack.c.l.s4 1934713408
        %v2053 = vunpack.c.0.s8 %v2052
        %v2054 = vlaneseq
        %v2055 = vshrl.u32 %v2054, 7
        %v2056 = vsub.s32 %v2053, %v2055
        %v2057 = vrot.slane %v2043, %v2056
        %v2058 = vcombine.low %v1993, %v2009
        %v2059 = vcombine.high %v1993, %v2009
        %v2061 = vunpack.c.l.s4 1934713408
        %v2062 = vunpack.c.0.s8 %v2061
        %v2063 = vlaneseq
        %v2064 = vshrl.u32 %v2063, 7
        %v2065 = vsub.s32 %v2062, %v2064
        %v2066 = vrot.slane %v2058, %v2065
        %v2068 = vunpack.c.l.s4 1934713408
        %v2069 = vunpack.c.0.s8 %v2068
        %v2070 = vlaneseq
        %v2071 = vshrl.u32 %v2070, 7
        %v2072 = vsub.s32 %v2069, %v2071
        %v2073 = vrot.slane %v2059, %v2072
        %v2074 = vcombine.low %v2018, %v2034
        %v2075 = vcombine.high %v2018, %v2034
        %v2077 = vunpack.c.l.s4 1934713408
        %v2078 = vunpack.c.0.s8 %v2077
        %v2079 = vlaneseq
        %v2080 = vshrl.u32 %v2079, 7
        %v2081 = vsub.s32 %v2078, %v2080
        %v2082 = vrot.slane %v2074, %v2081
        %v2084 = vunpack.c.l.s4 1934713408
        %v2085 = vunpack.c.0.s8 %v2084
        %v2086 = vlaneseq
        %v2087 = vshrl.u32 %v2086, 7
        %v2088 = vsub.s32 %v2085, %v2087
        %v2089 = vrot.slane %v2075, %v2088
        %v2090 = vcombine.low %v2025, %v2041
        %v2091 = vcombine.high %v2025, %v2041
        %v2093 = vunpack.c.l.s4 1934713408
        %v2094 = vunpack.c.0.s8 %v2093
        %v2095 = vlaneseq
        %v2096 = vshrl.u32 %v2095, 7
        %v2097 = vsub.s32 %v2094, %v2096
        %v2098 = vrot.slane %v2090, %v2097
        %v2100 = vunpack.c.l.s4 1934713408
        %v2101 = vunpack.c.0.s8 %v2100
        %v2102 = vlaneseq
        %v2103 = vshrl.u32 %v2102, 7
        %v2104 = vsub.s32 %v2101, %v2103
        %v2105 = vrot.slane %v2091, %v2104
        %v2106 = vcombine.low %v2050, %v2082
        %v2107 = vcombine.high %v2050, %v2082
        %v2108 = vcombine.low %v2057, %v2089
        %v2109 = vcombine.high %v2057, %v2089
        %v2110 = vcombine.low %v2066, %v2098
        %v2111 = vcombine.high %v2066, %v2098
        %v2112 = vcombine.low %v2073, %v2105
        %v2113 = vcombine.high %v2073, %v2105
        %2115 = vrot.lane.b32.xlu0 %v1971, 16
        %v2116 = vpop.permute.xlu0 %2115
        %2119 = vrot.lane.b32.xlu0 %v1972, 32
        %v2120 = vpop.permute.xlu0 %2119
        %2123 = vrot.lane.b32.xlu0 %v1973, 48
        %v2124 = vpop.permute.xlu0 %2123
        %2127 = vrot.lane.b32.xlu0 %v1974, 64
        %v2128 = vpop.permute.xlu0 %2127
        %2131 = vrot.lane.b32.xlu0 %v1975, 80
        %v2132 = vpop.permute.xlu0 %2131
        %2135 = vrot.lane.b32.xlu0 %v1976, 96
        %v2136 = vpop.permute.xlu0 %2135
        %2139 = vrot.lane.b32.xlu0 %v1977, 112
        %v2140 = vpop.permute.xlu0 %2139
        %2143 = vrot.lane.b32.xlu0 %v2107, 16
        %v2144 = vpop.permute.xlu0 %2143
        %2147 = vrot.lane.b32.xlu0 %v2108, 32
        %v2148 = vpop.permute.xlu0 %2147
        %2151 = vrot.lane.b32.xlu0 %v2109, 48
        %v2152 = vpop.permute.xlu0 %2151
        %2155 = vrot.lane.b32.xlu0 %v2110, 64
        %v2156 = vpop.permute.xlu0 %2155
        %2159 = vrot.lane.b32.xlu0 %v2111, 80
        %v2160 = vpop.permute.xlu0 %2159
        %2163 = vrot.lane.b32.xlu0 %v2112, 96
        %v2164 = vpop.permute.xlu0 %2163
        %2167 = vrot.lane.b32.xlu0 %v2113, 112
        %v2168 = vpop.permute.xlu0 %2167
        %v2170 = vsel %vm529, %v1970, %v2116
        %v2171 = vsel %vm531, %v2170, %v2120
        %v2172 = vsel %vm533, %v2171, %v2124
        %v2173 = vsel %vm535, %v2172, %v2128
        %v2174 = vsel %vm537, %v2173, %v2132
        %v2175 = vsel %vm539, %v2174, %v2136
        %v2176 = vsel %vm541, %v2175, %v2140
        %v2177 = vsel %vm529, %v2106, %v2144
        %v2178 = vsel %vm531, %v2177, %v2148
        %v2179 = vsel %vm533, %v2178, %v2152
        %v2180 = vsel %vm535, %v2179, %v2156
        %v2181 = vsel %vm537, %v2180, %v2160
        %v2182 = vsel %vm539, %v2181, %v2164
        %v2183 = vsel %vm541, %v2182, %v2168
        %2184 = vst [vmem:[#allocation2 + $0x40] sm:$0xff] %v2176
        %2185 = vst [vmem:[#allocation2 + $0x48] sm:$0xff] %v2183
        %v2186 = vld [vmem:[%s1401] sm:$0xff]
        %v2187 = vld [vmem:[%s1401 + $0x8] sm:$0xff]
        %v2188 = vld [vmem:[%s1401 + $0x18] sm:$0xff]
        %v2189 = vld [vmem:[%s1401 + $0x20] sm:$0xff]
        %v2190 = vld [vmem:[%s1401 + $0x30] sm:$0xff]
        %v2191 = vld [vmem:[%s1401 + $0x38] sm:$0xff]
        %v2192 = vld [vmem:[%s1401 + $0x48] sm:$0xff]
        %v2193 = vld [vmem:[%s1401 + $0x50] sm:$0xff]
        %v2194 = vld [vmem:[%s1401 + $0x60] sm:$0xff]
        %v2195 = vld [vmem:[%s1401 + $0x68] sm:$0xff]
        %v2196 = vld [vmem:[%s1401 + $0x78] sm:$0xff]
        %v2197 = vld [vmem:[%s1401 + $0x80] sm:$0xff]
        %v2198 = vld [vmem:[%s1401 + $0x90] sm:$0xff]
        %v2199 = vld [vmem:[%s1401 + $0x98] sm:$0xff]
        %v2200 = vld [vmem:[%s1401 + $0xa8] sm:$0xff]
        %v2201 = vld [vmem:[%s1401 + $0xb0] sm:$0xff]
        %2218 = vrot.lane.b32.xlu0 %v2186, 126
        %v2219 = vpop.permute.xlu0 %2218
        %2220 = vrot.lane.b32.xlu0 %v2187, 126
        %v2221 = vpop.permute.xlu0 %2220
        %2222 = vrot.lane.b32.xlu0 %v2188, 126
        %v2223 = vpop.permute.xlu0 %2222
        %2224 = vrot.lane.b32.xlu0 %v2189, 126
        %v2225 = vpop.permute.xlu0 %2224
        %2226 = vrot.lane.b32.xlu0 %v2190, 126
        %v2227 = vpop.permute.xlu0 %2226
        %2228 = vrot.lane.b32.xlu0 %v2191, 126
        %v2229 = vpop.permute.xlu0 %2228
        %2230 = vrot.lane.b32.xlu0 %v2192, 126
        %v2231 = vpop.permute.xlu0 %2230
        %2232 = vrot.lane.b32.xlu0 %v2193, 126
        %v2233 = vpop.permute.xlu0 %2232
        %2234 = vrot.lane.b32.xlu0 %v2194, 126
        %v2235 = vpop.permute.xlu0 %2234
        %2236 = vrot.lane.b32.xlu0 %v2195, 126
        %v2237 = vpop.permute.xlu0 %2236
        %2238 = vrot.lane.b32.xlu0 %v2196, 126
        %v2239 = vpop.permute.xlu0 %2238
        %2240 = vrot.lane.b32.xlu0 %v2197, 126
        %v2241 = vpop.permute.xlu0 %2240
        %2242 = vrot.lane.b32.xlu0 %v2198, 126
        %v2243 = vpop.permute.xlu0 %2242
        %2244 = vrot.lane.b32.xlu0 %v2199, 126
        %v2245 = vpop.permute.xlu0 %2244
        %2246 = vrot.lane.b32.xlu0 %v2200, 126
        %v2247 = vpop.permute.xlu0 %2246
        %2248 = vrot.lane.b32.xlu0 %v2201, 126
        %v2249 = vpop.permute.xlu0 %2248
        %v2266 = vcombine.low %v2219, %v2227
        %v2267 = vcombine.high %v2219, %v2227
        %v2269 = vunpack.c.l.s4 1983009808
        %v2270 = vunpack.c.0.s8 %v2269
        %v2271 = vlaneseq
        %v2272 = vshrl.u32 %v2271, 7
        %v2273 = vsub.s32 %v2270, %v2272
        %v2274 = vrot.slane %v2266, %v2273
        %v2276 = vunpack.c.l.s4 1983009808
        %v2277 = vunpack.c.0.s8 %v2276
        %v2278 = vlaneseq
        %v2279 = vshrl.u32 %v2278, 7
        %v2280 = vsub.s32 %v2277, %v2279
        %v2281 = vrot.slane %v2267, %v2280
        %v2282 = vcombine.low %v2223, %v2231
        %v2283 = vcombine.high %v2223, %v2231
        %v2285 = vunpack.c.l.s4 1983009808
        %v2286 = vunpack.c.0.s8 %v2285
        %v2287 = vlaneseq
        %v2288 = vshrl.u32 %v2287, 7
        %v2289 = vsub.s32 %v2286, %v2288
        %v2290 = vrot.slane %v2282, %v2289
        %v2292 = vunpack.c.l.s4 1983009808
        %v2293 = vunpack.c.0.s8 %v2292
        %v2294 = vlaneseq
        %v2295 = vshrl.u32 %v2294, 7
        %v2296 = vsub.s32 %v2293, %v2295
        %v2297 = vrot.slane %v2283, %v2296
        %v2298 = vcombine.low %v2235, %v2243
        %v2299 = vcombine.high %v2235, %v2243
        %v2301 = vunpack.c.l.s4 1983009808
        %v2302 = vunpack.c.0.s8 %v2301
        %v2303 = vlaneseq
        %v2304 = vshrl.u32 %v2303, 7
        %v2305 = vsub.s32 %v2302, %v2304
        %v2306 = vrot.slane %v2298, %v2305
        %v2308 = vunpack.c.l.s4 1983009808
        %v2309 = vunpack.c.0.s8 %v2308
        %v2310 = vlaneseq
        %v2311 = vshrl.u32 %v2310, 7
        %v2312 = vsub.s32 %v2309, %v2311
        %v2313 = vrot.slane %v2299, %v2312
        %v2314 = vcombine.low %v2239, %v2247
        %v2315 = vcombine.high %v2239, %v2247
        %v2317 = vunpack.c.l.s4 1983009808
        %v2318 = vunpack.c.0.s8 %v2317
        %v2319 = vlaneseq
        %v2320 = vshrl.u32 %v2319, 7
        %v2321 = vsub.s32 %v2318, %v2320
        %v2322 = vrot.slane %v2314, %v2321
        %v2324 = vunpack.c.l.s4 1983009808
        %v2325 = vunpack.c.0.s8 %v2324
        %v2326 = vlaneseq
        %v2327 = vshrl.u32 %v2326, 7
        %v2328 = vsub.s32 %v2325, %v2327
        %v2329 = vrot.slane %v2315, %v2328
        %v2330 = vcombine.low %v2274, %v2290
        %v2331 = vcombine.high %v2274, %v2290
        %v2333 = vunpack.c.l.s4 1934713408
        %v2334 = vunpack.c.0.s8 %v2333
        %v2335 = vlaneseq
        %v2336 = vshrl.u32 %v2335, 7
        %v2337 = vsub.s32 %v2334, %v2336
        %v2338 = vrot.slane %v2330, %v2337
        %v2340 = vunpack.c.l.s4 1934713408
        %v2341 = vunpack.c.0.s8 %v2340
        %v2342 = vlaneseq
        %v2343 = vshrl.u32 %v2342, 7
        %v2344 = vsub.s32 %v2341, %v2343
        %v2345 = vrot.slane %v2331, %v2344
        %v2346 = vcombine.low %v2281, %v2297
        %v2347 = vcombine.high %v2281, %v2297
        %v2349 = vunpack.c.l.s4 1934713408
        %v2350 = vunpack.c.0.s8 %v2349
        %v2351 = vlaneseq
        %v2352 = vshrl.u32 %v2351, 7
        %v2353 = vsub.s32 %v2350, %v2352
        %v2354 = vrot.slane %v2346, %v2353
        %v2356 = vunpack.c.l.s4 1934713408
        %v2357 = vunpack.c.0.s8 %v2356
        %v2358 = vlaneseq
        %v2359 = vshrl.u32 %v2358, 7
        %v2360 = vsub.s32 %v2357, %v2359
        %v2361 = vrot.slane %v2347, %v2360
        %v2362 = vcombine.low %v2306, %v2322
        %v2363 = vcombine.high %v2306, %v2322
        %v2365 = vunpack.c.l.s4 1934713408
        %v2366 = vunpack.c.0.s8 %v2365
        %v2367 = vlaneseq
        %v2368 = vshrl.u32 %v2367, 7
        %v2369 = vsub.s32 %v2366, %v2368
        %v2370 = vrot.slane %v2362, %v2369
        %v2372 = vunpack.c.l.s4 1934713408
        %v2373 = vunpack.c.0.s8 %v2372
        %v2374 = vlaneseq
        %v2375 = vshrl.u32 %v2374, 7
        %v2376 = vsub.s32 %v2373, %v2375
        %v2377 = vrot.slane %v2363, %v2376
        %v2378 = vcombine.low %v2313, %v2329
        %v2379 = vcombine.high %v2313, %v2329
        %v2381 = vunpack.c.l.s4 1934713408
        %v2382 = vunpack.c.0.s8 %v2381
        %v2383 = vlaneseq
        %v2384 = vshrl.u32 %v2383, 7
        %v2385 = vsub.s32 %v2382, %v2384
        %v2386 = vrot.slane %v2378, %v2385
        %v2388 = vunpack.c.l.s4 1934713408
        %v2389 = vunpack.c.0.s8 %v2388
        %v2390 = vlaneseq
        %v2391 = vshrl.u32 %v2390, 7
        %v2392 = vsub.s32 %v2389, %v2391
        %v2393 = vrot.slane %v2379, %v2392
        %v2394 = vcombine.low %v2338, %v2370
        %v2395 = vcombine.high %v2338, %v2370
        %v2396 = vcombine.low %v2345, %v2377
        %v2397 = vcombine.high %v2345, %v2377
        %v2398 = vcombine.low %v2354, %v2386
        %v2399 = vcombine.high %v2354, %v2386
        %v2400 = vcombine.low %v2361, %v2393
        %v2401 = vcombine.high %v2361, %v2393
        %v2402 = vcombine.low %v2221, %v2229
        %v2403 = vcombine.high %v2221, %v2229
        %v2405 = vunpack.c.l.s4 1983009808
        %v2406 = vunpack.c.0.s8 %v2405
        %v2407 = vlaneseq
        %v2408 = vshrl.u32 %v2407, 7
        %v2409 = vsub.s32 %v2406, %v2408
        %v2410 = vrot.slane %v2402, %v2409
        %v2412 = vunpack.c.l.s4 1983009808
        %v2413 = vunpack.c.0.s8 %v2412
        %v2414 = vlaneseq
        %v2415 = vshrl.u32 %v2414, 7
        %v2416 = vsub.s32 %v2413, %v2415
        %v2417 = vrot.slane %v2403, %v2416
        %v2418 = vcombine.low %v2225, %v2233
        %v2419 = vcombine.high %v2225, %v2233
        %v2421 = vunpack.c.l.s4 1983009808
        %v2422 = vunpack.c.0.s8 %v2421
        %v2423 = vlaneseq
        %v2424 = vshrl.u32 %v2423, 7
        %v2425 = vsub.s32 %v2422, %v2424
        %v2426 = vrot.slane %v2418, %v2425
        %v2428 = vunpack.c.l.s4 1983009808
        %v2429 = vunpack.c.0.s8 %v2428
        %v2430 = vlaneseq
        %v2431 = vshrl.u32 %v2430, 7
        %v2432 = vsub.s32 %v2429, %v2431
        %v2433 = vrot.slane %v2419, %v2432
        %v2434 = vcombine.low %v2237, %v2245
        %v2435 = vcombine.high %v2237, %v2245
        %v2437 = vunpack.c.l.s4 1983009808
        %v2438 = vunpack.c.0.s8 %v2437
        %v2439 = vlaneseq
        %v2440 = vshrl.u32 %v2439, 7
        %v2441 = vsub.s32 %v2438, %v2440
        %v2442 = vrot.slane %v2434, %v2441
        %v2444 = vunpack.c.l.s4 1983009808
        %v2445 = vunpack.c.0.s8 %v2444
        %v2446 = vlaneseq
        %v2447 = vshrl.u32 %v2446, 7
        %v2448 = vsub.s32 %v2445, %v2447
        %v2449 = vrot.slane %v2435, %v2448
        %v2450 = vcombine.low %v2241, %v2249
        %v2451 = vcombine.high %v2241, %v2249
        %v2453 = vunpack.c.l.s4 1983009808
        %v2454 = vunpack.c.0.s8 %v2453
        %v2455 = vlaneseq
        %v2456 = vshrl.u32 %v2455, 7
        %v2457 = vsub.s32 %v2454, %v2456
        %v2458 = vrot.slane %v2450, %v2457
        %v2460 = vunpack.c.l.s4 1983009808
        %v2461 = vunpack.c.0.s8 %v2460
        %v2462 = vlaneseq
        %v2463 = vshrl.u32 %v2462, 7
        %v2464 = vsub.s32 %v2461, %v2463
        %v2465 = vrot.slane %v2451, %v2464
        %v2466 = vcombine.low %v2410, %v2426
        %v2467 = vcombine.high %v2410, %v2426
        %v2469 = vunpack.c.l.s4 1934713408
        %v2470 = vunpack.c.0.s8 %v2469
        %v2471 = vlaneseq
        %v2472 = vshrl.u32 %v2471, 7
        %v2473 = vsub.s32 %v2470, %v2472
        %v2474 = vrot.slane %v2466, %v2473
        %v2476 = vunpack.c.l.s4 1934713408
        %v2477 = vunpack.c.0.s8 %v2476
        %v2478 = vlaneseq
        %v2479 = vshrl.u32 %v2478, 7
        %v2480 = vsub.s32 %v2477, %v2479
        %v2481 = vrot.slane %v2467, %v2480
        %v2482 = vcombine.low %v2417, %v2433
        %v2483 = vcombine.high %v2417, %v2433
        %v2485 = vunpack.c.l.s4 1934713408
        %v2486 = vunpack.c.0.s8 %v2485
        %v2487 = vlaneseq
        %v2488 = vshrl.u32 %v2487, 7
        %v2489 = vsub.s32 %v2486, %v2488
        %v2490 = vrot.slane %v2482, %v2489
        %v2492 = vunpack.c.l.s4 1934713408
        %v2493 = vunpack.c.0.s8 %v2492
        %v2494 = vlaneseq
        %v2495 = vshrl.u32 %v2494, 7
        %v2496 = vsub.s32 %v2493, %v2495
        %v2497 = vrot.slane %v2483, %v2496
        %v2498 = vcombine.low %v2442, %v2458
        %v2499 = vcombine.high %v2442, %v2458
        %v2501 = vunpack.c.l.s4 1934713408
        %v2502 = vunpack.c.0.s8 %v2501
        %v2503 = vlaneseq
        %v2504 = vshrl.u32 %v2503, 7
        %v2505 = vsub.s32 %v2502, %v2504
        %v2506 = vrot.slane %v2498, %v2505
        %v2508 = vunpack.c.l.s4 1934713408
        %v2509 = vunpack.c.0.s8 %v2508
        %v2510 = vlaneseq
        %v2511 = vshrl.u32 %v2510, 7
        %v2512 = vsub.s32 %v2509, %v2511
        %v2513 = vrot.slane %v2499, %v2512
        %v2514 = vcombine.low %v2449, %v2465
        %v2515 = vcombine.high %v2449, %v2465
        %v2517 = vunpack.c.l.s4 1934713408
        %v2518 = vunpack.c.0.s8 %v2517
        %v2519 = vlaneseq
        %v2520 = vshrl.u32 %v2519, 7
        %v2521 = vsub.s32 %v2518, %v2520
        %v2522 = vrot.slane %v2514, %v2521
        %v2524 = vunpack.c.l.s4 1934713408
        %v2525 = vunpack.c.0.s8 %v2524
        %v2526 = vlaneseq
        %v2527 = vshrl.u32 %v2526, 7
        %v2528 = vsub.s32 %v2525, %v2527
        %v2529 = vrot.slane %v2515, %v2528
        %v2530 = vcombine.low %v2474, %v2506
        %v2531 = vcombine.high %v2474, %v2506
        %v2532 = vcombine.low %v2481, %v2513
        %v2533 = vcombine.high %v2481, %v2513
        %v2534 = vcombine.low %v2490, %v2522
        %v2535 = vcombine.high %v2490, %v2522
        %v2536 = vcombine.low %v2497, %v2529
        %v2537 = vcombine.high %v2497, %v2529
        %2539 = vrot.lane.b32.xlu0 %v2395, 16
        %v2540 = vpop.permute.xlu0 %2539
        %2543 = vrot.lane.b32.xlu0 %v2396, 32
        %v2544 = vpop.permute.xlu0 %2543
        %2547 = vrot.lane.b32.xlu0 %v2397, 48
        %v2548 = vpop.permute.xlu0 %2547
        %2551 = vrot.lane.b32.xlu0 %v2398, 64
        %v2552 = vpop.permute.xlu0 %2551
        %2555 = vrot.lane.b32.xlu0 %v2399, 80
        %v2556 = vpop.permute.xlu0 %2555
        %2559 = vrot.lane.b32.xlu0 %v2400, 96
        %v2560 = vpop.permute.xlu0 %2559
        %2563 = vrot.lane.b32.xlu0 %v2401, 112
        %v2564 = vpop.permute.xlu0 %2563
        %2567 = vrot.lane.b32.xlu0 %v2531, 16
        %v2568 = vpop.permute.xlu0 %2567
        %2571 = vrot.lane.b32.xlu0 %v2532, 32
        %v2572 = vpop.permute.xlu0 %2571
        %2575 = vrot.lane.b32.xlu0 %v2533, 48
        %v2576 = vpop.permute.xlu0 %2575
        %2579 = vrot.lane.b32.xlu0 %v2534, 64
        %v2580 = vpop.permute.xlu0 %2579
        %2583 = vrot.lane.b32.xlu0 %v2535, 80
        %v2584 = vpop.permute.xlu0 %2583
        %2587 = vrot.lane.b32.xlu0 %v2536, 96
        %v2588 = vpop.permute.xlu0 %2587
        %2591 = vrot.lane.b32.xlu0 %v2537, 112
        %v2592 = vpop.permute.xlu0 %2591
        %v2594 = vsel %vm529, %v2394, %v2540
        %v2595 = vsel %vm531, %v2594, %v2544
        %v2596 = vsel %vm533, %v2595, %v2548
        %v2597 = vsel %vm535, %v2596, %v2552
        %v2598 = vsel %vm537, %v2597, %v2556
        %v2599 = vsel %vm539, %v2598, %v2560
        %v2600 = vsel %vm541, %v2599, %v2564
        %v2601 = vsel %vm529, %v2530, %v2568
        %v2602 = vsel %vm531, %v2601, %v2572
        %v2603 = vsel %vm533, %v2602, %v2576
        %v2604 = vsel %vm535, %v2603, %v2580
        %v2605 = vsel %vm537, %v2604, %v2584
        %v2606 = vsel %vm539, %v2605, %v2588
        %v2607 = vsel %vm541, %v2606, %v2592
        %2608 = vst [vmem:[#allocation2 + $0x50] sm:$0xff] %v2600
        %2609 = vst [vmem:[#allocation2 + $0x58] sm:$0xff] %v2607
        %s2610 = sadd.s32 %s183, 2
        %s2611 = scalar_lea.vmem %s177, %s2610
        %v2612 = vld [vmem:[%s2611] sm:$0xff]
        %v2613 = vld [vmem:[%s2611 + $0x8] sm:$0xff]
        %v2614 = vld [vmem:[%s2611 + $0x18] sm:$0xff]
        %v2615 = vld [vmem:[%s2611 + $0x20] sm:$0xff]
        %v2616 = vld [vmem:[%s2611 + $0x30] sm:$0xff]
        %v2617 = vld [vmem:[%s2611 + $0x38] sm:$0xff]
        %v2618 = vld [vmem:[%s2611 + $0x48] sm:$0xff]
        %v2619 = vld [vmem:[%s2611 + $0x50] sm:$0xff]
        %v2620 = vld [vmem:[%s2611 + $0x60] sm:$0xff]
        %v2621 = vld [vmem:[%s2611 + $0x68] sm:$0xff]
        %v2622 = vld [vmem:[%s2611 + $0x78] sm:$0xff]
        %v2623 = vld [vmem:[%s2611 + $0x80] sm:$0xff]
        %v2624 = vld [vmem:[%s2611 + $0x90] sm:$0xff]
        %v2625 = vld [vmem:[%s2611 + $0x98] sm:$0xff]
        %v2626 = vld [vmem:[%s2611 + $0xa8] sm:$0xff]
        %v2627 = vld [vmem:[%s2611 + $0xb0] sm:$0xff]
        %v2628 = vcombine.low %v2612, %v2616
        %v2629 = vcombine.high %v2612, %v2616
        %v2631 = vunpack.c.l.s4 1983009808
        %v2632 = vunpack.c.0.s8 %v2631
        %v2633 = vlaneseq
        %v2634 = vshrl.u32 %v2633, 7
        %v2635 = vsub.s32 %v2632, %v2634
        %v2636 = vrot.slane %v2628, %v2635
        %v2638 = vunpack.c.l.s4 1983009808
        %v2639 = vunpack.c.0.s8 %v2638
        %v2640 = vlaneseq
        %v2641 = vshrl.u32 %v2640, 7
        %v2642 = vsub.s32 %v2639, %v2641
        %v2643 = vrot.slane %v2629, %v2642
        %v2644 = vcombine.low %v2614, %v2618
        %v2645 = vcombine.high %v2614, %v2618
        %v2647 = vunpack.c.l.s4 1983009808
        %v2648 = vunpack.c.0.s8 %v2647
        %v2649 = vlaneseq
        %v2650 = vshrl.u32 %v2649, 7
        %v2651 = vsub.s32 %v2648, %v2650
        %v2652 = vrot.slane %v2644, %v2651
        %v2654 = vunpack.c.l.s4 1983009808
        %v2655 = vunpack.c.0.s8 %v2654
        %v2656 = vlaneseq
        %v2657 = vshrl.u32 %v2656, 7
        %v2658 = vsub.s32 %v2655, %v2657
        %v2659 = vrot.slane %v2645, %v2658
        %v2660 = vcombine.low %v2620, %v2624
        %v2661 = vcombine.high %v2620, %v2624
        %v2663 = vunpack.c.l.s4 1983009808
        %v2664 = vunpack.c.0.s8 %v2663
        %v2665 = vlaneseq
        %v2666 = vshrl.u32 %v2665, 7
        %v2667 = vsub.s32 %v2664, %v2666
        %v2668 = vrot.slane %v2660, %v2667
        %v2670 = vunpack.c.l.s4 1983009808
        %v2671 = vunpack.c.0.s8 %v2670
        %v2672 = vlaneseq
        %v2673 = vshrl.u32 %v2672, 7
        %v2674 = vsub.s32 %v2671, %v2673
        %v2675 = vrot.slane %v2661, %v2674
        %v2676 = vcombine.low %v2622, %v2626
        %v2677 = vcombine.high %v2622, %v2626
        %v2679 = vunpack.c.l.s4 1983009808
        %v2680 = vunpack.c.0.s8 %v2679
        %v2681 = vlaneseq
        %v2682 = vshrl.u32 %v2681, 7
        %v2683 = vsub.s32 %v2680, %v2682
        %v2684 = vrot.slane %v2676, %v2683
        %v2686 = vunpack.c.l.s4 1983009808
        %v2687 = vunpack.c.0.s8 %v2686
        %v2688 = vlaneseq
        %v2689 = vshrl.u32 %v2688, 7
        %v2690 = vsub.s32 %v2687, %v2689
        %v2691 = vrot.slane %v2677, %v2690
        %v2692 = vcombine.low %v2636, %v2652
        %v2693 = vcombine.high %v2636, %v2652
        %v2695 = vunpack.c.l.s4 1934713408
        %v2696 = vunpack.c.0.s8 %v2695
        %v2697 = vlaneseq
        %v2698 = vshrl.u32 %v2697, 7
        %v2699 = vsub.s32 %v2696, %v2698
        %v2700 = vrot.slane %v2692, %v2699
        %v2702 = vunpack.c.l.s4 1934713408
        %v2703 = vunpack.c.0.s8 %v2702
        %v2704 = vlaneseq
        %v2705 = vshrl.u32 %v2704, 7
        %v2706 = vsub.s32 %v2703, %v2705
        %v2707 = vrot.slane %v2693, %v2706
        %v2708 = vcombine.low %v2643, %v2659
        %v2709 = vcombine.high %v2643, %v2659
        %v2711 = vunpack.c.l.s4 1934713408
        %v2712 = vunpack.c.0.s8 %v2711
        %v2713 = vlaneseq
        %v2714 = vshrl.u32 %v2713, 7
        %v2715 = vsub.s32 %v2712, %v2714
        %v2716 = vrot.slane %v2708, %v2715
        %v2718 = vunpack.c.l.s4 1934713408
        %v2719 = vunpack.c.0.s8 %v2718
        %v2720 = vlaneseq
        %v2721 = vshrl.u32 %v2720, 7
        %v2722 = vsub.s32 %v2719, %v2721
        %v2723 = vrot.slane %v2709, %v2722
        %v2724 = vcombine.low %v2668, %v2684
        %v2725 = vcombine.high %v2668, %v2684
        %v2727 = vunpack.c.l.s4 1934713408
        %v2728 = vunpack.c.0.s8 %v2727
        %v2729 = vlaneseq
        %v2730 = vshrl.u32 %v2729, 7
        %v2731 = vsub.s32 %v2728, %v2730
        %v2732 = vrot.slane %v2724, %v2731
        %v2734 = vunpack.c.l.s4 1934713408
        %v2735 = vunpack.c.0.s8 %v2734
        %v2736 = vlaneseq
        %v2737 = vshrl.u32 %v2736, 7
        %v2738 = vsub.s32 %v2735, %v2737
        %v2739 = vrot.slane %v2725, %v2738
        %v2740 = vcombine.low %v2675, %v2691
        %v2741 = vcombine.high %v2675, %v2691
        %v2743 = vunpack.c.l.s4 1934713408
        %v2744 = vunpack.c.0.s8 %v2743
        %v2745 = vlaneseq
        %v2746 = vshrl.u32 %v2745, 7
        %v2747 = vsub.s32 %v2744, %v2746
        %v2748 = vrot.slane %v2740, %v2747
        %v2750 = vunpack.c.l.s4 1934713408
        %v2751 = vunpack.c.0.s8 %v2750
        %v2752 = vlaneseq
        %v2753 = vshrl.u32 %v2752, 7
        %v2754 = vsub.s32 %v2751, %v2753
        %v2755 = vrot.slane %v2741, %v2754
        %v2756 = vcombine.low %v2700, %v2732
        %v2757 = vcombine.high %v2700, %v2732
        %v2758 = vcombine.low %v2707, %v2739
        %v2759 = vcombine.high %v2707, %v2739
        %v2760 = vcombine.low %v2716, %v2748
        %v2761 = vcombine.high %v2716, %v2748
        %v2762 = vcombine.low %v2723, %v2755
        %v2763 = vcombine.high %v2723, %v2755
        %v2764 = vcombine.low %v2613, %v2617
        %v2765 = vcombine.high %v2613, %v2617
        %v2767 = vunpack.c.l.s4 1983009808
        %v2768 = vunpack.c.0.s8 %v2767
        %v2769 = vlaneseq
        %v2770 = vshrl.u32 %v2769, 7
        %v2771 = vsub.s32 %v2768, %v2770
        %v2772 = vrot.slane %v2764, %v2771
        %v2774 = vunpack.c.l.s4 1983009808
        %v2775 = vunpack.c.0.s8 %v2774
        %v2776 = vlaneseq
        %v2777 = vshrl.u32 %v2776, 7
        %v2778 = vsub.s32 %v2775, %v2777
        %v2779 = vrot.slane %v2765, %v2778
        %v2780 = vcombine.low %v2615, %v2619
        %v2781 = vcombine.high %v2615, %v2619
        %v2783 = vunpack.c.l.s4 1983009808
        %v2784 = vunpack.c.0.s8 %v2783
        %v2785 = vlaneseq
        %v2786 = vshrl.u32 %v2785, 7
        %v2787 = vsub.s32 %v2784, %v2786
        %v2788 = vrot.slane %v2780, %v2787
        %v2790 = vunpack.c.l.s4 1983009808
        %v2791 = vunpack.c.0.s8 %v2790
        %v2792 = vlaneseq
        %v2793 = vshrl.u32 %v2792, 7
        %v2794 = vsub.s32 %v2791, %v2793
        %v2795 = vrot.slane %v2781, %v2794
        %v2796 = vcombine.low %v2621, %v2625
        %v2797 = vcombine.high %v2621, %v2625
        %v2799 = vunpack.c.l.s4 1983009808
        %v2800 = vunpack.c.0.s8 %v2799
        %v2801 = vlaneseq
        %v2802 = vshrl.u32 %v2801, 7
        %v2803 = vsub.s32 %v2800, %v2802
        %v2804 = vrot.slane %v2796, %v2803
        %v2806 = vunpack.c.l.s4 1983009808
        %v2807 = vunpack.c.0.s8 %v2806
        %v2808 = vlaneseq
        %v2809 = vshrl.u32 %v2808, 7
        %v2810 = vsub.s32 %v2807, %v2809
        %v2811 = vrot.slane %v2797, %v2810
        %v2812 = vcombine.low %v2623, %v2627
        %v2813 = vcombine.high %v2623, %v2627
        %v2815 = vunpack.c.l.s4 1983009808
        %v2816 = vunpack.c.0.s8 %v2815
        %v2817 = vlaneseq
        %v2818 = vshrl.u32 %v2817, 7
        %v2819 = vsub.s32 %v2816, %v2818
        %v2820 = vrot.slane %v2812, %v2819
        %v2822 = vunpack.c.l.s4 1983009808
        %v2823 = vunpack.c.0.s8 %v2822
        %v2824 = vlaneseq
        %v2825 = vshrl.u32 %v2824, 7
        %v2826 = vsub.s32 %v2823, %v2825
        %v2827 = vrot.slane %v2813, %v2826
        %v2828 = vcombine.low %v2772, %v2788
        %v2829 = vcombine.high %v2772, %v2788
        %v2831 = vunpack.c.l.s4 1934713408
        %v2832 = vunpack.c.0.s8 %v2831
        %v2833 = vlaneseq
        %v2834 = vshrl.u32 %v2833, 7
        %v2835 = vsub.s32 %v2832, %v2834
        %v2836 = vrot.slane %v2828, %v2835
        %v2838 = vunpack.c.l.s4 1934713408
        %v2839 = vunpack.c.0.s8 %v2838
        %v2840 = vlaneseq
        %v2841 = vshrl.u32 %v2840, 7
        %v2842 = vsub.s32 %v2839, %v2841
        %v2843 = vrot.slane %v2829, %v2842
        %v2844 = vcombine.low %v2779, %v2795
        %v2845 = vcombine.high %v2779, %v2795
        %v2847 = vunpack.c.l.s4 1934713408
        %v2848 = vunpack.c.0.s8 %v2847
        %v2849 = vlaneseq
        %v2850 = vshrl.u32 %v2849, 7
        %v2851 = vsub.s32 %v2848, %v2850
        %v2852 = vrot.slane %v2844, %v2851
        %v2854 = vunpack.c.l.s4 1934713408
        %v2855 = vunpack.c.0.s8 %v2854
        %v2856 = vlaneseq
        %v2857 = vshrl.u32 %v2856, 7
        %v2858 = vsub.s32 %v2855, %v2857
        %v2859 = vrot.slane %v2845, %v2858
        %v2860 = vcombine.low %v2804, %v2820
        %v2861 = vcombine.high %v2804, %v2820
        %v2863 = vunpack.c.l.s4 1934713408
        %v2864 = vunpack.c.0.s8 %v2863
        %v2865 = vlaneseq
        %v2866 = vshrl.u32 %v2865, 7
        %v2867 = vsub.s32 %v2864, %v2866
        %v2868 = vrot.slane %v2860, %v2867
        %v2870 = vunpack.c.l.s4 1934713408
        %v2871 = vunpack.c.0.s8 %v2870
        %v2872 = vlaneseq
        %v2873 = vshrl.u32 %v2872, 7
        %v2874 = vsub.s32 %v2871, %v2873
        %v2875 = vrot.slane %v2861, %v2874
        %v2876 = vcombine.low %v2811, %v2827
        %v2877 = vcombine.high %v2811, %v2827
        %v2879 = vunpack.c.l.s4 1934713408
        %v2880 = vunpack.c.0.s8 %v2879
        %v2881 = vlaneseq
        %v2882 = vshrl.u32 %v2881, 7
        %v2883 = vsub.s32 %v2880, %v2882
        %v2884 = vrot.slane %v2876, %v2883
        %v2886 = vunpack.c.l.s4 1934713408
        %v2887 = vunpack.c.0.s8 %v2886
        %v2888 = vlaneseq
        %v2889 = vshrl.u32 %v2888, 7
        %v2890 = vsub.s32 %v2887, %v2889
        %v2891 = vrot.slane %v2877, %v2890
        %v2892 = vcombine.low %v2836, %v2868
        %v2893 = vcombine.high %v2836, %v2868
        %v2894 = vcombine.low %v2843, %v2875
        %v2895 = vcombine.high %v2843, %v2875
        %v2896 = vcombine.low %v2852, %v2884
        %v2897 = vcombine.high %v2852, %v2884
        %v2898 = vcombine.low %v2859, %v2891
        %v2899 = vcombine.high %v2859, %v2891
        %2901 = vrot.lane.b32.xlu0 %v2757, 16
        %v2902 = vpop.permute.xlu0 %2901
        %2905 = vrot.lane.b32.xlu0 %v2758, 32
        %v2906 = vpop.permute.xlu0 %2905
        %2909 = vrot.lane.b32.xlu0 %v2759, 48
        %v2910 = vpop.permute.xlu0 %2909
        %2913 = vrot.lane.b32.xlu0 %v2760, 64
        %v2914 = vpop.permute.xlu0 %2913
        %2917 = vrot.lane.b32.xlu0 %v2761, 80
        %v2918 = vpop.permute.xlu0 %2917
        %2921 = vrot.lane.b32.xlu0 %v2762, 96
        %v2922 = vpop.permute.xlu0 %2921
        %2925 = vrot.lane.b32.xlu0 %v2763, 112
        %v2926 = vpop.permute.xlu0 %2925
        %2929 = vrot.lane.b32.xlu0 %v2893, 16
        %v2930 = vpop.permute.xlu0 %2929
        %2933 = vrot.lane.b32.xlu0 %v2894, 32
        %v2934 = vpop.permute.xlu0 %2933
        %2937 = vrot.lane.b32.xlu0 %v2895, 48
        %v2938 = vpop.permute.xlu0 %2937
        %2941 = vrot.lane.b32.xlu0 %v2896, 64
        %v2942 = vpop.permute.xlu0 %2941
        %2945 = vrot.lane.b32.xlu0 %v2897, 80
        %v2946 = vpop.permute.xlu0 %2945
        %2949 = vrot.lane.b32.xlu0 %v2898, 96
        %v2950 = vpop.permute.xlu0 %2949
        %2953 = vrot.lane.b32.xlu0 %v2899, 112
        %v2954 = vpop.permute.xlu0 %2953
        %v2956 = vsel %vm529, %v2756, %v2902
        %v2957 = vsel %vm531, %v2956, %v2906
        %v2958 = vsel %vm533, %v2957, %v2910
        %v2959 = vsel %vm535, %v2958, %v2914
        %v2960 = vsel %vm537, %v2959, %v2918
        %v2961 = vsel %vm539, %v2960, %v2922
        %v2962 = vsel %vm541, %v2961, %v2926
        %v2963 = vsel %vm529, %v2892, %v2930
        %v2964 = vsel %vm531, %v2963, %v2934
        %v2965 = vsel %vm533, %v2964, %v2938
        %v2966 = vsel %vm535, %v2965, %v2942
        %v2967 = vsel %vm537, %v2966, %v2946
        %v2968 = vsel %vm539, %v2967, %v2950
        %v2969 = vsel %vm541, %v2968, %v2954
        %2970 = vst [vmem:[#allocation2 + $0x60] sm:$0xff] %v2962
        %2971 = vst [vmem:[#allocation2 + $0x68] sm:$0xff] %v2969
        %v2972 = vld [vmem:[%s2611] sm:$0xff]
        %v2973 = vld [vmem:[%s2611 + $0x8] sm:$0xff]
        %v2974 = vld [vmem:[%s2611 + $0x18] sm:$0xff]
        %v2975 = vld [vmem:[%s2611 + $0x20] sm:$0xff]
        %v2976 = vld [vmem:[%s2611 + $0x30] sm:$0xff]
        %v2977 = vld [vmem:[%s2611 + $0x38] sm:$0xff]
        %v2978 = vld [vmem:[%s2611 + $0x48] sm:$0xff]
        %v2979 = vld [vmem:[%s2611 + $0x50] sm:$0xff]
        %v2980 = vld [vmem:[%s2611 + $0x60] sm:$0xff]
        %v2981 = vld [vmem:[%s2611 + $0x68] sm:$0xff]
        %v2982 = vld [vmem:[%s2611 + $0x78] sm:$0xff]
        %v2983 = vld [vmem:[%s2611 + $0x80] sm:$0xff]
        %v2984 = vld [vmem:[%s2611 + $0x90] sm:$0xff]
        %v2985 = vld [vmem:[%s2611 + $0x98] sm:$0xff]
        %v2986 = vld [vmem:[%s2611 + $0xa8] sm:$0xff]
        %v2987 = vld [vmem:[%s2611 + $0xb0] sm:$0xff]
        %3004 = vrot.lane.b32.xlu0 %v2972, 127
        %v3005 = vpop.permute.xlu0 %3004
        %3006 = vrot.lane.b32.xlu0 %v2973, 127
        %v3007 = vpop.permute.xlu0 %3006
        %3008 = vrot.lane.b32.xlu0 %v2974, 127
        %v3009 = vpop.permute.xlu0 %3008
        %3010 = vrot.lane.b32.xlu0 %v2975, 127
        %v3011 = vpop.permute.xlu0 %3010
        %3012 = vrot.lane.b32.xlu0 %v2976, 127
        %v3013 = vpop.permute.xlu0 %3012
        %3014 = vrot.lane.b32.xlu0 %v2977, 127
        %v3015 = vpop.permute.xlu0 %3014
        %3016 = vrot.lane.b32.xlu0 %v2978, 127
        %v3017 = vpop.permute.xlu0 %3016
        %3018 = vrot.lane.b32.xlu0 %v2979, 127
        %v3019 = vpop.permute.xlu0 %3018
        %3020 = vrot.lane.b32.xlu0 %v2980, 127
        %v3021 = vpop.permute.xlu0 %3020
        %3022 = vrot.lane.b32.xlu0 %v2981, 127
        %v3023 = vpop.permute.xlu0 %3022
        %3024 = vrot.lane.b32.xlu0 %v2982, 127
        %v3025 = vpop.permute.xlu0 %3024
        %3026 = vrot.lane.b32.xlu0 %v2983, 127
        %v3027 = vpop.permute.xlu0 %3026
        %3028 = vrot.lane.b32.xlu0 %v2984, 127
        %v3029 = vpop.permute.xlu0 %3028
        %3030 = vrot.lane.b32.xlu0 %v2985, 127
        %v3031 = vpop.permute.xlu0 %3030
        %3032 = vrot.lane.b32.xlu0 %v2986, 127
        %v3033 = vpop.permute.xlu0 %3032
        %3034 = vrot.lane.b32.xlu0 %v2987, 127
        %v3035 = vpop.permute.xlu0 %3034
        %v3052 = vcombine.low %v3005, %v3013
        %v3053 = vcombine.high %v3005, %v3013
        %v3055 = vunpack.c.l.s4 1983009808
        %v3056 = vunpack.c.0.s8 %v3055
        %v3057 = vlaneseq
        %v3058 = vshrl.u32 %v3057, 7
        %v3059 = vsub.s32 %v3056, %v3058
        %v3060 = vrot.slane %v3052, %v3059
        %v3062 = vunpack.c.l.s4 1983009808
        %v3063 = vunpack.c.0.s8 %v3062
        %v3064 = vlaneseq
        %v3065 = vshrl.u32 %v3064, 7
        %v3066 = vsub.s32 %v3063, %v3065
        %v3067 = vrot.slane %v3053, %v3066
        %v3068 = vcombine.low %v3009, %v3017
        %v3069 = vcombine.high %v3009, %v3017
        %v3071 = vunpack.c.l.s4 1983009808
        %v3072 = vunpack.c.0.s8 %v3071
        %v3073 = vlaneseq
        %v3074 = vshrl.u32 %v3073, 7
        %v3075 = vsub.s32 %v3072, %v3074
        %v3076 = vrot.slane %v3068, %v3075
        %v3078 = vunpack.c.l.s4 1983009808
        %v3079 = vunpack.c.0.s8 %v3078
        %v3080 = vlaneseq
        %v3081 = vshrl.u32 %v3080, 7
        %v3082 = vsub.s32 %v3079, %v3081
        %v3083 = vrot.slane %v3069, %v3082
        %v3084 = vcombine.low %v3021, %v3029
        %v3085 = vcombine.high %v3021, %v3029
        %v3087 = vunpack.c.l.s4 1983009808
        %v3088 = vunpack.c.0.s8 %v3087
        %v3089 = vlaneseq
        %v3090 = vshrl.u32 %v3089, 7
        %v3091 = vsub.s32 %v3088, %v3090
        %v3092 = vrot.slane %v3084, %v3091
        %v3094 = vunpack.c.l.s4 1983009808
        %v3095 = vunpack.c.0.s8 %v3094
        %v3096 = vlaneseq
        %v3097 = vshrl.u32 %v3096, 7
        %v3098 = vsub.s32 %v3095, %v3097
        %v3099 = vrot.slane %v3085, %v3098
        %v3100 = vcombine.low %v3025, %v3033
        %v3101 = vcombine.high %v3025, %v3033
        %v3103 = vunpack.c.l.s4 1983009808
        %v3104 = vunpack.c.0.s8 %v3103
        %v3105 = vlaneseq
        %v3106 = vshrl.u32 %v3105, 7
        %v3107 = vsub.s32 %v3104, %v3106
        %v3108 = vrot.slane %v3100, %v3107
        %v3110 = vunpack.c.l.s4 1983009808
        %v3111 = vunpack.c.0.s8 %v3110
        %v3112 = vlaneseq
        %v3113 = vshrl.u32 %v3112, 7
        %v3114 = vsub.s32 %v3111, %v3113
        %v3115 = vrot.slane %v3101, %v3114
        %v3116 = vcombine.low %v3060, %v3076
        %v3117 = vcombine.high %v3060, %v3076
        %v3119 = vunpack.c.l.s4 1934713408
        %v3120 = vunpack.c.0.s8 %v3119
        %v3121 = vlaneseq
        %v3122 = vshrl.u32 %v3121, 7
        %v3123 = vsub.s32 %v3120, %v3122
        %v3124 = vrot.slane %v3116, %v3123
        %v3126 = vunpack.c.l.s4 1934713408
        %v3127 = vunpack.c.0.s8 %v3126
        %v3128 = vlaneseq
        %v3129 = vshrl.u32 %v3128, 7
        %v3130 = vsub.s32 %v3127, %v3129
        %v3131 = vrot.slane %v3117, %v3130
        %v3132 = vcombine.low %v3067, %v3083
        %v3133 = vcombine.high %v3067, %v3083
        %v3135 = vunpack.c.l.s4 1934713408
        %v3136 = vunpack.c.0.s8 %v3135
        %v3137 = vlaneseq
        %v3138 = vshrl.u32 %v3137, 7
        %v3139 = vsub.s32 %v3136, %v3138
        %v3140 = vrot.slane %v3132, %v3139
        %v3142 = vunpack.c.l.s4 1934713408
        %v3143 = vunpack.c.0.s8 %v3142
        %v3144 = vlaneseq
        %v3145 = vshrl.u32 %v3144, 7
        %v3146 = vsub.s32 %v3143, %v3145
        %v3147 = vrot.slane %v3133, %v3146
        %v3148 = vcombine.low %v3092, %v3108
        %v3149 = vcombine.high %v3092, %v3108
        %v3151 = vunpack.c.l.s4 1934713408
        %v3152 = vunpack.c.0.s8 %v3151
        %v3153 = vlaneseq
        %v3154 = vshrl.u32 %v3153, 7
        %v3155 = vsub.s32 %v3152, %v3154
        %v3156 = vrot.slane %v3148, %v3155
        %v3158 = vunpack.c.l.s4 1934713408
        %v3159 = vunpack.c.0.s8 %v3158
        %v3160 = vlaneseq
        %v3161 = vshrl.u32 %v3160, 7
        %v3162 = vsub.s32 %v3159, %v3161
        %v3163 = vrot.slane %v3149, %v3162
        %v3164 = vcombine.low %v3099, %v3115
        %v3165 = vcombine.high %v3099, %v3115
        %v3167 = vunpack.c.l.s4 1934713408
        %v3168 = vunpack.c.0.s8 %v3167
        %v3169 = vlaneseq
        %v3170 = vshrl.u32 %v3169, 7
        %v3171 = vsub.s32 %v3168, %v3170
        %v3172 = vrot.slane %v3164, %v3171
        %v3174 = vunpack.c.l.s4 1934713408
        %v3175 = vunpack.c.0.s8 %v3174
        %v3176 = vlaneseq
        %v3177 = vshrl.u32 %v3176, 7
        %v3178 = vsub.s32 %v3175, %v3177
        %v3179 = vrot.slane %v3165, %v3178
        %v3180 = vcombine.low %v3124, %v3156
        %v3181 = vcombine.high %v3124, %v3156
        %v3182 = vcombine.low %v3131, %v3163
        %v3183 = vcombine.high %v3131, %v3163
        %v3184 = vcombine.low %v3140, %v3172
        %v3185 = vcombine.high %v3140, %v3172
        %v3186 = vcombine.low %v3147, %v3179
        %v3187 = vcombine.high %v3147, %v3179
        %v3188 = vcombine.low %v3007, %v3015
        %v3189 = vcombine.high %v3007, %v3015
        %v3191 = vunpack.c.l.s4 1983009808
        %v3192 = vunpack.c.0.s8 %v3191
        %v3193 = vlaneseq
        %v3194 = vshrl.u32 %v3193, 7
        %v3195 = vsub.s32 %v3192, %v3194
        %v3196 = vrot.slane %v3188, %v3195
        %v3198 = vunpack.c.l.s4 1983009808
        %v3199 = vunpack.c.0.s8 %v3198
        %v3200 = vlaneseq
        %v3201 = vshrl.u32 %v3200, 7
        %v3202 = vsub.s32 %v3199, %v3201
        %v3203 = vrot.slane %v3189, %v3202
        %v3204 = vcombine.low %v3011, %v3019
        %v3205 = vcombine.high %v3011, %v3019
        %v3207 = vunpack.c.l.s4 1983009808
        %v3208 = vunpack.c.0.s8 %v3207
        %v3209 = vlaneseq
        %v3210 = vshrl.u32 %v3209, 7
        %v3211 = vsub.s32 %v3208, %v3210
        %v3212 = vrot.slane %v3204, %v3211
        %v3214 = vunpack.c.l.s4 1983009808
        %v3215 = vunpack.c.0.s8 %v3214
        %v3216 = vlaneseq
        %v3217 = vshrl.u32 %v3216, 7
        %v3218 = vsub.s32 %v3215, %v3217
        %v3219 = vrot.slane %v3205, %v3218
        %v3220 = vcombine.low %v3023, %v3031
        %v3221 = vcombine.high %v3023, %v3031
        %v3223 = vunpack.c.l.s4 1983009808
        %v3224 = vunpack.c.0.s8 %v3223
        %v3225 = vlaneseq
        %v3226 = vshrl.u32 %v3225, 7
        %v3227 = vsub.s32 %v3224, %v3226
        %v3228 = vrot.slane %v3220, %v3227
        %v3230 = vunpack.c.l.s4 1983009808
        %v3231 = vunpack.c.0.s8 %v3230
        %v3232 = vlaneseq
        %v3233 = vshrl.u32 %v3232, 7
        %v3234 = vsub.s32 %v3231, %v3233
        %v3235 = vrot.slane %v3221, %v3234
        %v3236 = vcombine.low %v3027, %v3035
        %v3237 = vcombine.high %v3027, %v3035
        %v3239 = vunpack.c.l.s4 1983009808
        %v3240 = vunpack.c.0.s8 %v3239
        %v3241 = vlaneseq
        %v3242 = vshrl.u32 %v3241, 7
        %v3243 = vsub.s32 %v3240, %v3242
        %v3244 = vrot.slane %v3236, %v3243
        %v3246 = vunpack.c.l.s4 1983009808
        %v3247 = vunpack.c.0.s8 %v3246
        %v3248 = vlaneseq
        %v3249 = vshrl.u32 %v3248, 7
        %v3250 = vsub.s32 %v3247, %v3249
        %v3251 = vrot.slane %v3237, %v3250
        %v3252 = vcombine.low %v3196, %v3212
        %v3253 = vcombine.high %v3196, %v3212
        %v3255 = vunpack.c.l.s4 1934713408
        %v3256 = vunpack.c.0.s8 %v3255
        %v3257 = vlaneseq
        %v3258 = vshrl.u32 %v3257, 7
        %v3259 = vsub.s32 %v3256, %v3258
        %v3260 = vrot.slane %v3252, %v3259
        %v3262 = vunpack.c.l.s4 1934713408
        %v3263 = vunpack.c.0.s8 %v3262
        %v3264 = vlaneseq
        %v3265 = vshrl.u32 %v3264, 7
        %v3266 = vsub.s32 %v3263, %v3265
        %v3267 = vrot.slane %v3253, %v3266
        %v3268 = vcombine.low %v3203, %v3219
        %v3269 = vcombine.high %v3203, %v3219
        %v3271 = vunpack.c.l.s4 1934713408
        %v3272 = vunpack.c.0.s8 %v3271
        %v3273 = vlaneseq
        %v3274 = vshrl.u32 %v3273, 7
        %v3275 = vsub.s32 %v3272, %v3274
        %v3276 = vrot.slane %v3268, %v3275
        %v3278 = vunpack.c.l.s4 1934713408
        %v3279 = vunpack.c.0.s8 %v3278
        %v3280 = vlaneseq
        %v3281 = vshrl.u32 %v3280, 7
        %v3282 = vsub.s32 %v3279, %v3281
        %v3283 = vrot.slane %v3269, %v3282
        %v3284 = vcombine.low %v3228, %v3244
        %v3285 = vcombine.high %v3228, %v3244
        %v3287 = vunpack.c.l.s4 1934713408
        %v3288 = vunpack.c.0.s8 %v3287
        %v3289 = vlaneseq
        %v3290 = vshrl.u32 %v3289, 7
        %v3291 = vsub.s32 %v3288, %v3290
        %v3292 = vrot.slane %v3284, %v3291
        %v3294 = vunpack.c.l.s4 1934713408
        %v3295 = vunpack.c.0.s8 %v3294
        %v3296 = vlaneseq
        %v3297 = vshrl.u32 %v3296, 7
        %v3298 = vsub.s32 %v3295, %v3297
        %v3299 = vrot.slane %v3285, %v3298
        %v3300 = vcombine.low %v3235, %v3251
        %v3301 = vcombine.high %v3235, %v3251
        %v3303 = vunpack.c.l.s4 1934713408
        %v3304 = vunpack.c.0.s8 %v3303
        %v3305 = vlaneseq
        %v3306 = vshrl.u32 %v3305, 7
        %v3307 = vsub.s32 %v3304, %v3306
        %v3308 = vrot.slane %v3300, %v3307
        %v3310 = vunpack.c.l.s4 1934713408
        %v3311 = vunpack.c.0.s8 %v3310
        %v3312 = vlaneseq
        %v3313 = vshrl.u32 %v3312, 7
        %v3314 = vsub.s32 %v3311, %v3313
        %v3315 = vrot.slane %v3301, %v3314
        %v3316 = vcombine.low %v3260, %v3292
        %v3317 = vcombine.high %v3260, %v3292
        %v3318 = vcombine.low %v3267, %v3299
        %v3319 = vcombine.high %v3267, %v3299
        %v3320 = vcombine.low %v3276, %v3308
        %v3321 = vcombine.high %v3276, %v3308
        %v3322 = vcombine.low %v3283, %v3315
        %v3323 = vcombine.high %v3283, %v3315
        %3325 = vrot.lane.b32.xlu0 %v3181, 16
        %v3326 = vpop.permute.xlu0 %3325
        %3329 = vrot.lane.b32.xlu0 %v3182, 32
        %v3330 = vpop.permute.xlu0 %3329
        %3333 = vrot.lane.b32.xlu0 %v3183, 48
        %v3334 = vpop.permute.xlu0 %3333
        %3337 = vrot.lane.b32.xlu0 %v3184, 64
        %v3338 = vpop.permute.xlu0 %3337
        %3341 = vrot.lane.b32.xlu0 %v3185, 80
        %v3342 = vpop.permute.xlu0 %3341
        %3345 = vrot.lane.b32.xlu0 %v3186, 96
        %v3346 = vpop.permute.xlu0 %3345
        %3349 = vrot.lane.b32.xlu0 %v3187, 112
        %v3350 = vpop.permute.xlu0 %3349
        %3353 = vrot.lane.b32.xlu0 %v3317, 16
        %v3354 = vpop.permute.xlu0 %3353
        %3357 = vrot.lane.b32.xlu0 %v3318, 32
        %v3358 = vpop.permute.xlu0 %3357
        %3361 = vrot.lane.b32.xlu0 %v3319, 48
        %v3362 = vpop.permute.xlu0 %3361
        %3365 = vrot.lane.b32.xlu0 %v3320, 64
        %v3366 = vpop.permute.xlu0 %3365
        %3369 = vrot.lane.b32.xlu0 %v3321, 80
        %v3370 = vpop.permute.xlu0 %3369
        %3373 = vrot.lane.b32.xlu0 %v3322, 96
        %v3374 = vpop.permute.xlu0 %3373
        %3377 = vrot.lane.b32.xlu0 %v3323, 112
        %v3378 = vpop.permute.xlu0 %3377
        %v3380 = vsel %vm529, %v3180, %v3326
        %v3381 = vsel %vm531, %v3380, %v3330
        %v3382 = vsel %vm533, %v3381, %v3334
        %v3383 = vsel %vm535, %v3382, %v3338
        %v3384 = vsel %vm537, %v3383, %v3342
        %v3385 = vsel %vm539, %v3384, %v3346
        %v3386 = vsel %vm541, %v3385, %v3350
        %v3387 = vsel %vm529, %v3316, %v3354
        %v3388 = vsel %vm531, %v3387, %v3358
        %v3389 = vsel %vm533, %v3388, %v3362
        %v3390 = vsel %vm535, %v3389, %v3366
        %v3391 = vsel %vm537, %v3390, %v3370
        %v3392 = vsel %vm539, %v3391, %v3374
        %v3393 = vsel %vm541, %v3392, %v3378
        %3394 = vst [vmem:[#allocation2 + $0x70] sm:$0xff] %v3386
        %3395 = vst [vmem:[#allocation2 + $0x78] sm:$0xff] %v3393
        %v3396 = vld [vmem:[%s2611] sm:$0xff]
        %v3397 = vld [vmem:[%s2611 + $0x8] sm:$0xff]
        %v3398 = vld [vmem:[%s2611 + $0x18] sm:$0xff]
        %v3399 = vld [vmem:[%s2611 + $0x20] sm:$0xff]
        %v3400 = vld [vmem:[%s2611 + $0x30] sm:$0xff]
        %v3401 = vld [vmem:[%s2611 + $0x38] sm:$0xff]
        %v3402 = vld [vmem:[%s2611 + $0x48] sm:$0xff]
        %v3403 = vld [vmem:[%s2611 + $0x50] sm:$0xff]
        %v3404 = vld [vmem:[%s2611 + $0x60] sm:$0xff]
        %v3405 = vld [vmem:[%s2611 + $0x68] sm:$0xff]
        %v3406 = vld [vmem:[%s2611 + $0x78] sm:$0xff]
        %v3407 = vld [vmem:[%s2611 + $0x80] sm:$0xff]
        %v3408 = vld [vmem:[%s2611 + $0x90] sm:$0xff]
        %v3409 = vld [vmem:[%s2611 + $0x98] sm:$0xff]
        %v3410 = vld [vmem:[%s2611 + $0xa8] sm:$0xff]
        %v3411 = vld [vmem:[%s2611 + $0xb0] sm:$0xff]
        %3428 = vrot.lane.b32.xlu0 %v3396, 126
        %v3429 = vpop.permute.xlu0 %3428
        %3430 = vrot.lane.b32.xlu0 %v3397, 126
        %v3431 = vpop.permute.xlu0 %3430
        %3432 = vrot.lane.b32.xlu0 %v3398, 126
        %v3433 = vpop.permute.xlu0 %3432
        %3434 = vrot.lane.b32.xlu0 %v3399, 126
        %v3435 = vpop.permute.xlu0 %3434
        %3436 = vrot.lane.b32.xlu0 %v3400, 126
        %v3437 = vpop.permute.xlu0 %3436
        %3438 = vrot.lane.b32.xlu0 %v3401, 126
        %v3439 = vpop.permute.xlu0 %3438
        %3440 = vrot.lane.b32.xlu0 %v3402, 126
        %v3441 = vpop.permute.xlu0 %3440
        %3442 = vrot.lane.b32.xlu0 %v3403, 126
        %v3443 = vpop.permute.xlu0 %3442
        %3444 = vrot.lane.b32.xlu0 %v3404, 126
        %v3445 = vpop.permute.xlu0 %3444
        %3446 = vrot.lane.b32.xlu0 %v3405, 126
        %v3447 = vpop.permute.xlu0 %3446
        %3448 = vrot.lane.b32.xlu0 %v3406, 126
        %v3449 = vpop.permute.xlu0 %3448
        %3450 = vrot.lane.b32.xlu0 %v3407, 126
        %v3451 = vpop.permute.xlu0 %3450
        %3452 = vrot.lane.b32.xlu0 %v3408, 126
        %v3453 = vpop.permute.xlu0 %3452
        %3454 = vrot.lane.b32.xlu0 %v3409, 126
        %v3455 = vpop.permute.xlu0 %3454
        %3456 = vrot.lane.b32.xlu0 %v3410, 126
        %v3457 = vpop.permute.xlu0 %3456
        %3458 = vrot.lane.b32.xlu0 %v3411, 126
        %v3459 = vpop.permute.xlu0 %3458
        %v3476 = vcombine.low %v3429, %v3437
        %v3477 = vcombine.high %v3429, %v3437
        %v3479 = vunpack.c.l.s4 1983009808
        %v3480 = vunpack.c.0.s8 %v3479
        %v3481 = vlaneseq
        %v3482 = vshrl.u32 %v3481, 7
        %v3483 = vsub.s32 %v3480, %v3482
        %v3484 = vrot.slane %v3476, %v3483
        %v3486 = vunpack.c.l.s4 1983009808
        %v3487 = vunpack.c.0.s8 %v3486
        %v3488 = vlaneseq
        %v3489 = vshrl.u32 %v3488, 7
        %v3490 = vsub.s32 %v3487, %v3489
        %v3491 = vrot.slane %v3477, %v3490
        %v3492 = vcombine.low %v3433, %v3441
        %v3493 = vcombine.high %v3433, %v3441
        %v3495 = vunpack.c.l.s4 1983009808
        %v3496 = vunpack.c.0.s8 %v3495
        %v3497 = vlaneseq
        %v3498 = vshrl.u32 %v3497, 7
        %v3499 = vsub.s32 %v3496, %v3498
        %v3500 = vrot.slane %v3492, %v3499
        %v3502 = vunpack.c.l.s4 1983009808
        %v3503 = vunpack.c.0.s8 %v3502
        %v3504 = vlaneseq
        %v3505 = vshrl.u32 %v3504, 7
        %v3506 = vsub.s32 %v3503, %v3505
        %v3507 = vrot.slane %v3493, %v3506
        %v3508 = vcombine.low %v3445, %v3453
        %v3509 = vcombine.high %v3445, %v3453
        %v3511 = vunpack.c.l.s4 1983009808
        %v3512 = vunpack.c.0.s8 %v3511
        %v3513 = vlaneseq
        %v3514 = vshrl.u32 %v3513, 7
        %v3515 = vsub.s32 %v3512, %v3514
        %v3516 = vrot.slane %v3508, %v3515
        %v3518 = vunpack.c.l.s4 1983009808
        %v3519 = vunpack.c.0.s8 %v3518
        %v3520 = vlaneseq
        %v3521 = vshrl.u32 %v3520, 7
        %v3522 = vsub.s32 %v3519, %v3521
        %v3523 = vrot.slane %v3509, %v3522
        %v3524 = vcombine.low %v3449, %v3457
        %v3525 = vcombine.high %v3449, %v3457
        %v3527 = vunpack.c.l.s4 1983009808
        %v3528 = vunpack.c.0.s8 %v3527
        %v3529 = vlaneseq
        %v3530 = vshrl.u32 %v3529, 7
        %v3531 = vsub.s32 %v3528, %v3530
        %v3532 = vrot.slane %v3524, %v3531
        %v3534 = vunpack.c.l.s4 1983009808
        %v3535 = vunpack.c.0.s8 %v3534
        %v3536 = vlaneseq
        %v3537 = vshrl.u32 %v3536, 7
        %v3538 = vsub.s32 %v3535, %v3537
        %v3539 = vrot.slane %v3525, %v3538
        %v3540 = vcombine.low %v3484, %v3500
        %v3541 = vcombine.high %v3484, %v3500
        %v3543 = vunpack.c.l.s4 1934713408
        %v3544 = vunpack.c.0.s8 %v3543
        %v3545 = vlaneseq
        %v3546 = vshrl.u32 %v3545, 7
        %v3547 = vsub.s32 %v3544, %v3546
        %v3548 = vrot.slane %v3540, %v3547
        %v3550 = vunpack.c.l.s4 1934713408
        %v3551 = vunpack.c.0.s8 %v3550
        %v3552 = vlaneseq
        %v3553 = vshrl.u32 %v3552, 7
        %v3554 = vsub.s32 %v3551, %v3553
        %v3555 = vrot.slane %v3541, %v3554
        %v3556 = vcombine.low %v3491, %v3507
        %v3557 = vcombine.high %v3491, %v3507
        %v3559 = vunpack.c.l.s4 1934713408
        %v3560 = vunpack.c.0.s8 %v3559
        %v3561 = vlaneseq
        %v3562 = vshrl.u32 %v3561, 7
        %v3563 = vsub.s32 %v3560, %v3562
        %v3564 = vrot.slane %v3556, %v3563
        %v3566 = vunpack.c.l.s4 1934713408
        %v3567 = vunpack.c.0.s8 %v3566
        %v3568 = vlaneseq
        %v3569 = vshrl.u32 %v3568, 7
        %v3570 = vsub.s32 %v3567, %v3569
        %v3571 = vrot.slane %v3557, %v3570
        %v3572 = vcombine.low %v3516, %v3532
        %v3573 = vcombine.high %v3516, %v3532
        %v3575 = vunpack.c.l.s4 1934713408
        %v3576 = vunpack.c.0.s8 %v3575
        %v3577 = vlaneseq
        %v3578 = vshrl.u32 %v3577, 7
        %v3579 = vsub.s32 %v3576, %v3578
        %v3580 = vrot.slane %v3572, %v3579
        %v3582 = vunpack.c.l.s4 1934713408
        %v3583 = vunpack.c.0.s8 %v3582
        %v3584 = vlaneseq
        %v3585 = vshrl.u32 %v3584, 7
        %v3586 = vsub.s32 %v3583, %v3585
        %v3587 = vrot.slane %v3573, %v3586
        %v3588 = vcombine.low %v3523, %v3539
        %v3589 = vcombine.high %v3523, %v3539
        %v3591 = vunpack.c.l.s4 1934713408
        %v3592 = vunpack.c.0.s8 %v3591
        %v3593 = vlaneseq
        %v3594 = vshrl.u32 %v3593, 7
        %v3595 = vsub.s32 %v3592, %v3594
        %v3596 = vrot.slane %v3588, %v3595
        %v3598 = vunpack.c.l.s4 1934713408
        %v3599 = vunpack.c.0.s8 %v3598
        %v3600 = vlaneseq
        %v3601 = vshrl.u32 %v3600, 7
        %v3602 = vsub.s32 %v3599, %v3601
        %v3603 = vrot.slane %v3589, %v3602
        %v3604 = vcombine.low %v3548, %v3580
        %v3605 = vcombine.high %v3548, %v3580
        %v3606 = vcombine.low %v3555, %v3587
        %v3607 = vcombine.high %v3555, %v3587
        %v3608 = vcombine.low %v3564, %v3596
        %v3609 = vcombine.high %v3564, %v3596
        %v3610 = vcombine.low %v3571, %v3603
        %v3611 = vcombine.high %v3571, %v3603
        %v3612 = vcombine.low %v3431, %v3439
        %v3613 = vcombine.high %v3431, %v3439
        %v3615 = vunpack.c.l.s4 1983009808
        %v3616 = vunpack.c.0.s8 %v3615
        %v3617 = vlaneseq
        %v3618 = vshrl.u32 %v3617, 7
        %v3619 = vsub.s32 %v3616, %v3618
        %v3620 = vrot.slane %v3612, %v3619
        %v3622 = vunpack.c.l.s4 1983009808
        %v3623 = vunpack.c.0.s8 %v3622
        %v3624 = vlaneseq
        %v3625 = vshrl.u32 %v3624, 7
        %v3626 = vsub.s32 %v3623, %v3625
        %v3627 = vrot.slane %v3613, %v3626
        %v3628 = vcombine.low %v3435, %v3443
        %v3629 = vcombine.high %v3435, %v3443
        %v3631 = vunpack.c.l.s4 1983009808
        %v3632 = vunpack.c.0.s8 %v3631
        %v3633 = vlaneseq
        %v3634 = vshrl.u32 %v3633, 7
        %v3635 = vsub.s32 %v3632, %v3634
        %v3636 = vrot.slane %v3628, %v3635
        %v3638 = vunpack.c.l.s4 1983009808
        %v3639 = vunpack.c.0.s8 %v3638
        %v3640 = vlaneseq
        %v3641 = vshrl.u32 %v3640, 7
        %v3642 = vsub.s32 %v3639, %v3641
        %v3643 = vrot.slane %v3629, %v3642
        %v3644 = vcombine.low %v3447, %v3455
        %v3645 = vcombine.high %v3447, %v3455
        %v3647 = vunpack.c.l.s4 1983009808
        %v3648 = vunpack.c.0.s8 %v3647
        %v3649 = vlaneseq
        %v3650 = vshrl.u32 %v3649, 7
        %v3651 = vsub.s32 %v3648, %v3650
        %v3652 = vrot.slane %v3644, %v3651
        %v3654 = vunpack.c.l.s4 1983009808
        %v3655 = vunpack.c.0.s8 %v3654
        %v3656 = vlaneseq
        %v3657 = vshrl.u32 %v3656, 7
        %v3658 = vsub.s32 %v3655, %v3657
        %v3659 = vrot.slane %v3645, %v3658
        %v3660 = vcombine.low %v3451, %v3459
        %v3661 = vcombine.high %v3451, %v3459
        %v3663 = vunpack.c.l.s4 1983009808
        %v3664 = vunpack.c.0.s8 %v3663
        %v3665 = vlaneseq
        %v3666 = vshrl.u32 %v3665, 7
        %v3667 = vsub.s32 %v3664, %v3666
        %v3668 = vrot.slane %v3660, %v3667
        %v3670 = vunpack.c.l.s4 1983009808
        %v3671 = vunpack.c.0.s8 %v3670
        %v3672 = vlaneseq
        %v3673 = vshrl.u32 %v3672, 7
        %v3674 = vsub.s32 %v3671, %v3673
        %v3675 = vrot.slane %v3661, %v3674
        %v3676 = vcombine.low %v3620, %v3636
        %v3677 = vcombine.high %v3620, %v3636
        %v3679 = vunpack.c.l.s4 1934713408
        %v3680 = vunpack.c.0.s8 %v3679
        %v3681 = vlaneseq
        %v3682 = vshrl.u32 %v3681, 7
        %v3683 = vsub.s32 %v3680, %v3682
        %v3684 = vrot.slane %v3676, %v3683
        %v3686 = vunpack.c.l.s4 1934713408
        %v3687 = vunpack.c.0.s8 %v3686
        %v3688 = vlaneseq
        %v3689 = vshrl.u32 %v3688, 7
        %v3690 = vsub.s32 %v3687, %v3689
        %v3691 = vrot.slane %v3677, %v3690
        %v3692 = vcombine.low %v3627, %v3643
        %v3693 = vcombine.high %v3627, %v3643
        %v3695 = vunpack.c.l.s4 1934713408
        %v3696 = vunpack.c.0.s8 %v3695
        %v3697 = vlaneseq
        %v3698 = vshrl.u32 %v3697, 7
        %v3699 = vsub.s32 %v3696, %v3698
        %v3700 = vrot.slane %v3692, %v3699
        %v3702 = vunpack.c.l.s4 1934713408
        %v3703 = vunpack.c.0.s8 %v3702
        %v3704 = vlaneseq
        %v3705 = vshrl.u32 %v3704, 7
        %v3706 = vsub.s32 %v3703, %v3705
        %v3707 = vrot.slane %v3693, %v3706
        %v3708 = vcombine.low %v3652, %v3668
        %v3709 = vcombine.high %v3652, %v3668
        %v3711 = vunpack.c.l.s4 1934713408
        %v3712 = vunpack.c.0.s8 %v3711
        %v3713 = vlaneseq
        %v3714 = vshrl.u32 %v3713, 7
        %v3715 = vsub.s32 %v3712, %v3714
        %v3716 = vrot.slane %v3708, %v3715
        %v3718 = vunpack.c.l.s4 1934713408
        %v3719 = vunpack.c.0.s8 %v3718
        %v3720 = vlaneseq
        %v3721 = vshrl.u32 %v3720, 7
        %v3722 = vsub.s32 %v3719, %v3721
        %v3723 = vrot.slane %v3709, %v3722
        %v3724 = vcombine.low %v3659, %v3675
        %v3725 = vcombine.high %v3659, %v3675
        %v3727 = vunpack.c.l.s4 1934713408
        %v3728 = vunpack.c.0.s8 %v3727
        %v3729 = vlaneseq
        %v3730 = vshrl.u32 %v3729, 7
        %v3731 = vsub.s32 %v3728, %v3730
        %v3732 = vrot.slane %v3724, %v3731
        %v3734 = vunpack.c.l.s4 1934713408
        %v3735 = vunpack.c.0.s8 %v3734
        %v3736 = vlaneseq
        %v3737 = vshrl.u32 %v3736, 7
        %v3738 = vsub.s32 %v3735, %v3737
        %v3739 = vrot.slane %v3725, %v3738
        %v3740 = vcombine.low %v3684, %v3716
        %v3741 = vcombine.high %v3684, %v3716
        %v3742 = vcombine.low %v3691, %v3723
        %v3743 = vcombine.high %v3691, %v3723
        %v3744 = vcombine.low %v3700, %v3732
        %v3745 = vcombine.high %v3700, %v3732
        %v3746 = vcombine.low %v3707, %v3739
        %v3747 = vcombine.high %v3707, %v3739
        %3749 = vrot.lane.b32.xlu0 %v3605, 16
        %v3750 = vpop.permute.xlu0 %3749
        %3753 = vrot.lane.b32.xlu0 %v3606, 32
        %v3754 = vpop.permute.xlu0 %3753
        %3757 = vrot.lane.b32.xlu0 %v3607, 48
        %v3758 = vpop.permute.xlu0 %3757
        %3761 = vrot.lane.b32.xlu0 %v3608, 64
        %v3762 = vpop.permute.xlu0 %3761
        %3765 = vrot.lane.b32.xlu0 %v3609, 80
        %v3766 = vpop.permute.xlu0 %3765
        %3769 = vrot.lane.b32.xlu0 %v3610, 96
        %v3770 = vpop.permute.xlu0 %3769
        %3773 = vrot.lane.b32.xlu0 %v3611, 112
        %v3774 = vpop.permute.xlu0 %3773
        %3777 = vrot.lane.b32.xlu0 %v3741, 16
        %v3778 = vpop.permute.xlu0 %3777
        %3781 = vrot.lane.b32.xlu0 %v3742, 32
        %v3782 = vpop.permute.xlu0 %3781
        %3785 = vrot.lane.b32.xlu0 %v3743, 48
        %v3786 = vpop.permute.xlu0 %3785
        %3789 = vrot.lane.b32.xlu0 %v3744, 64
        %v3790 = vpop.permute.xlu0 %3789
        %3793 = vrot.lane.b32.xlu0 %v3745, 80
        %v3794 = vpop.permute.xlu0 %3793
        %3797 = vrot.lane.b32.xlu0 %v3746, 96
        %v3798 = vpop.permute.xlu0 %3797
        %3801 = vrot.lane.b32.xlu0 %v3747, 112
        %v3802 = vpop.permute.xlu0 %3801
        %v3804 = vsel %vm529, %v3604, %v3750
        %v3805 = vsel %vm531, %v3804, %v3754
        %v3806 = vsel %vm533, %v3805, %v3758
        %v3807 = vsel %vm535, %v3806, %v3762
        %v3808 = vsel %vm537, %v3807, %v3766
        %v3809 = vsel %vm539, %v3808, %v3770
        %v3810 = vsel %vm541, %v3809, %v3774
        %v3811 = vsel %vm529, %v3740, %v3778
        %v3812 = vsel %vm531, %v3811, %v3782
        %v3813 = vsel %vm533, %v3812, %v3786
        %v3814 = vsel %vm535, %v3813, %v3790
        %v3815 = vsel %vm537, %v3814, %v3794
        %v3816 = vsel %vm539, %v3815, %v3798
        %v3817 = vsel %vm541, %v3816, %v3802
        %3818 = vst [vmem:[#allocation2 + $0x80] sm:$0xff] %v3810
        %3819 = vst [vmem:[#allocation2 + $0x88] sm:$0xff] %v3817
        %v3820 = vld [vmem:[%s181] sm:$0xf]
        %v3821 = vld [vmem:[#allocation2] sm:$0xff]
        %v3822 = vld [vmem:[#allocation2 + $0x8] sm:$0xff]
        %v3823 = vld [vmem:[#allocation2 + $0x10] sm:$0xff]
        %v3824 = vld [vmem:[#allocation2 + $0x18] sm:$0xff]
        %v3825 = vld [vmem:[#allocation2 + $0x20] sm:$0xff]
        %v3826 = vld [vmem:[#allocation2 + $0x28] sm:$0xff]
        %v3827 = vld [vmem:[#allocation2 + $0x30] sm:$0xff]
        %v3828 = vld [vmem:[#allocation2 + $0x38] sm:$0xff]
        %v3829 = vld [vmem:[#allocation2 + $0x40] sm:$0xff]
        %v3830 = vld [vmem:[#allocation2 + $0x48] sm:$0xff]
        %v3831 = vld [vmem:[#allocation2 + $0x50] sm:$0xff]
        %v3832 = vld [vmem:[#allocation2 + $0x58] sm:$0xff]
        %v3833 = vld [vmem:[#allocation2 + $0x60] sm:$0xff]
        %v3834 = vld [vmem:[#allocation2 + $0x68] sm:$0xff]
        %v3835 = vld [vmem:[#allocation2 + $0x70] sm:$0xff]
        %v3836 = vld [vmem:[#allocation2 + $0x78] sm:$0xff]
        %v3837 = vld [vmem:[#allocation2 + $0x80] sm:$0xff]
        %v3838 = vld [vmem:[#allocation2 + $0x88] sm:$0xff]
        %vm3839 = vcmask 588800
        %v3841 = vsel %vm3839, %v3820, 0
        %3843 = vmatprep.subr.mxu0 %v3822
        %3844 = vmatpush1.msra.mxu0 %v3821
        %3845 = vmatprep.subr.mxu0 %v3824
        %3846 = vmatpush1.msra.mxu0 %v3823
        %3847 = vmatprep.subr.mxu0 %v3826
        %3848 = vmatpush1.msra.mxu0 %v3825
        %3849 = vmatprep.subr.mxu0 %v3828
        %3850 = vmatpush1.msra.mxu0 %v3827
        %3851 = vmatprep.subr.mxu0 %v3830
        %3852 = vmatpush1.msra.mxu0 %v3829
        %3853 = vmatprep.subr.mxu0 %v3832
        %3854 = vmatpush1.msra.mxu0 %v3831
        %3855 = vmatprep.subr.mxu0 %v3834
        %3856 = vmatpush1.msra.mxu0 %v3833
        %3857 = vmatprep.subr.mxu0 %v3836
        %3858 = vmatpush1.msra.mxu0 %v3835
        %3859 = vmatprep.subr.mxu0 %v3838
        %3860 = vmatpush1.msra.mxu0 %v3837
        %3861 = vmatprep.subr.mxu0 0.0
        %3862 = vmatpush1.msra.mxu0 0.0
        %3863 = vmatprep.subr.mxu0 0.0
        %3864 = vmatpush1.msra.mxu0 0.0
        %3865 = vmatprep.subr.mxu0 0.0
        %3866 = vmatpush1.msra.mxu0 0.0
        %3867 = vmatprep.subr.mxu0 0.0
        %3868 = vmatpush1.msra.mxu0 0.0
        %3869 = vmatprep.subr.mxu0 0.0
        %3870 = vmatpush1.msra.mxu0 0.0
        %3871 = vmatprep.subr.mxu0 0.0
        %3872 = vmatpush1.msra.mxu0 0.0
        %3873 = vmatprep.subr.mxu0 0.0
        %3874 = vmatpush1.msra.mxu0 0.0
        %3875 = vmatprep.subr.mxu0 0.0
        %3876 = vmatpush1.msra.mxu0 0.0
        %3877 = vmatprep.subr.mxu0 0.0
        %3878 = vmatpush1.msra.mxu0 0.0
        %3879 = vmatprep.subr.mxu0 0.0
        %3880 = vmatpush1.msra.mxu0 0.0
        %3881 = vmatprep.subr.mxu0 0.0
        %3882 = vmatpush1.msra.mxu0 0.0
        %3883 = vmatprep.subr.mxu0 0.0
        %3884 = vmatpush1.msra.mxu0 0.0
        %3885 = vmatprep.subr.mxu0 0.0
        %3886 = vmatpush1.msra.mxu0 0.0
        %3887 = vmatprep.subr.mxu0 0.0
        %3888 = vmatpush1.msra.mxu0 0.0
        %3889 = vmatprep.subr.mxu0 0.0
        %3890 = vmatpush1.msra.mxu0 0.0
        %3891 = vmatprep.subr.mxu0 0.0
        %3892 = vmatpush1.msra.mxu0 0.0
        %3893 = vmatprep.subr.mxu0 0.0
        %3894 = vmatpush1.msra.mxu0 0.0
        %3895 = vmatprep.subr.mxu0 0.0
        %3896 = vmatpush1.msra.mxu0 0.0
        %3897 = vmatprep.subr.mxu0 0.0
        %3898 = vmatpush1.msra.mxu0 0.0
        %3899 = vmatprep.subr.mxu0 0.0
        %3900 = vmatpush1.msra.mxu0 0.0
        %3901 = vmatprep.subr.mxu0 0.0
        %3902 = vmatpush1.msra.mxu0 0.0
        %3903 = vmatprep.subr.mxu0 0.0
        %3904 = vmatpush1.msra.mxu0 0.0
        %3905 = vmatprep.subr.mxu0 0.0
        %3906 = vmatpush1.msra.mxu0 0.0
        %3907 = vmatprep.mubr.f32.mxu0 0.0
        %3908 = vmatmul.mubr.f32.gmra.mrb[0].mxu0 %v3841
        %v3909 = vpop.f32.mrb[0].mxu0
        %v3910 = vadd.f32 0.0, %v3909
        %v3911 = vpop.f32.mrb[0].mxu0
        %v3912 = vadd.f32 0.0, %v3911
        %3913 = vdwg.mxu0
        %v3916 = vcombine.low %v3910, %v3912
        %3918 = vst [vmem:[%s172] sm:$0xff] %v3916
        %s3919 = sand.u32 %s99, 1
        %s3920 = scalar_lea.sflag [#allocation4], %s3919
        %s3921 = sand.u32 %s99, 1
        %s3922 = smul.addr %s3921, 8
        %s3923 = scalar_lea.vmem [#allocation3], %s3922
        // Predicated region
        $region29: #{tpu_custom_call.1} parent=27 // pred_check
          %p3924 = pneg %p109
        $region30: #{tpu_custom_call.1} parent=27 // pred_check_branch
          %3926 = sbr.rel (%p3924) target = $region32
        $region31: #{tpu_custom_call.1} parent=27 // pred_region
          %s3927 = smul.u32 2, %s23
          %s3929 = ssub.s32 128, 128
          %3930 = vsyncadd %s3920, %s3929
          %s3931 = smul.addr %s22, 2
          %s3932 = sadd.s32 %s3927, %s3931
          %s3933 = smul.addr %s21, 2
          %s3934 = sadd.s32 %s3932, %s3933
          %s3935 = smul.addr %s3934, 64
          %s3936 = scalar_lea.hbm %s2, %s3935
          %s3938 = sshll.u32 %s3923, 4
          %s3939 = int_to_ptr.vmem [resolvable:$true] %s3938
          %3941 = dma.vmem_to_hbm [thread:$0]  %s3939, 128, %s3936, %s3920
        $region32: #{tpu_custom_call.1} parent=27 // pred_fallthru
          _
      $region28: #{tpu_custom_call.1} parent=5 // pred_fallthru
        _
      %p3942 = scmp.le.s32.totalorder 2, %s11
      // Predicated region
      $region33: #{tpu_custom_call.1} parent=5 // pred_check
        %p3943 = pneg %p3942
      $region34: #{tpu_custom_call.1} parent=5 // pred_check_branch
        %3945 = sbr.rel (%p3943) target = $region36
      $region35: #{tpu_custom_call.1} parent=5 // pred_region
        %s3946 = ssub.s32 %s11, 2
        // Predicated region
        $region37: #{tpu_custom_call.1} parent=35 // pred_check
          %p3947 = pneg %p115
        $region38: #{tpu_custom_call.1} parent=35 // pred_check_branch
          %3949 = sbr.rel (%p3947) target = $region40
        $region39: #{tpu_custom_call.1} parent=35 // pred_region
          %s3950 = sand.u32 %s100, 1
          %s3951 = scalar_lea.sflag [#allocation4], %s3950
          %s3952 = sand.u32 %s100, 1
          %s3953 = smul.addr %s3952, 8
          %s3954 = scalar_lea.vmem [#allocation3], %s3953
          %3955 = dma.done %s3951, 128
        $region40: #{tpu_custom_call.1} parent=35 // pred_fallthru
          _
      $region36: #{tpu_custom_call.1} parent=5 // pred_fallthru
        _
    $region6: #{tpu_custom_call.1} parent=1 // loop_footer
      %s15 = sadd.s32 1, %s11
    $region7: #{tpu_custom_call.1} parent=1 // loop_footer_branch
      %10 = sbr.rel target = $region3
    $region8: #{tpu_custom_call.1} parent=1 // loop_exit
      _
    %3956 = vsyncpa [#allocation4], 1
    %s3957 = scalar_lea.sflag [#allocation4], 1
    %3958 = vsyncpa %s3957, 1

</llo_original>
